<compile_context>
chip_gen: v7x
topology: tpu7x:2x2x1
jax: 0.10.0
libtpu: 0.0.40
codegen_flags: <defaults>
</compile_context>

<pallas_src>
import functools

import jax
import jax.numpy as jnp
from jax.experimental import pallas as pl
from jax.experimental.pallas import tpu as pltpu

NEG_SLOPE = 0.01  # nn.LeakyReLU default negative_slope


def _round_up(x, m):
    return (x + m - 1) // m * m


def _stem_kernel(x_ref, w_ref, b_ref, o_ref, patch_ref, *,
                 cin, kh, kw, wp, l_out):
    # x_ref:     (Cin, L_in)     f32  one reflection-padded image, flattened
    #                                 row-major over the common (Hp, Wp) grid
    #                                 and lane-padded so every slice below is
    #                                 in-bounds.
    # w_ref:     (2*Cout, Kp)    bf16 stacked LR/HR weights, K order (i, j, c).
    # b_ref:     (2*Cout, 1)     f32  stacked biases.
    # o_ref:     (2*Cout, L_out)      conv + bias + LeakyReLU on the padded
    #                                 grid (valid window sliced by wrapper).
    # patch_ref: (Kp, L_out)     bf16 VMEM scratch: in-kernel im2col tile.
    #
    # Stride-1 conv: output flat position p = oh*Wp + ow reads tap (i, j) at
    # input flat position p + i*Wp + j, i.e. a static lane shift per tap.
    patch_ref[...] = jnp.zeros_like(patch_ref)          # zero K-pad rows too
    for t in range(kh * kw):
        i, j = divmod(t, kw)
        shift = i * wp + j
        for c in range(cin):
            row = x_ref[pl.ds(c, 1), pl.ds(shift, l_out)]        # (1, L_out)
            patch_ref[pl.ds(t * cin + c, 1), :] = row.astype(patch_ref.dtype)
    acc = jnp.dot(w_ref[...], patch_ref[...],
                  preferred_element_type=jnp.float32)            # (2*Cout, L_out)
    acc = acc + b_ref[...]
    acc = jnp.maximum(acc, NEG_SLOPE * acc)                      # LeakyReLU
    o_ref[...] = acc.astype(o_ref.dtype)


def encoder_stem_pair(x_lr, x_hr, w_lr, b_lr, w_hr, b_hr, *, stride, padding):
    """First LeakyReLUConv2d of encoder_LR and encoder_HR, fused in one call.

    Per branch: ReflectionPad2d(padding) -> Conv2d(stride=1, bias=True) ->
    LeakyReLU(0.01).  (The module's `if 'norm' == 'Instance'` branch is always
    False, so no InstanceNorm.)  Returns (out_LR, out_HR) in NCHW, input dtype.
    """
    assert stride == 1, "fused stem kernel implements the stride-1 stem only"
    n, cin = x_lr.shape[0], x_lr.shape[1]
    assert x_hr.shape[0] == n and x_hr.shape[1] == cin
    c_out, _, kh, kw = w_lr.shape
    assert w_hr.shape == w_lr.shape

    def pad_reflect(x):
        if padding > 0:
            return jnp.pad(x, ((0, 0), (0, 0), (padding, padding),
                               (padding, padding)), mode="reflect")
        return x

    xp_lr = pad_reflect(x_lr)                      # (N, Cin, Hp_lr, Wp_lr)
    xp_hr = pad_reflect(x_hr)                      # (N, Cin, Hp_hr, Wp_hr)

    hp = max(xp_lr.shape[2], xp_hr.shape[2])       # common padded grid
    wp = max(xp_lr.shape[3], xp_hr.shape[3])
    oh_lr, ow_lr = xp_lr.shape[2] - kh + 1, xp_lr.shape[3] - kw + 1
    oh_hr, ow_hr = xp_hr.shape[2] - kh + 1, xp_hr.shape[3] - kw + 1

    def to_common(xp):                             # zero-extend to (Hp, Wp)
        return jnp.pad(xp, ((0, 0), (0, 0), (0, hp - xp.shape[2]),
                            (0, wp - xp.shape[3])))

    # Both branches' images along the grid axis; per-image padded plane on the
    # lane axis.  (Raw-size data only -- no im2col blow-up in HBM.)
    x_all = jnp.concatenate([to_common(xp_lr), to_common(xp_hr)], axis=0)
    x_all = x_all.reshape(2 * n, cin, hp * wp)

    l_out = _round_up(hp * wp, 128)                # lane-dense output width
    max_shift = (kh - 1) * wp + (kw - 1)
    l_in = _round_up(l_out + max_shift, 128)       # every kernel slice in-bounds
    x_all = jnp.pad(x_all, ((0, 0), (0, 0), (0, l_in - hp * wp)))

    k = cin * kh * kw
    k_pad = _round_up(k, 16)                       # bf16 sublane multiple only

    def flat_w(w):   # (Cout, Cin, KH, KW) -> (Cout, KH*KW*Cin), tap-major
        return jnp.transpose(w, (0, 2, 3, 1)).reshape(c_out, k)

    w_all = jnp.concatenate([flat_w(w_lr), flat_w(w_hr)], axis=0)
    w_all = jnp.pad(w_all, ((0, 0), (0, k_pad - k))).astype(jnp.bfloat16)
    b_all = jnp.concatenate([b_lr, b_hr]).reshape(2 * c_out, 1)
    b_all = b_all.astype(jnp.float32)
    cout2 = 2 * c_out

    kernel = functools.partial(_stem_kernel, cin=cin, kh=kh, kw=kw, wp=wp,
                               l_out=l_out)
    out_all = pl.pallas_call(
        kernel,
        out_shape=jax.ShapeDtypeStruct((2 * n, cout2, l_out), x_lr.dtype),
        grid=(2 * n,),
        in_specs=[
            pl.BlockSpec((None, cin, l_in), lambda g: (g, 0, 0)),   # one image
            pl.BlockSpec((cout2, k_pad), lambda g: (0, 0)),         # resident
            pl.BlockSpec((cout2, 1), lambda g: (0, 0)),             # resident
        ],
        out_specs=pl.BlockSpec((None, cout2, l_out), lambda g: (g, 0, 0)),
        scratch_shapes=[pltpu.VMEM((k_pad, l_out), jnp.bfloat16)],
        compiler_params=pltpu.CompilerParams(
            dimension_semantics=("parallel",),
            vmem_limit_bytes=32 * 1024 * 1024),
    )(x_all, w_all, b_all)

    # Per-branch extraction: its Cout rows and its (OH, OW) valid window of
    # the common (Hp, Wp) grid laid out along the lane axis.
    grid_out = out_all[:, :, :hp * wp].reshape(2 * n, cout2, hp, wp)
    out_lr = grid_out[:n, :c_out, :oh_lr, :ow_lr]
    out_hr = grid_out[n:, c_out:, :oh_hr, :ow_hr]
    return out_lr, out_hr


def _reference(x, w, b, *, stride, padding):
    # Matches the kernel numerics: inputs rounded to bf16, f32 accumulation.
    xp = jnp.pad(x, ((0, 0), (0, 0), (padding, padding), (padding, padding)),
                 mode="reflect") if padding > 0 else x
    xp = xp.astype(jnp.bfloat16).astype(jnp.float32)
    wf = w.astype(jnp.bfloat16).astype(jnp.float32)
    y = jax.lax.conv_general_dilated(
        xp, wf, window_strides=(stride, stride), padding="VALID",
        dimension_numbers=("NCHW", "OIHW", "NCHW"),
        precision=jax.lax.Precision.HIGHEST)
    y = y + b.reshape(1, -1, 1, 1).astype(jnp.float32)
    return jnp.maximum(y, NEG_SLOPE * y)


if __name__ == "__main__":
    # First layer of Encoder_content_reduceplus's encoder_LR / encoder_HR:
    # LeakyReLUConv2d(n_channels, n_features, kernel_size=7, stride=1,
    # padding=3).  Small shapes: n_channels=1 (module default), n_features=8
    # (scaled-down 64), batch=2, spatial 16x16 (LR) and 16x12 (HR).
    N, C_IN, C_OUT = 2, 1, 8
    KH = KW = 7
    STRIDE, PAD = 1, 3

    key = jax.random.PRNGKey(0)
    k_lr, k_hr, kw_lr, kw_hr, kb_lr, kb_hr = jax.random.split(key, 6)

    x_lr = jax.random.normal(k_lr, (N, C_IN, 16, 16), dtype=jnp.float32)
    x_hr = jax.random.normal(k_hr, (N, C_IN, 16, 12), dtype=jnp.float32)

    # gaussian_weights_init: conv weight ~ N(0, 0.02); bias keeps the PyTorch
    # default U(-1/sqrt(fan_in), 1/sqrt(fan_in)).
    fan_in = C_IN * KH * KW
    bound = 1.0 / (fan_in ** 0.5)
    w_lr = 0.02 * jax.random.normal(kw_lr, (C_OUT, C_IN, KH, KW), jnp.float32)
    w_hr = 0.02 * jax.random.normal(kw_hr, (C_OUT, C_IN, KH, KW), jnp.float32)
    b_lr = jax.random.uniform(kb_lr, (C_OUT,), minval=-bound, maxval=bound,
                              dtype=jnp.float32)
    b_hr = jax.random.uniform(kb_hr, (C_OUT,), minval=-bound, maxval=bound,
                              dtype=jnp.float32)

    out_lr, out_hr = encoder_stem_pair(x_lr, x_hr, w_lr, b_lr, w_hr, b_hr,
                                       stride=STRIDE, padding=PAD)
    out_lr, out_hr = jax.block_until_ready((out_lr, out_hr))

    ref_lr = _reference(x_lr, w_lr, b_lr, stride=STRIDE, padding=PAD)
    ref_hr = _reference(x_hr, w_hr, b_hr, stride=STRIDE, padding=PAD)

    assert out_lr.shape == ref_lr.shape == (N, C_OUT, 16, 16)
    assert out_hr.shape == ref_hr.shape == (N, C_OUT, 16, 12)
    assert jnp.allclose(out_lr, ref_lr, atol=1e-4, rtol=1e-4)
    assert jnp.allclose(out_hr, ref_hr, atol=1e-4, rtol=1e-4)

    print("KERNEL_OK")
</pallas_src>

<mosaic_0001>
module attributes {stable_mosaic.version = 11 : i64} {
  func.func @_stem_kernel(%arg0: i32, %arg1: memref<1x1x768xf32, #tpu.memory_space<vmem>>, %arg2: memref<16x64xbf16, #tpu.memory_space<vmem>>, %arg3: memref<16x1xf32, #tpu.memory_space<vmem>>, %arg4: memref<1x16x512xf32, #tpu.memory_space<vmem>>, %arg5: memref<64x512xbf16, #tpu.memory_space<vmem>>) attributes {dimension_semantics = [#tpu.dimension_semantics<parallel>], iteration_bounds = array<i64: 4>, scalar_prefetch = 0 : i64, scratch_operands = 1 : i64, tpu.core_type = #tpu.core_type<tc>, window_params = [{transform_indices = @transform_0, window_bounds = array<i64: 1, 1, 768>}, {pipeline_mode = #tpu.pipeline_mode<synchronous>, transform_indices = @transform_1, window_bounds = array<i64: 16, 64>}, {pipeline_mode = #tpu.pipeline_mode<synchronous>, transform_indices = @transform_2, window_bounds = array<i64: 16, 1>}, {transform_indices = @transform_3, window_bounds = array<i64: 1, 16, 512>}]} {
    %cst = arith.constant 0.000000e+00 : bf16
    %0 = vector.broadcast %cst : bf16 to vector<64x512xbf16>
    %c0 = arith.constant 0 : index
    %c0_0 = arith.constant 0 : index
    %1 = vector.load %arg5[%c0, %c0_0] : memref<64x512xbf16, #tpu.memory_space<vmem>>, vector<64x512xbf16>
    tpu.vector_store %arg5[%c0, %c0_0], %0 {strides = array<i32>} : memref<64x512xbf16, #tpu.memory_space<vmem>>, vector<64x512xbf16>,
    %c0_1 = arith.constant 0 : index
    %c0_2 = arith.constant 0 : index
    %c0_3 = arith.constant 0 : index
    %2 = vector.load %arg1[%c0_1, %c0_2, %c0_3] : memref<1x1x768xf32, #tpu.memory_space<vmem>>, vector<1x1x512xf32>
    %3 = vector.shape_cast %2 : vector<1x1x512xf32> to vector<1x512xf32>
    %4 = arith.truncf %3 : vector<1x512xf32> to vector<1x512xbf16>
    %c0_4 = arith.constant 0 : index
    %c0_5 = arith.constant 0 : index
    %5 = vector.load %arg5[%c0_4, %c0_5] : memref<64x512xbf16, #tpu.memory_space<vmem>>, vector<1x512xbf16>
    tpu.vector_store %arg5[%c0_4, %c0_5], %4 {strides = array<i32>} : memref<64x512xbf16, #tpu.memory_space<vmem>>, vector<1x512xbf16>,
    %c0_6 = arith.constant 0 : index
    %c0_7 = arith.constant 0 : index
    %c1 = arith.constant 1 : index
    %6 = vector.load %arg1[%c0_6, %c0_7, %c1] : memref<1x1x768xf32, #tpu.memory_space<vmem>>, vector<1x1x512xf32>
    %7 = vector.shape_cast %6 : vector<1x1x512xf32> to vector<1x512xf32>
    %8 = arith.truncf %7 : vector<1x512xf32> to vector<1x512xbf16>
    %c1_8 = arith.constant 1 : index
    %c0_9 = arith.constant 0 : index
    %9 = vector.load %arg5[%c1_8, %c0_9] : memref<64x512xbf16, #tpu.memory_space<vmem>>, vector<1x512xbf16>
    tpu.vector_store %arg5[%c1_8, %c0_9], %8 {strides = array<i32>} : memref<64x512xbf16, #tpu.memory_space<vmem>>, vector<1x512xbf16>,
    %c0_10 = arith.constant 0 : index
    %c0_11 = arith.constant 0 : index
    %c2 = arith.constant 2 : index
    %10 = vector.load %arg1[%c0_10, %c0_11, %c2] : memref<1x1x768xf32, #tpu.memory_space<vmem>>, vector<1x1x512xf32>
    %11 = vector.shape_cast %10 : vector<1x1x512xf32> to vector<1x512xf32>
    %12 = arith.truncf %11 : vector<1x512xf32> to vector<1x512xbf16>
    %c2_12 = arith.constant 2 : index
    %c0_13 = arith.constant 0 : index
    %13 = vector.load %arg5[%c2_12, %c0_13] : memref<64x512xbf16, #tpu.memory_space<vmem>>, vector<1x512xbf16>
    tpu.vector_store %arg5[%c2_12, %c0_13], %12 {strides = array<i32>} : memref<64x512xbf16, #tpu.memory_space<vmem>>, vector<1x512xbf16>,
    %c0_14 = arith.constant 0 : index
    %c0_15 = arith.constant 0 : index
    %c3 = arith.constant 3 : index
    %14 = vector.load %arg1[%c0_14, %c0_15, %c3] : memref<1x1x768xf32, #tpu.memory_space<vmem>>, vector<1x1x512xf32>
    %15 = vector.shape_cast %14 : vector<1x1x512xf32> to vector<1x512xf32>
    %16 = arith.truncf %15 : vector<1x512xf32> to vector<1x512xbf16>
    %c3_16 = arith.constant 3 : index
    %c0_17 = arith.constant 0 : index
    %17 = vector.load %arg5[%c3_16, %c0_17] : memref<64x512xbf16, #tpu.memory_space<vmem>>, vector<1x512xbf16>
    tpu.vector_store %arg5[%c3_16, %c0_17], %16 {strides = array<i32>} : memref<64x512xbf16, #tpu.memory_space<vmem>>, vector<1x512xbf16>,
    %c0_18 = arith.constant 0 : index
    %c0_19 = arith.constant 0 : index
    %c4 = arith.constant 4 : index
    %18 = vector.load %arg1[%c0_18, %c0_19, %c4] : memref<1x1x768xf32, #tpu.memory_space<vmem>>, vector<1x1x512xf32>
    %19 = vector.shape_cast %18 : vector<1x1x512xf32> to vector<1x512xf32>
    %20 = arith.truncf %19 : vector<1x512xf32> to vector<1x512xbf16>
    %c4_20 = arith.constant 4 : index
    %c0_21 = arith.constant 0 : index
    %21 = vector.load %arg5[%c4_20, %c0_21] : memref<64x512xbf16, #tpu.memory_space<vmem>>, vector<1x512xbf16>
    tpu.vector_store %arg5[%c4_20, %c0_21], %20 {strides = array<i32>} : memref<64x512xbf16, #tpu.memory_space<vmem>>, vector<1x512xbf16>,
    %c0_22 = arith.constant 0 : index
    %c0_23 = arith.constant 0 : index
    %c5 = arith.constant 5 : index
    %22 = vector.load %arg1[%c0_22, %c0_23, %c5] : memref<1x1x768xf32, #tpu.memory_space<vmem>>, vector<1x1x512xf32>
    %23 = vector.shape_cast %22 : vector<1x1x512xf32> to vector<1x512xf32>
    %24 = arith.truncf %23 : vector<1x512xf32> to vector<1x512xbf16>
    %c5_24 = arith.constant 5 : index
    %c0_25 = arith.constant 0 : index
    %25 = vector.load %arg5[%c5_24, %c0_25] : memref<64x512xbf16, #tpu.memory_space<vmem>>, vector<1x512xbf16>
    tpu.vector_store %arg5[%c5_24, %c0_25], %24 {strides = array<i32>} : memref<64x512xbf16, #tpu.memory_space<vmem>>, vector<1x512xbf16>,
    %c0_26 = arith.constant 0 : index
    %c0_27 = arith.constant 0 : index
    %c6 = arith.constant 6 : index
    %26 = vector.load %arg1[%c0_26, %c0_27, %c6] : memref<1x1x768xf32, #tpu.memory_space<vmem>>, vector<1x1x512xf32>
    %27 = vector.shape_cast %26 : vector<1x1x512xf32> to vector<1x512xf32>
    %28 = arith.truncf %27 : vector<1x512xf32> to vector<1x512xbf16>
    %c6_28 = arith.constant 6 : index
    %c0_29 = arith.constant 0 : index
    %29 = vector.load %arg5[%c6_28, %c0_29] : memref<64x512xbf16, #tpu.memory_space<vmem>>, vector<1x512xbf16>
    tpu.vector_store %arg5[%c6_28, %c0_29], %28 {strides = array<i32>} : memref<64x512xbf16, #tpu.memory_space<vmem>>, vector<1x512xbf16>,
    %c0_30 = arith.constant 0 : index
    %c0_31 = arith.constant 0 : index
    %c22 = arith.constant 22 : index
    %30 = vector.load %arg1[%c0_30, %c0_31, %c22] : memref<1x1x768xf32, #tpu.memory_space<vmem>>, vector<1x1x512xf32>
    %31 = vector.shape_cast %30 : vector<1x1x512xf32> to vector<1x512xf32>
    %32 = arith.truncf %31 : vector<1x512xf32> to vector<1x512xbf16>
    %c7 = arith.constant 7 : index
    %c0_32 = arith.constant 0 : index
    %33 = vector.load %arg5[%c7, %c0_32] : memref<64x512xbf16, #tpu.memory_space<vmem>>, vector<1x512xbf16>
    tpu.vector_store %arg5[%c7, %c0_32], %32 {strides = array<i32>} : memref<64x512xbf16, #tpu.memory_space<vmem>>, vector<1x512xbf16>,
    %c0_33 = arith.constant 0 : index
    %c0_34 = arith.constant 0 : index
    %c23 = arith.constant 23 : index
    %34 = vector.load %arg1[%c0_33, %c0_34, %c23] : memref<1x1x768xf32, #tpu.memory_space<vmem>>, vector<1x1x512xf32>
    %35 = vector.shape_cast %34 : vector<1x1x512xf32> to vector<1x512xf32>
    %36 = arith.truncf %35 : vector<1x512xf32> to vector<1x512xbf16>
    %c8 = arith.constant 8 : index
    %c0_35 = arith.constant 0 : index
    %37 = vector.load %arg5[%c8, %c0_35] : memref<64x512xbf16, #tpu.memory_space<vmem>>, vector<1x512xbf16>
    tpu.vector_store %arg5[%c8, %c0_35], %36 {strides = array<i32>} : memref<64x512xbf16, #tpu.memory_space<vmem>>, vector<1x512xbf16>,
    %c0_36 = arith.constant 0 : index
    %c0_37 = arith.constant 0 : index
    %c24 = arith.constant 24 : index
    %38 = vector.load %arg1[%c0_36, %c0_37, %c24] : memref<1x1x768xf32, #tpu.memory_space<vmem>>, vector<1x1x512xf32>
    %39 = vector.shape_cast %38 : vector<1x1x512xf32> to vector<1x512xf32>
    %40 = arith.truncf %39 : vector<1x512xf32> to vector<1x512xbf16>
    %c9 = arith.constant 9 : index
    %c0_38 = arith.constant 0 : index
    %41 = vector.load %arg5[%c9, %c0_38] : memref<64x512xbf16, #tpu.memory_space<vmem>>, vector<1x512xbf16>
    tpu.vector_store %arg5[%c9, %c0_38], %40 {strides = array<i32>} : memref<64x512xbf16, #tpu.memory_space<vmem>>, vector<1x512xbf16>,
    %c0_39 = arith.constant 0 : index
    %c0_40 = arith.constant 0 : index
    %c25 = arith.constant 25 : index
    %42 = vector.load %arg1[%c0_39, %c0_40, %c25] : memref<1x1x768xf32, #tpu.memory_space<vmem>>, vector<1x1x512xf32>
    %43 = vector.shape_cast %42 : vector<1x1x512xf32> to vector<1x512xf32>
    %44 = arith.truncf %43 : vector<1x512xf32> to vector<1x512xbf16>
    %c10 = arith.constant 10 : index
    %c0_41 = arith.constant 0 : index
    %45 = vector.load %arg5[%c10, %c0_41] : memref<64x512xbf16, #tpu.memory_space<vmem>>, vector<1x512xbf16>
    tpu.vector_store %arg5[%c10, %c0_41], %44 {strides = array<i32>} : memref<64x512xbf16, #tpu.memory_space<vmem>>, vector<1x512xbf16>,
    %c0_42 = arith.constant 0 : index
    %c0_43 = arith.constant 0 : index
    %c26 = arith.constant 26 : index
    %46 = vector.load %arg1[%c0_42, %c0_43, %c26] : memref<1x1x768xf32, #tpu.memory_space<vmem>>, vector<1x1x512xf32>
    %47 = vector.shape_cast %46 : vector<1x1x512xf32> to vector<1x512xf32>
    %48 = arith.truncf %47 : vector<1x512xf32> to vector<1x512xbf16>
    %c11 = arith.constant 11 : index
    %c0_44 = arith.constant 0 : index
    %49 = vector.load %arg5[%c11, %c0_44] : memref<64x512xbf16, #tpu.memory_space<vmem>>, vector<1x512xbf16>
    tpu.vector_store %arg5[%c11, %c0_44], %48 {strides = array<i32>} : memref<64x512xbf16, #tpu.memory_space<vmem>>, vector<1x512xbf16>,
    %c0_45 = arith.constant 0 : index
    %c0_46 = arith.constant 0 : index
    %c27 = arith.constant 27 : index
    %50 = vector.load %arg1[%c0_45, %c0_46, %c27] : memref<1x1x768xf32, #tpu.memory_space<vmem>>, vector<1x1x512xf32>
    %51 = vector.shape_cast %50 : vector<1x1x512xf32> to vector<1x512xf32>
    %52 = arith.truncf %51 : vector<1x512xf32> to vector<1x512xbf16>
    %c12 = arith.constant 12 : index
    %c0_47 = arith.constant 0 : index
    %53 = vector.load %arg5[%c12, %c0_47] : memref<64x512xbf16, #tpu.memory_space<vmem>>, vector<1x512xbf16>
    tpu.vector_store %arg5[%c12, %c0_47], %52 {strides = array<i32>} : memref<64x512xbf16, #tpu.memory_space<vmem>>, vector<1x512xbf16>,
    %c0_48 = arith.constant 0 : index
    %c0_49 = arith.constant 0 : index
    %c28 = arith.constant 28 : index
    %54 = vector.load %arg1[%c0_48, %c0_49, %c28] : memref<1x1x768xf32, #tpu.memory_space<vmem>>, vector<1x1x512xf32>
    %55 = vector.shape_cast %54 : vector<1x1x512xf32> to vector<1x512xf32>
    %56 = arith.truncf %55 : vector<1x512xf32> to vector<1x512xbf16>
    %c13 = arith.constant 13 : index
    %c0_50 = arith.constant 0 : index
    %57 = vector.load %arg5[%c13, %c0_50] : memref<64x512xbf16, #tpu.memory_space<vmem>>, vector<1x512xbf16>
    tpu.vector_store %arg5[%c13, %c0_50], %56 {strides = array<i32>} : memref<64x512xbf16, #tpu.memory_space<vmem>>, vector<1x512xbf16>,
    %c0_51 = arith.constant 0 : index
    %c0_52 = arith.constant 0 : index
    %c44 = arith.constant 44 : index
    %58 = vector.load %arg1[%c0_51, %c0_52, %c44] : memref<1x1x768xf32, #tpu.memory_space<vmem>>, vector<1x1x512xf32>
    %59 = vector.shape_cast %58 : vector<1x1x512xf32> to vector<1x512xf32>
    %60 = arith.truncf %59 : vector<1x512xf32> to vector<1x512xbf16>
    %c14 = arith.constant 14 : index
    %c0_53 = arith.constant 0 : index
    %61 = vector.load %arg5[%c14, %c0_53] : memref<64x512xbf16, #tpu.memory_space<vmem>>, vector<1x512xbf16>
    tpu.vector_store %arg5[%c14, %c0_53], %60 {strides = array<i32>} : memref<64x512xbf16, #tpu.memory_space<vmem>>, vector<1x512xbf16>,
    %c0_54 = arith.constant 0 : index
    %c0_55 = arith.constant 0 : index
    %c45 = arith.constant 45 : index
    %62 = vector.load %arg1[%c0_54, %c0_55, %c45] : memref<1x1x768xf32, #tpu.memory_space<vmem>>, vector<1x1x512xf32>
    %63 = vector.shape_cast %62 : vector<1x1x512xf32> to vector<1x512xf32>
    %64 = arith.truncf %63 : vector<1x512xf32> to vector<1x512xbf16>
    %c15 = arith.constant 15 : index
    %c0_56 = arith.constant 0 : index
    %65 = vector.load %arg5[%c15, %c0_56] : memref<64x512xbf16, #tpu.memory_space<vmem>>, vector<1x512xbf16>
    tpu.vector_store %arg5[%c15, %c0_56], %64 {strides = array<i32>} : memref<64x512xbf16, #tpu.memory_space<vmem>>, vector<1x512xbf16>,
    %c0_57 = arith.constant 0 : index
    %c0_58 = arith.constant 0 : index
    %c46 = arith.constant 46 : index
    %66 = vector.load %arg1[%c0_57, %c0_58, %c46] : memref<1x1x768xf32, #tpu.memory_space<vmem>>, vector<1x1x512xf32>
    %67 = vector.shape_cast %66 : vector<1x1x512xf32> to vector<1x512xf32>
    %68 = arith.truncf %67 : vector<1x512xf32> to vector<1x512xbf16>
    %c16 = arith.constant 16 : index
    %c0_59 = arith.constant 0 : index
    %69 = vector.load %arg5[%c16, %c0_59] : memref<64x512xbf16, #tpu.memory_space<vmem>>, vector<1x512xbf16>
    tpu.vector_store %arg5[%c16, %c0_59], %68 {strides = array<i32>} : memref<64x512xbf16, #tpu.memory_space<vmem>>, vector<1x512xbf16>,
    %c0_60 = arith.constant 0 : index
    %c0_61 = arith.constant 0 : index
    %c47 = arith.constant 47 : index
    %70 = vector.load %arg1[%c0_60, %c0_61, %c47] : memref<1x1x768xf32, #tpu.memory_space<vmem>>, vector<1x1x512xf32>
    %71 = vector.shape_cast %70 : vector<1x1x512xf32> to vector<1x512xf32>
    %72 = arith.truncf %71 : vector<1x512xf32> to vector<1x512xbf16>
    %c17 = arith.constant 17 : index
    %c0_62 = arith.constant 0 : index
    %73 = vector.load %arg5[%c17, %c0_62] : memref<64x512xbf16, #tpu.memory_space<vmem>>, vector<1x512xbf16>
    tpu.vector_store %arg5[%c17, %c0_62], %72 {strides = array<i32>} : memref<64x512xbf16, #tpu.memory_space<vmem>>, vector<1x512xbf16>,
    %c0_63 = arith.constant 0 : index
    %c0_64 = arith.constant 0 : index
    %c48 = arith.constant 48 : index
    %74 = vector.load %arg1[%c0_63, %c0_64, %c48] : memref<1x1x768xf32, #tpu.memory_space<vmem>>, vector<1x1x512xf32>
    %75 = vector.shape_cast %74 : vector<1x1x512xf32> to vector<1x512xf32>
    %76 = arith.truncf %75 : vector<1x512xf32> to vector<1x512xbf16>
    %c18 = arith.constant 18 : index
    %c0_65 = arith.constant 0 : index
    %77 = vector.load %arg5[%c18, %c0_65] : memref<64x512xbf16, #tpu.memory_space<vmem>>, vector<1x512xbf16>
    tpu.vector_store %arg5[%c18, %c0_65], %76 {strides = array<i32>} : memref<64x512xbf16, #tpu.memory_space<vmem>>, vector<1x512xbf16>,
    %c0_66 = arith.constant 0 : index
    %c0_67 = arith.constant 0 : index
    %c49 = arith.constant 49 : index
    %78 = vector.load %arg1[%c0_66, %c0_67, %c49] : memref<1x1x768xf32, #tpu.memory_space<vmem>>, vector<1x1x512xf32>
    %79 = vector.shape_cast %78 : vector<1x1x512xf32> to vector<1x512xf32>
    %80 = arith.truncf %79 : vector<1x512xf32> to vector<1x512xbf16>
    %c19 = arith.constant 19 : index
    %c0_68 = arith.constant 0 : index
    %81 = vector.load %arg5[%c19, %c0_68] : memref<64x512xbf16, #tpu.memory_space<vmem>>, vector<1x512xbf16>
    tpu.vector_store %arg5[%c19, %c0_68], %80 {strides = array<i32>} : memref<64x512xbf16, #tpu.memory_space<vmem>>, vector<1x512xbf16>,
    %c0_69 = arith.constant 0 : index
    %c0_70 = arith.constant 0 : index
    %c50 = arith.constant 50 : index
    %82 = vector.load %arg1[%c0_69, %c0_70, %c50] : memref<1x1x768xf32, #tpu.memory_space<vmem>>, vector<1x1x512xf32>
    %83 = vector.shape_cast %82 : vector<1x1x512xf32> to vector<1x512xf32>
    %84 = arith.truncf %83 : vector<1x512xf32> to vector<1x512xbf16>
    %c20 = arith.constant 20 : index
    %c0_71 = arith.constant 0 : index
    %85 = vector.load %arg5[%c20, %c0_71] : memref<64x512xbf16, #tpu.memory_space<vmem>>, vector<1x512xbf16>
    tpu.vector_store %arg5[%c20, %c0_71], %84 {strides = array<i32>} : memref<64x512xbf16, #tpu.memory_space<vmem>>, vector<1x512xbf16>,
    %c0_72 = arith.constant 0 : index
    %c0_73 = arith.constant 0 : index
    %c66 = arith.constant 66 : index
    %86 = vector.load %arg1[%c0_72, %c0_73, %c66] : memref<1x1x768xf32, #tpu.memory_space<vmem>>, vector<1x1x512xf32>
    %87 = vector.shape_cast %86 : vector<1x1x512xf32> to vector<1x512xf32>
    %88 = arith.truncf %87 : vector<1x512xf32> to vector<1x512xbf16>
    %c21 = arith.constant 21 : index
    %c0_74 = arith.constant 0 : index
    %89 = vector.load %arg5[%c21, %c0_74] : memref<64x512xbf16, #tpu.memory_space<vmem>>, vector<1x512xbf16>
    tpu.vector_store %arg5[%c21, %c0_74], %88 {strides = array<i32>} : memref<64x512xbf16, #tpu.memory_space<vmem>>, vector<1x512xbf16>,
    %c0_75 = arith.constant 0 : index
    %c0_76 = arith.constant 0 : index
    %c67 = arith.constant 67 : index
    %90 = vector.load %arg1[%c0_75, %c0_76, %c67] : memref<1x1x768xf32, #tpu.memory_space<vmem>>, vector<1x1x512xf32>
    %91 = vector.shape_cast %90 : vector<1x1x512xf32> to vector<1x512xf32>
    %92 = arith.truncf %91 : vector<1x512xf32> to vector<1x512xbf16>
    %c22_77 = arith.constant 22 : index
    %c0_78 = arith.constant 0 : index
    %93 = vector.load %arg5[%c22_77, %c0_78] : memref<64x512xbf16, #tpu.memory_space<vmem>>, vector<1x512xbf16>
    tpu.vector_store %arg5[%c22_77, %c0_78], %92 {strides = array<i32>} : memref<64x512xbf16, #tpu.memory_space<vmem>>, vector<1x512xbf16>,
    %c0_79 = arith.constant 0 : index
    %c0_80 = arith.constant 0 : index
    %c68 = arith.constant 68 : index
    %94 = vector.load %arg1[%c0_79, %c0_80, %c68] : memref<1x1x768xf32, #tpu.memory_space<vmem>>, vector<1x1x512xf32>
    %95 = vector.shape_cast %94 : vector<1x1x512xf32> to vector<1x512xf32>
    %96 = arith.truncf %95 : vector<1x512xf32> to vector<1x512xbf16>
    %c23_81 = arith.constant 23 : index
    %c0_82 = arith.constant 0 : index
    %97 = vector.load %arg5[%c23_81, %c0_82] : memref<64x512xbf16, #tpu.memory_space<vmem>>, vector<1x512xbf16>
    tpu.vector_store %arg5[%c23_81, %c0_82], %96 {strides = array<i32>} : memref<64x512xbf16, #tpu.memory_space<vmem>>, vector<1x512xbf16>,
    %c0_83 = arith.constant 0 : index
    %c0_84 = arith.constant 0 : index
    %c69 = arith.constant 69 : index
    %98 = vector.load %arg1[%c0_83, %c0_84, %c69] : memref<1x1x768xf32, #tpu.memory_space<vmem>>, vector<1x1x512xf32>
    %99 = vector.shape_cast %98 : vector<1x1x512xf32> to vector<1x512xf32>
    %100 = arith.truncf %99 : vector<1x512xf32> to vector<1x512xbf16>
    %c24_85 = arith.constant 24 : index
    %c0_86 = arith.constant 0 : index
    %101 = vector.load %arg5[%c24_85, %c0_86] : memref<64x512xbf16, #tpu.memory_space<vmem>>, vector<1x512xbf16>
    tpu.vector_store %arg5[%c24_85, %c0_86], %100 {strides = array<i32>} : memref<64x512xbf16, #tpu.memory_space<vmem>>, vector<1x512xbf16>,
    %c0_87 = arith.constant 0 : index
    %c0_88 = arith.constant 0 : index
    %c70 = arith.constant 70 : index
    %102 = vector.load %arg1[%c0_87, %c0_88, %c70] : memref<1x1x768xf32, #tpu.memory_space<vmem>>, vector<1x1x512xf32>
    %103 = vector.shape_cast %102 : vector<1x1x512xf32> to vector<1x512xf32>
    %104 = arith.truncf %103 : vector<1x512xf32> to vector<1x512xbf16>
    %c25_89 = arith.constant 25 : index
    %c0_90 = arith.constant 0 : index
    %105 = vector.load %arg5[%c25_89, %c0_90] : memref<64x512xbf16, #tpu.memory_space<vmem>>, vector<1x512xbf16>
    tpu.vector_store %arg5[%c25_89, %c0_90], %104 {strides = array<i32>} : memref<64x512xbf16, #tpu.memory_space<vmem>>, vector<1x512xbf16>,
    %c0_91 = arith.constant 0 : index
    %c0_92 = arith.constant 0 : index
    %c71 = arith.constant 71 : index
    %106 = vector.load %arg1[%c0_91, %c0_92, %c71] : memref<1x1x768xf32, #tpu.memory_space<vmem>>, vector<1x1x512xf32>
    %107 = vector.shape_cast %106 : vector<1x1x512xf32> to vector<1x512xf32>
    %108 = arith.truncf %107 : vector<1x512xf32> to vector<1x512xbf16>
    %c26_93 = arith.constant 26 : index
    %c0_94 = arith.constant 0 : index
    %109 = vector.load %arg5[%c26_93, %c0_94] : memref<64x512xbf16, #tpu.memory_space<vmem>>, vector<1x512xbf16>
    tpu.vector_store %arg5[%c26_93, %c0_94], %108 {strides = array<i32>} : memref<64x512xbf16, #tpu.memory_space<vmem>>, vector<1x512xbf16>,
    %c0_95 = arith.constant 0 : index
    %c0_96 = arith.constant 0 : index
    %c72 = arith.constant 72 : index
    %110 = vector.load %arg1[%c0_95, %c0_96, %c72] : memref<1x1x768xf32, #tpu.memory_space<vmem>>, vector<1x1x512xf32>
    %111 = vector.shape_cast %110 : vector<1x1x512xf32> to vector<1x512xf32>
    %112 = arith.truncf %111 : vector<1x512xf32> to vector<1x512xbf16>
    %c27_97 = arith.constant 27 : index
    %c0_98 = arith.constant 0 : index
    %113 = vector.load %arg5[%c27_97, %c0_98] : memref<64x512xbf16, #tpu.memory_space<vmem>>, vector<1x512xbf16>
    tpu.vector_store %arg5[%c27_97, %c0_98], %112 {strides = array<i32>} : memref<64x512xbf16, #tpu.memory_space<vmem>>, vector<1x512xbf16>,
    %c0_99 = arith.constant 0 : index
    %c0_100 = arith.constant 0 : index
    %c88 = arith.constant 88 : index
    %114 = vector.load %arg1[%c0_99, %c0_100, %c88] : memref<1x1x768xf32, #tpu.memory_space<vmem>>, vector<1x1x512xf32>
    %115 = vector.shape_cast %114 : vector<1x1x512xf32> to vector<1x512xf32>
    %116 = arith.truncf %115 : vector<1x512xf32> to vector<1x512xbf16>
    %c28_101 = arith.constant 28 : index
    %c0_102 = arith.constant 0 : index
    %117 = vector.load %arg5[%c28_101, %c0_102] : memref<64x512xbf16, #tpu.memory_space<vmem>>, vector<1x512xbf16>
    tpu.vector_store %arg5[%c28_101, %c0_102], %116 {strides = array<i32>} : memref<64x512xbf16, #tpu.memory_space<vmem>>, vector<1x512xbf16>,
    %c0_103 = arith.constant 0 : index
    %c0_104 = arith.constant 0 : index
    %c89 = arith.constant 89 : index
    %118 = vector.load %arg1[%c0_103, %c0_104, %c89] : memref<1x1x768xf32, #tpu.memory_space<vmem>>, vector<1x1x512xf32>
    %119 = vector.shape_cast %118 : vector<1x1x512xf32> to vector<1x512xf32>
    %120 = arith.truncf %119 : vector<1x512xf32> to vector<1x512xbf16>
    %c29 = arith.constant 29 : index
    %c0_105 = arith.constant 0 : index
    %121 = vector.load %arg5[%c29, %c0_105] : memref<64x512xbf16, #tpu.memory_space<vmem>>, vector<1x512xbf16>
    tpu.vector_store %arg5[%c29, %c0_105], %120 {strides = array<i32>} : memref<64x512xbf16, #tpu.memory_space<vmem>>, vector<1x512xbf16>,
    %c0_106 = arith.constant 0 : index
    %c0_107 = arith.constant 0 : index
    %c90 = arith.constant 90 : index
    %122 = vector.load %arg1[%c0_106, %c0_107, %c90] : memref<1x1x768xf32, #tpu.memory_space<vmem>>, vector<1x1x512xf32>
    %123 = vector.shape_cast %122 : vector<1x1x512xf32> to vector<1x512xf32>
    %124 = arith.truncf %123 : vector<1x512xf32> to vector<1x512xbf16>
    %c30 = arith.constant 30 : index
    %c0_108 = arith.constant 0 : index
    %125 = vector.load %arg5[%c30, %c0_108] : memref<64x512xbf16, #tpu.memory_space<vmem>>, vector<1x512xbf16>
    tpu.vector_store %arg5[%c30, %c0_108], %124 {strides = array<i32>} : memref<64x512xbf16, #tpu.memory_space<vmem>>, vector<1x512xbf16>,
    %c0_109 = arith.constant 0 : index
    %c0_110 = arith.constant 0 : index
    %c91 = arith.constant 91 : index
    %126 = vector.load %arg1[%c0_109, %c0_110, %c91] : memref<1x1x768xf32, #tpu.memory_space<vmem>>, vector<1x1x512xf32>
    %127 = vector.shape_cast %126 : vector<1x1x512xf32> to vector<1x512xf32>
    %128 = arith.truncf %127 : vector<1x512xf32> to vector<1x512xbf16>
    %c31 = arith.constant 31 : index
    %c0_111 = arith.constant 0 : index
    %129 = vector.load %arg5[%c31, %c0_111] : memref<64x512xbf16, #tpu.memory_space<vmem>>, vector<1x512xbf16>
    tpu.vector_store %arg5[%c31, %c0_111], %128 {strides = array<i32>} : memref<64x512xbf16, #tpu.memory_space<vmem>>, vector<1x512xbf16>,
    %c0_112 = arith.constant 0 : index
    %c0_113 = arith.constant 0 : index
    %c92 = arith.constant 92 : index
    %130 = vector.load %arg1[%c0_112, %c0_113, %c92] : memref<1x1x768xf32, #tpu.memory_space<vmem>>, vector<1x1x512xf32>
    %131 = vector.shape_cast %130 : vector<1x1x512xf32> to vector<1x512xf32>
    %132 = arith.truncf %131 : vector<1x512xf32> to vector<1x512xbf16>
    %c32 = arith.constant 32 : index
    %c0_114 = arith.constant 0 : index
    %133 = vector.load %arg5[%c32, %c0_114] : memref<64x512xbf16, #tpu.memory_space<vmem>>, vector<1x512xbf16>
    tpu.vector_store %arg5[%c32, %c0_114], %132 {strides = array<i32>} : memref<64x512xbf16, #tpu.memory_space<vmem>>, vector<1x512xbf16>,
    %c0_115 = arith.constant 0 : index
    %c0_116 = arith.constant 0 : index
    %c93 = arith.constant 93 : index
    %134 = vector.load %arg1[%c0_115, %c0_116, %c93] : memref<1x1x768xf32, #tpu.memory_space<vmem>>, vector<1x1x512xf32>
    %135 = vector.shape_cast %134 : vector<1x1x512xf32> to vector<1x512xf32>
    %136 = arith.truncf %135 : vector<1x512xf32> to vector<1x512xbf16>
    %c33 = arith.constant 33 : index
    %c0_117 = arith.constant 0 : index
    %137 = vector.load %arg5[%c33, %c0_117] : memref<64x512xbf16, #tpu.memory_space<vmem>>, vector<1x512xbf16>
    tpu.vector_store %arg5[%c33, %c0_117], %136 {strides = array<i32>} : memref<64x512xbf16, #tpu.memory_space<vmem>>, vector<1x512xbf16>,
    %c0_118 = arith.constant 0 : index
    %c0_119 = arith.constant 0 : index
    %c94 = arith.constant 94 : index
    %138 = vector.load %arg1[%c0_118, %c0_119, %c94] : memref<1x1x768xf32, #tpu.memory_space<vmem>>, vector<1x1x512xf32>
    %139 = vector.shape_cast %138 : vector<1x1x512xf32> to vector<1x512xf32>
    %140 = arith.truncf %139 : vector<1x512xf32> to vector<1x512xbf16>
    %c34 = arith.constant 34 : index
    %c0_120 = arith.constant 0 : index
    %141 = vector.load %arg5[%c34, %c0_120] : memref<64x512xbf16, #tpu.memory_space<vmem>>, vector<1x512xbf16>
    tpu.vector_store %arg5[%c34, %c0_120], %140 {strides = array<i32>} : memref<64x512xbf16, #tpu.memory_space<vmem>>, vector<1x512xbf16>,
    %c0_121 = arith.constant 0 : index
    %c0_122 = arith.constant 0 : index
    %c110 = arith.constant 110 : index
    %142 = vector.load %arg1[%c0_121, %c0_122, %c110] : memref<1x1x768xf32, #tpu.memory_space<vmem>>, vector<1x1x512xf32>
    %143 = vector.shape_cast %142 : vector<1x1x512xf32> to vector<1x512xf32>
    %144 = arith.truncf %143 : vector<1x512xf32> to vector<1x512xbf16>
    %c35 = arith.constant 35 : index
    %c0_123 = arith.constant 0 : index
    %145 = vector.load %arg5[%c35, %c0_123] : memref<64x512xbf16, #tpu.memory_space<vmem>>, vector<1x512xbf16>
    tpu.vector_store %arg5[%c35, %c0_123], %144 {strides = array<i32>} : memref<64x512xbf16, #tpu.memory_space<vmem>>, vector<1x512xbf16>,
    %c0_124 = arith.constant 0 : index
    %c0_125 = arith.constant 0 : index
    %c111 = arith.constant 111 : index
    %146 = vector.load %arg1[%c0_124, %c0_125, %c111] : memref<1x1x768xf32, #tpu.memory_space<vmem>>, vector<1x1x512xf32>
    %147 = vector.shape_cast %146 : vector<1x1x512xf32> to vector<1x512xf32>
    %148 = arith.truncf %147 : vector<1x512xf32> to vector<1x512xbf16>
    %c36 = arith.constant 36 : index
    %c0_126 = arith.constant 0 : index
    %149 = vector.load %arg5[%c36, %c0_126] : memref<64x512xbf16, #tpu.memory_space<vmem>>, vector<1x512xbf16>
    tpu.vector_store %arg5[%c36, %c0_126], %148 {strides = array<i32>} : memref<64x512xbf16, #tpu.memory_space<vmem>>, vector<1x512xbf16>,
    %c0_127 = arith.constant 0 : index
    %c0_128 = arith.constant 0 : index
    %c112 = arith.constant 112 : index
    %150 = vector.load %arg1[%c0_127, %c0_128, %c112] : memref<1x1x768xf32, #tpu.memory_space<vmem>>, vector<1x1x512xf32>
    %151 = vector.shape_cast %150 : vector<1x1x512xf32> to vector<1x512xf32>
    %152 = arith.truncf %151 : vector<1x512xf32> to vector<1x512xbf16>
    %c37 = arith.constant 37 : index
    %c0_129 = arith.constant 0 : index
    %153 = vector.load %arg5[%c37, %c0_129] : memref<64x512xbf16, #tpu.memory_space<vmem>>, vector<1x512xbf16>
    tpu.vector_store %arg5[%c37, %c0_129], %152 {strides = array<i32>} : memref<64x512xbf16, #tpu.memory_space<vmem>>, vector<1x512xbf16>,
    %c0_130 = arith.constant 0 : index
    %c0_131 = arith.constant 0 : index
    %c113 = arith.constant 113 : index
    %154 = vector.load %arg1[%c0_130, %c0_131, %c113] : memref<1x1x768xf32, #tpu.memory_space<vmem>>, vector<1x1x512xf32>
    %155 = vector.shape_cast %154 : vector<1x1x512xf32> to vector<1x512xf32>
    %156 = arith.truncf %155 : vector<1x512xf32> to vector<1x512xbf16>
    %c38 = arith.constant 38 : index
    %c0_132 = arith.constant 0 : index
    %157 = vector.load %arg5[%c38, %c0_132] : memref<64x512xbf16, #tpu.memory_space<vmem>>, vector<1x512xbf16>
    tpu.vector_store %arg5[%c38, %c0_132], %156 {strides = array<i32>} : memref<64x512xbf16, #tpu.memory_space<vmem>>, vector<1x512xbf16>,
    %c0_133 = arith.constant 0 : index
    %c0_134 = arith.constant 0 : index
    %c114 = arith.constant 114 : index
    %158 = vector.load %arg1[%c0_133, %c0_134, %c114] : memref<1x1x768xf32, #tpu.memory_space<vmem>>, vector<1x1x512xf32>
    %159 = vector.shape_cast %158 : vector<1x1x512xf32> to vector<1x512xf32>
    %160 = arith.truncf %159 : vector<1x512xf32> to vector<1x512xbf16>
    %c39 = arith.constant 39 : index
    %c0_135 = arith.constant 0 : index
    %161 = vector.load %arg5[%c39, %c0_135] : memref<64x512xbf16, #tpu.memory_space<vmem>>, vector<1x512xbf16>
    tpu.vector_store %arg5[%c39, %c0_135], %160 {strides = array<i32>} : memref<64x512xbf16, #tpu.memory_space<vmem>>, vector<1x512xbf16>,
    %c0_136 = arith.constant 0 : index
    %c0_137 = arith.constant 0 : index
    %c115 = arith.constant 115 : index
    %162 = vector.load %arg1[%c0_136, %c0_137, %c115] : memref<1x1x768xf32, #tpu.memory_space<vmem>>, vector<1x1x512xf32>
    %163 = vector.shape_cast %162 : vector<1x1x512xf32> to vector<1x512xf32>
    %164 = arith.truncf %163 : vector<1x512xf32> to vector<1x512xbf16>
    %c40 = arith.constant 40 : index
    %c0_138 = arith.constant 0 : index
    %165 = vector.load %arg5[%c40, %c0_138] : memref<64x512xbf16, #tpu.memory_space<vmem>>, vector<1x512xbf16>
    tpu.vector_store %arg5[%c40, %c0_138], %164 {strides = array<i32>} : memref<64x512xbf16, #tpu.memory_space<vmem>>, vector<1x512xbf16>,
    %c0_139 = arith.constant 0 : index
    %c0_140 = arith.constant 0 : index
    %c116 = arith.constant 116 : index
    %166 = vector.load %arg1[%c0_139, %c0_140, %c116] : memref<1x1x768xf32, #tpu.memory_space<vmem>>, vector<1x1x512xf32>
    %167 = vector.shape_cast %166 : vector<1x1x512xf32> to vector<1x512xf32>
    %168 = arith.truncf %167 : vector<1x512xf32> to vector<1x512xbf16>
    %c41 = arith.constant 41 : index
    %c0_141 = arith.constant 0 : index
    %169 = vector.load %arg5[%c41, %c0_141] : memref<64x512xbf16, #tpu.memory_space<vmem>>, vector<1x512xbf16>
    tpu.vector_store %arg5[%c41, %c0_141], %168 {strides = array<i32>} : memref<64x512xbf16, #tpu.memory_space<vmem>>, vector<1x512xbf16>,
    %c0_142 = arith.constant 0 : index
    %c0_143 = arith.constant 0 : index
    %c132 = arith.constant 132 : index
    %170 = vector.load %arg1[%c0_142, %c0_143, %c132] : memref<1x1x768xf32, #tpu.memory_space<vmem>>, vector<1x1x512xf32>
    %171 = vector.shape_cast %170 : vector<1x1x512xf32> to vector<1x512xf32>
    %172 = arith.truncf %171 : vector<1x512xf32> to vector<1x512xbf16>
    %c42 = arith.constant 42 : index
    %c0_144 = arith.constant 0 : index
    %173 = vector.load %arg5[%c42, %c0_144] : memref<64x512xbf16, #tpu.memory_space<vmem>>, vector<1x512xbf16>
    tpu.vector_store %arg5[%c42, %c0_144], %172 {strides = array<i32>} : memref<64x512xbf16, #tpu.memory_space<vmem>>, vector<1x512xbf16>,
    %c0_145 = arith.constant 0 : index
    %c0_146 = arith.constant 0 : index
    %c133 = arith.constant 133 : index
    %174 = vector.load %arg1[%c0_145, %c0_146, %c133] : memref<1x1x768xf32, #tpu.memory_space<vmem>>, vector<1x1x512xf32>
    %175 = vector.shape_cast %174 : vector<1x1x512xf32> to vector<1x512xf32>
    %176 = arith.truncf %175 : vector<1x512xf32> to vector<1x512xbf16>
    %c43 = arith.constant 43 : index
    %c0_147 = arith.constant 0 : index
    %177 = vector.load %arg5[%c43, %c0_147] : memref<64x512xbf16, #tpu.memory_space<vmem>>, vector<1x512xbf16>
    tpu.vector_store %arg5[%c43, %c0_147], %176 {strides = array<i32>} : memref<64x512xbf16, #tpu.memory_space<vmem>>, vector<1x512xbf16>,
    %c0_148 = arith.constant 0 : index
    %c0_149 = arith.constant 0 : index
    %c134 = arith.constant 134 : index
    %178 = vector.load %arg1[%c0_148, %c0_149, %c134] : memref<1x1x768xf32, #tpu.memory_space<vmem>>, vector<1x1x512xf32>
    %179 = vector.shape_cast %178 : vector<1x1x512xf32> to vector<1x512xf32>
    %180 = arith.truncf %179 : vector<1x512xf32> to vector<1x512xbf16>
    %c44_150 = arith.constant 44 : index
    %c0_151 = arith.constant 0 : index
    %181 = vector.load %arg5[%c44_150, %c0_151] : memref<64x512xbf16, #tpu.memory_space<vmem>>, vector<1x512xbf16>
    tpu.vector_store %arg5[%c44_150, %c0_151], %180 {strides = array<i32>} : memref<64x512xbf16, #tpu.memory_space<vmem>>, vector<1x512xbf16>,
    %c0_152 = arith.constant 0 : index
    %c0_153 = arith.constant 0 : index
    %c135 = arith.constant 135 : index
    %182 = vector.load %arg1[%c0_152, %c0_153, %c135] : memref<1x1x768xf32, #tpu.memory_space<vmem>>, vector<1x1x512xf32>
    %183 = vector.shape_cast %182 : vector<1x1x512xf32> to vector<1x512xf32>
    %184 = arith.truncf %183 : vector<1x512xf32> to vector<1x512xbf16>
    %c45_154 = arith.constant 45 : index
    %c0_155 = arith.constant 0 : index
    %185 = vector.load %arg5[%c45_154, %c0_155] : memref<64x512xbf16, #tpu.memory_space<vmem>>, vector<1x512xbf16>
    tpu.vector_store %arg5[%c45_154, %c0_155], %184 {strides = array<i32>} : memref<64x512xbf16, #tpu.memory_space<vmem>>, vector<1x512xbf16>,
    %c0_156 = arith.constant 0 : index
    %c0_157 = arith.constant 0 : index
    %c136 = arith.constant 136 : index
    %186 = vector.load %arg1[%c0_156, %c0_157, %c136] : memref<1x1x768xf32, #tpu.memory_space<vmem>>, vector<1x1x512xf32>
    %187 = vector.shape_cast %186 : vector<1x1x512xf32> to vector<1x512xf32>
    %188 = arith.truncf %187 : vector<1x512xf32> to vector<1x512xbf16>
    %c46_158 = arith.constant 46 : index
    %c0_159 = arith.constant 0 : index
    %189 = vector.load %arg5[%c46_158, %c0_159] : memref<64x512xbf16, #tpu.memory_space<vmem>>, vector<1x512xbf16>
    tpu.vector_store %arg5[%c46_158, %c0_159], %188 {strides = array<i32>} : memref<64x512xbf16, #tpu.memory_space<vmem>>, vector<1x512xbf16>,
    %c0_160 = arith.constant 0 : index
    %c0_161 = arith.constant 0 : index
    %c137 = arith.constant 137 : index
    %190 = vector.load %arg1[%c0_160, %c0_161, %c137] : memref<1x1x768xf32, #tpu.memory_space<vmem>>, vector<1x1x512xf32>
    %191 = vector.shape_cast %190 : vector<1x1x512xf32> to vector<1x512xf32>
    %192 = arith.truncf %191 : vector<1x512xf32> to vector<1x512xbf16>
    %c47_162 = arith.constant 47 : index
    %c0_163 = arith.constant 0 : index
    %193 = vector.load %arg5[%c47_162, %c0_163] : memref<64x512xbf16, #tpu.memory_space<vmem>>, vector<1x512xbf16>
    tpu.vector_store %arg5[%c47_162, %c0_163], %192 {strides = array<i32>} : memref<64x512xbf16, #tpu.memory_space<vmem>>, vector<1x512xbf16>,
    %c0_164 = arith.constant 0 : index
    %c0_165 = arith.constant 0 : index
    %c138 = arith.constant 138 : index
    %194 = vector.load %arg1[%c0_164, %c0_165, %c138] : memref<1x1x768xf32, #tpu.memory_space<vmem>>, vector<1x1x512xf32>
    %195 = vector.shape_cast %194 : vector<1x1x512xf32> to vector<1x512xf32>
    %196 = arith.truncf %195 : vector<1x512xf32> to vector<1x512xbf16>
    %c48_166 = arith.constant 48 : index
    %c0_167 = arith.constant 0 : index
    %197 = vector.load %arg5[%c48_166, %c0_167] : memref<64x512xbf16, #tpu.memory_space<vmem>>, vector<1x512xbf16>
    tpu.vector_store %arg5[%c48_166, %c0_167], %196 {strides = array<i32>} : memref<64x512xbf16, #tpu.memory_space<vmem>>, vector<1x512xbf16>,
    %c0_168 = arith.constant 0 : index
    %c0_169 = arith.constant 0 : index
    %198 = vector.load %arg2[%c0_168, %c0_169] : memref<16x64xbf16, #tpu.memory_space<vmem>>, vector<16x64xbf16>
    %c0_170 = arith.constant 0 : index
    %c0_171 = arith.constant 0 : index
    %199 = vector.load %arg5[%c0_170, %c0_171] : memref<64x512xbf16, #tpu.memory_space<vmem>>, vector<64x512xbf16>
    %cst_172 = arith.constant dense<0.000000e+00> : vector<16x512xf32>
    %200 = tpu.matmul %198, %199, %cst_172 {dimension_numbers = #tpu.dot_dimension_numbers<[1], [0], [0], [1], [0, 0, 1, 1], [], []>} : vector<16x64xbf16>, vector<64x512xbf16>, vector<16x512xf32> -> vector<16x512xf32>
    %c0_173 = arith.constant 0 : index
    %c0_174 = arith.constant 0 : index
    %201 = vector.load %arg3[%c0_173, %c0_174] : memref<16x1xf32, #tpu.memory_space<vmem>>, vector<16x1xf32>
    %202 = vector.broadcast %201 : vector<16x1xf32> to vector<16x512xf32>
    %203 = arith.addf %200, %202 : vector<16x512xf32>
    %cst_175 = arith.constant 0.00999999977 : f32
    %204 = vector.broadcast %cst_175 : f32 to vector<16x512xf32>
    %205 = arith.mulf %204, %203 : vector<16x512xf32>
    %206 = arith.maximumf %203, %205 : vector<16x512xf32>
    %c0_176 = arith.constant 0 : index
    %c0_177 = arith.constant 0 : index
    %c0_178 = arith.constant 0 : index
    %207 = vector.load %arg4[%c0_176, %c0_177, %c0_178] : memref<1x16x512xf32, #tpu.memory_space<vmem>>, vector<1x16x512xf32>
    %208 = vector.shape_cast %207 : vector<1x16x512xf32> to vector<16x512xf32>
    %209 = vector.shape_cast %206 : vector<16x512xf32> to vector<1x16x512xf32>
    tpu.vector_store %arg4[%c0_176, %c0_177, %c0_178], %209 {strides = array<i32>} : memref<1x16x512xf32, #tpu.memory_space<vmem>>, vector<1x16x512xf32>,
    return
  }
  func.func @transform_0(%arg0: i32) -> (i32, i32, i32) {
    %c0_i32 = arith.constant 0 : i32
    %c0_i32_0 = arith.constant 0 : i32
    %c0_i32_1 = arith.constant 0 : i32
    return %arg0, %c0_i32, %c0_i32_0 : i32, i32, i32
  }
  func.func @transform_1(%arg0: i32) -> (i32, i32) {
    %c0_i32 = arith.constant 0 : i32
    %c0_i32_0 = arith.constant 0 : i32
    %c0_i32_1 = arith.constant 0 : i32
    return %c0_i32, %c0_i32_0 : i32, i32
  }
  func.func @transform_2(%arg0: i32) -> (i32, i32) {
    %c0_i32 = arith.constant 0 : i32
    %c0_i32_0 = arith.constant 0 : i32
    %c0_i32_1 = arith.constant 0 : i32
    return %c0_i32, %c0_i32_0 : i32, i32
  }
  func.func @transform_3(%arg0: i32) -> (i32, i32, i32) {
    %c0_i32 = arith.constant 0 : i32
    %c0_i32_0 = arith.constant 0 : i32
    %c0_i32_1 = arith.constant 0 : i32
    return %arg0, %c0_i32, %c0_i32_0 : i32, i32, i32
  }
}

</mosaic_0001>

<llo_original>
// kernel: tpu_custom_call.1
$region0: #{tpu_custom_call.1}
  #allocation0 [shape = 'u32[]', space=smem, size = 0x4, offset = 0x4, fixed_abs, tag = 'smem constant byte address 0x4 - core index']
  #allocation1 [shape = 'u32[144,128]{1,0:T(1,128)}', space=vmem, size = 0x12000, scoped, tag = 'internal scratch']
  #allocation2 [shape = 'bf16[64,512]{1,0:T(16,128)(2,1)}', space=vmem, size = 0x10000, scoped, tag = 'scratch operand']
  %s0 = inlined_call_operand.hbm [shape: f32[4,1,768], index: 0, kind: input, shape index: {}]
  %s1 = inlined_call_operand.vmem [shape: bf16[16,64], index: 1, kind: input, shape index: {}]
  %s2 = inlined_call_operand.vmem [shape: f32[16,1], index: 2, kind: input, shape index: {}]
  %s3 = inlined_call_operand.hbm [shape: f32[4,16,512], index: 3, kind: output, shape index: {}]
  %s4 = sld [smem:[#allocation0]]
  $region49: #{tpu_custom_call.1} parent=0
    _
  %s6 = ssub.s32 1, %s4
  %s7 = scalar_select 0, %s6, %s4
  $region1: #{tpu_custom_call.1} parent=0
    #allocation3 [shape = 'u8[6144]{0}', space=vmem, size = 0x1800, scoped, tag = 'input window, operand 0']
    #allocation4 [shape = 's32[2]{0}', space=sflag, size = 0x8, scoped, tag = 'scoped memory for tpu_custom_call.1']
    #allocation5 [shape = 's32[2]{0}', space=sflag, size = 0x8, scoped, tag = 'scoped memory for tpu_custom_call.1']
    #allocation6 [shape = 'u8[65536]{0}', space=vmem, size = 0x10000, scoped, tag = 'output window, operand 0']
    %8 = vsyncpa [#allocation4], 0
    %s9 = scalar_lea.sflag [#allocation4], 1
    %10 = vsyncpa %s9, 0
    %11 = vsyncpa [#allocation5], 0
    %s12 = scalar_lea.sflag [#allocation5], 1
    %13 = vsyncpa %s12, 0
    loop: start=0, step=1, limit=6
    $region2: #{tpu_custom_call.1} parent=1 // loop_pre_header
      _
    $region3: #{tpu_custom_call.1} parent=1 // loop_header
      %s15 = sphi 0, %s19
      %p16 = scmp.ge.s32.totalorder %s15, 6
      %s25 = sphi 0, %s27
      %s28 = sphi 0, %s25
      %s29 = sphi 0, %s28
      %s45 = sphi 0, %s29
      %s49 = sphi 0, %s49
      %s51 = sphi 0, %s49
      %s52 = sphi 0, %s51
      %s66 = sphi 0, %s52
      %s70 = sphi 0, %s70
      %s72 = sphi 0, %s70
      %s73 = sphi 0, %s72
      %s87 = sphi 0, %s73
      %s93 = sphi 0, %s95
      %s96 = sphi 0, %s93
      %s97 = sphi 0, %s96
      %s113 = sphi 0, %s97
    $region4: #{tpu_custom_call.1} parent=1 // loop_header_branch
      %18 = sbr.rel (%p16) target = $region8
    $region5: #{tpu_custom_call.1} parent=1 // loop_body
      %s20 = ssub.s32 %s15, 1
      %s21 = ssub.s32 %s15, 2
      %s22 = sadd.s32 %s15, 1
      %s23 = ssub.s32 %s15, %s22
      %p24 = scmp.eq.s32.totalorder %s23, 0
      %s26 = sadd.s32 %s25, 1
      %s27 = scalar_select %p24, %s25, %s26
      %p30 = pneg %p24
      %p31 = scmp.eq.s32.totalorder %s15, 3
      %p32 = por %p30, %p31
      %p33 = scmp.ne.s32.totalorder %s25, %s28
      %p34 = scmp.eq.s32.totalorder %s15, 0
      %p35 = por %p33, %p34
      %p36 = scmp.ne.s32.totalorder %s25, %s28
      %p37 = scmp.eq.s32.totalorder %s20, 3
      %p38 = por %p36, %p37
      %p39 = scmp.ne.s32.totalorder %s28, %s29
      %p40 = scmp.eq.s32.totalorder %s20, 0
      %p41 = por %p39, %p40
      %p42 = scmp.ne.s32.totalorder %s28, %s29
      %p43 = scmp.eq.s32.totalorder %s21, 3
      %p44 = por %p42, %p43
      %p46 = scmp.ne.s32.totalorder %s29, %s45
      %p47 = scmp.eq.s32.totalorder %s21, 0
      %p48 = por %p46, %p47
      %s50 = sadd.s32 %s49, 1
      %p53 = scmp.eq.s32.totalorder %s15, 3
      %p54 = scmp.ne.s32.totalorder %s49, %s51
      %p55 = scmp.eq.s32.totalorder %s15, 0
      %p56 = por %p54, %p55
      %p57 = scmp.ne.s32.totalorder %s49, %s51
      %p58 = scmp.eq.s32.totalorder %s20, 3
      %p59 = por %p57, %p58
      %p60 = scmp.ne.s32.totalorder %s51, %s52
      %p61 = scmp.eq.s32.totalorder %s20, 0
      %p62 = por %p60, %p61
      %p63 = scmp.ne.s32.totalorder %s51, %s52
      %p64 = scmp.eq.s32.totalorder %s21, 3
      %p65 = por %p63, %p64
      %p67 = scmp.ne.s32.totalorder %s52, %s66
      %p68 = scmp.eq.s32.totalorder %s21, 0
      %p69 = por %p67, %p68
      %s71 = sadd.s32 %s70, 1
      %p74 = scmp.eq.s32.totalorder %s15, 3
      %p75 = scmp.ne.s32.totalorder %s70, %s72
      %p76 = scmp.eq.s32.totalorder %s15, 0
      %p77 = por %p75, %p76
      %p78 = scmp.ne.s32.totalorder %s70, %s72
      %p79 = scmp.eq.s32.totalorder %s20, 3
      %p80 = por %p78, %p79
      %p81 = scmp.ne.s32.totalorder %s72, %s73
      %p82 = scmp.eq.s32.totalorder %s20, 0
      %p83 = por %p81, %p82
      %p84 = scmp.ne.s32.totalorder %s72, %s73
      %p85 = scmp.eq.s32.totalorder %s21, 3
      %p86 = por %p84, %p85
      %p88 = scmp.ne.s32.totalorder %s73, %s87
      %p89 = scmp.eq.s32.totalorder %s21, 0
      %p90 = por %p88, %p89
      %s91 = ssub.s32 %s15, %s22
      %p92 = scmp.eq.s32.totalorder %s91, 0
      %s94 = sadd.s32 %s93, 1
      %s95 = scalar_select %p92, %s93, %s94
      %p98 = pneg %p92
      %p99 = scmp.eq.s32.totalorder %s15, 3
      %p100 = por %p98, %p99
      %p101 = scmp.ne.s32.totalorder %s93, %s96
      %p102 = scmp.eq.s32.totalorder %s15, 0
      %p103 = por %p101, %p102
      %p104 = scmp.ne.s32.totalorder %s93, %s96
      %p105 = scmp.eq.s32.totalorder %s20, 3
      %p106 = por %p104, %p105
      %p107 = scmp.ne.s32.totalorder %s96, %s97
      %p108 = scmp.eq.s32.totalorder %s20, 0
      %p109 = por %p107, %p108
      %p110 = scmp.ne.s32.totalorder %s96, %s97
      %p111 = scmp.eq.s32.totalorder %s21, 3
      %p112 = por %p110, %p111
      %p114 = scmp.ne.s32.totalorder %s97, %s113
      %p115 = scmp.eq.s32.totalorder %s21, 0
      %p116 = por %p114, %p115
      %p117 = scmp.le.s32.totalorder 1, %s15
      %p118 = scmp.lt.s32.totalorder %s15, 5
      %p119 = pnand %p117, %p118
      %p120 = pneg %p119
      // Predicated region
      $region9: #{tpu_custom_call.1} parent=5 // pred_check
        _
      $region10: #{tpu_custom_call.1} parent=5 // pred_check_branch
        %122 = sbr.rel (%p119) target = $region12
      $region11: #{tpu_custom_call.1} parent=5 // pred_region
        %s123 = ssub.s32 %s15, 1
        // Predicated region
        $region13: #{tpu_custom_call.1} parent=11 // pred_check
          %p124 = pneg %p62
        $region14: #{tpu_custom_call.1} parent=11 // pred_check_branch
          %126 = sbr.rel (%p124) target = $region16
        $region15: #{tpu_custom_call.1} parent=11 // pred_region
          _
        $region16: #{tpu_custom_call.1} parent=11 // pred_fallthru
          _
        // Predicated region
        $region17: #{tpu_custom_call.1} parent=11 // pred_check
          %p127 = pneg %p83
        $region18: #{tpu_custom_call.1} parent=11 // pred_check_branch
          %129 = sbr.rel (%p127) target = $region20
        $region19: #{tpu_custom_call.1} parent=11 // pred_region
          _
        $region20: #{tpu_custom_call.1} parent=11 // pred_fallthru
          _
      $region12: #{tpu_custom_call.1} parent=5 // pred_fallthru
        _
      %p130 = scmp.lt.s32.totalorder %s15, 4
      // Predicated region
      $region21: #{tpu_custom_call.1} parent=5 // pred_check
        %p131 = pneg %p130
      $region22: #{tpu_custom_call.1} parent=5 // pred_check_branch
        %133 = sbr.rel (%p131) target = $region24
      $region23: #{tpu_custom_call.1} parent=5 // pred_region
        // Predicated region
        $region25: #{tpu_custom_call.1} parent=23 // pred_check
          %p134 = pneg %p35
        $region26: #{tpu_custom_call.1} parent=23 // pred_check_branch
          %136 = sbr.rel (%p134) target = $region28
        $region27: #{tpu_custom_call.1} parent=23 // pred_region
          %s137 = sand.u32 %s25, 1
          %s138 = scalar_lea.sflag [#allocation4], %s137
          %s139 = sand.u32 %s25, 1
          %s140 = smul.addr %s139, 6
          %s141 = scalar_lea.vmem [#allocation3], %s140
          %s143 = ssub.s32 96, 96
          %144 = vsyncadd %s138, %s143
          %s145 = smul.addr %s15, 6
          %s146 = smul.addr %s145, 16
          %s147 = scalar_lea.hbm %s0, %s146
          %s149 = sshll.u32 %s141, 4
          %s150 = int_to_ptr.vmem [resolvable:$true] %s149
          %152 = dma.hbm_to_vmem [thread:$0]  %s147, 96, %s150, %s138
        $region28: #{tpu_custom_call.1} parent=23 // pred_fallthru
          _
      $region24: #{tpu_custom_call.1} parent=5 // pred_fallthru
        _
      %p153 = scmp.le.s32.totalorder 1, %s15
      %p154 = scmp.lt.s32.totalorder %s15, 5
      %p155 = pnand %p153, %p154
      %p156 = pneg %p155
      // Predicated region
      $region29: #{tpu_custom_call.1} parent=5 // pred_check
        _
      $region30: #{tpu_custom_call.1} parent=5 // pred_check_branch
        %158 = sbr.rel (%p155) target = $region32
      $region31: #{tpu_custom_call.1} parent=5 // pred_region
        %s159 = ssub.s32 %s15, 1
        %s160 = sand.u32 %s28, 1
        %s161 = scalar_lea.sflag [#allocation4], %s160
        %s162 = sand.u32 %s28, 1
        %s163 = smul.addr %s162, 6
        %s164 = scalar_lea.vmem [#allocation3], %s163
        // Predicated region
        $region33: #{tpu_custom_call.1} parent=31 // pred_check
          %p165 = pneg %p41
        $region34: #{tpu_custom_call.1} parent=31 // pred_check_branch
          %167 = sbr.rel (%p165) target = $region36
        $region35: #{tpu_custom_call.1} parent=31 // pred_region
          %168 = dma.done %s161, 96
        $region36: #{tpu_custom_call.1} parent=31 // pred_fallthru
          _
        %s169 = sand.u32 %s28, 1
        %s170 = scalar_lea.sflag [#allocation4], %s169
        %s171 = sand.u32 %s28, 1
        %s172 = smul.addr %s171, 6
        %s173 = scalar_lea.vmem [#allocation3], %s172
        %p174 = pneg %p41
        %p175 = pneg %p38
        %p176 = pneg %p62
        %p177 = pneg %p59
        %p178 = pneg %p83
        %p179 = pneg %p80
        %p180 = pneg %p109
        %p181 = pneg %p106
        %s182 = sand.u32 %s96, 1
        %s183 = scalar_lea.sflag [#allocation5], %s182
        %s184 = sand.u32 %s96, 1
        %s185 = smul.addr %s184, 64
        %s186 = scalar_lea.vmem [#allocation6], %s185
        %188 = vst [vmem:[#allocation2] sm:$0xff] 0
        %189 = vst [vmem:[#allocation2 + $0x8] sm:$0xff] 0
        %190 = vst [vmem:[#allocation2 + $0x10] sm:$0xff] 0
        %191 = vst [vmem:[#allocation2 + $0x18] sm:$0xff] 0
        %192 = vst [vmem:[#allocation2 + $0x20] sm:$0xff] 0
        %193 = vst [vmem:[#allocation2 + $0x28] sm:$0xff] 0
        %194 = vst [vmem:[#allocation2 + $0x30] sm:$0xff] 0
        %195 = vst [vmem:[#allocation2 + $0x38] sm:$0xff] 0
        %196 = vst [vmem:[#allocation2 + $0x40] sm:$0xff] 0
        %197 = vst [vmem:[#allocation2 + $0x48] sm:$0xff] 0
        %198 = vst [vmem:[#allocation2 + $0x50] sm:$0xff] 0
        %199 = vst [vmem:[#allocation2 + $0x58] sm:$0xff] 0
        %200 = vst [vmem:[#allocation2 + $0x60] sm:$0xff] 0
        %201 = vst [vmem:[#allocation2 + $0x68] sm:$0xff] 0
        %202 = vst [vmem:[#allocation2 + $0x70] sm:$0xff] 0
        %203 = vst [vmem:[#allocation2 + $0x78] sm:$0xff] 0
        %v204 = vld [vmem:[%s164] sm:$0xf]
        %v206 = vlaneseq
        %v207 = vshrl.u32 %v206, 7
        %v208 = vsub.s32 0, %v207
        %v209 = vrot.slane %v204, %v208
        %v210 = vlaneseq
        %v211 = vshrl.u32 %v210, 7
        %v212 = vsub.s32 1, %v211
        %v213 = vrot.slane %v204, %v212
        %v214 = vlaneseq
        %v215 = vshrl.u32 %v214, 7
        %v216 = vsub.s32 2, %v215
        %v217 = vrot.slane %v204, %v216
        %v218 = vlaneseq
        %v219 = vshrl.u32 %v218, 7
        %v220 = vsub.s32 3, %v219
        %v221 = vrot.slane %v204, %v220
        %v226 = vpack.c.bf16 %v209, %v209
        %v227 = vpack.c.bf16 %v213, %v213
        %v228 = vpack.c.bf16 %v217, %v217
        %v229 = vpack.c.bf16 %v221, %v221
        %vm230 = vcmask 1040384
        %vm231 = vsmask.f32 256
        %vm232 = vmand %vm230, %vm231
        %v233 = vld [vmem:[#allocation2] sm:$0x1]
        %v234 = vsel %vm232, %v226, %v233
        %235 = vst [vmem:[#allocation2] sm:$0x1] %v234
        %v236 = vld [vmem:[#allocation2 + $0x8] sm:$0x1]
        %v237 = vsel %vm232, %v227, %v236
        %238 = vst [vmem:[#allocation2 + $0x8] sm:$0x1] %v237
        %v239 = vld [vmem:[#allocation2 + $0x10] sm:$0x1]
        %v240 = vsel %vm232, %v228, %v239
        %241 = vst [vmem:[#allocation2 + $0x10] sm:$0x1] %v240
        %v242 = vld [vmem:[#allocation2 + $0x18] sm:$0x1]
        %v243 = vsel %vm232, %v229, %v242
        %244 = vst [vmem:[#allocation2 + $0x18] sm:$0x1] %v243
        %v245 = vld [vmem:[%s164] sm:$0x1f]
        %v247 = vlaneseq
        %v248 = vshrl.u32 %v247, 7
        %v249 = vsub.s32 0, %v248
        %v250 = vrot.slane %v245, %v249
        %v251 = vlaneseq
        %v252 = vshrl.u32 %v251, 7
        %v253 = vsub.s32 1, %v252
        %v254 = vrot.slane %v245, %v253
        %v255 = vlaneseq
        %v256 = vshrl.u32 %v255, 7
        %v257 = vsub.s32 2, %v256
        %v258 = vrot.slane %v245, %v257
        %v259 = vlaneseq
        %v260 = vshrl.u32 %v259, 7
        %v261 = vsub.s32 3, %v260
        %v262 = vrot.slane %v245, %v261
        %v263 = vlaneseq
        %v264 = vshrl.u32 %v263, 7
        %v265 = vsub.s32 4, %v264
        %v266 = vrot.slane %v245, %v265
        %v272 = vpack.c.bf16 %v250, %v250
        %v273 = vpack.c.bf16 %v254, %v254
        %v274 = vpack.c.bf16 %v258, %v258
        %v275 = vpack.c.bf16 %v262, %v262
        %v276 = vpack.c.bf16 %v266, %v266
        %v278 = vshll.u32 %v272, 16
        %v281 = vshll.u32 %v273, 16
        %v284 = vshll.u32 %v274, 16
        %v287 = vshll.u32 %v275, 16
        %v290 = vshll.u32 %v276, 16
        %292 = vrot.lane.b32.xlu0 %v278, 127
        %v293 = vpop.permute.xlu0 %292
        %294 = vrot.lane.b32.xlu0 %v281, 127
        %v295 = vpop.permute.xlu0 %294
        %296 = vrot.lane.b32.xlu0 %v284, 127
        %v297 = vpop.permute.xlu0 %296
        %298 = vrot.lane.b32.xlu0 %v287, 127
        %v299 = vpop.permute.xlu0 %298
        %300 = vrot.lane.b32.xlu0 %v290, 127
        %v301 = vpop.permute.xlu0 %300
        %vm302 = vcmask 1039360
        %v303 = vsel %vm302, %v293, %v295
        %v304 = vsel %vm302, %v295, %v297
        %v305 = vsel %vm302, %v297, %v299
        %v306 = vsel %vm302, %v299, %v301
        %vm311 = vsmask.f32 7938
        %vm312 = vmand %vm230, %vm311
        %v313 = vld [vmem:[#allocation2] sm:$0x1]
        %v314 = vsel %vm312, %v303, %v313
        %315 = vst [vmem:[#allocation2] sm:$0x1] %v314
        %v316 = vld [vmem:[#allocation2 + $0x8] sm:$0x1]
        %v317 = vsel %vm312, %v304, %v316
        %318 = vst [vmem:[#allocation2 + $0x8] sm:$0x1] %v317
        %v319 = vld [vmem:[#allocation2 + $0x10] sm:$0x1]
        %v320 = vsel %vm312, %v305, %v319
        %321 = vst [vmem:[#allocation2 + $0x10] sm:$0x1] %v320
        %v322 = vld [vmem:[#allocation2 + $0x18] sm:$0x1]
        %v323 = vsel %vm312, %v306, %v322
        %324 = vst [vmem:[#allocation2 + $0x18] sm:$0x1] %v323
        %v325 = vld [vmem:[%s164] sm:$0x1f]
        %v327 = vlaneseq
        %v328 = vshrl.u32 %v327, 7
        %v329 = vsub.s32 0, %v328
        %v330 = vrot.slane %v325, %v329
        %v331 = vlaneseq
        %v332 = vshrl.u32 %v331, 7
        %v333 = vsub.s32 1, %v332
        %v334 = vrot.slane %v325, %v333
        %v335 = vlaneseq
        %v336 = vshrl.u32 %v335, 7
        %v337 = vsub.s32 2, %v336
        %v338 = vrot.slane %v325, %v337
        %v339 = vlaneseq
        %v340 = vshrl.u32 %v339, 7
        %v341 = vsub.s32 3, %v340
        %v342 = vrot.slane %v325, %v341
        %v343 = vlaneseq
        %v344 = vshrl.u32 %v343, 7
        %v345 = vsub.s32 4, %v344
        %v346 = vrot.slane %v325, %v345
        %v352 = vpack.c.bf16 %v330, %v330
        %v353 = vpack.c.bf16 %v334, %v334
        %v354 = vpack.c.bf16 %v338, %v338
        %v355 = vpack.c.bf16 %v342, %v342
        %v356 = vpack.c.bf16 %v346, %v346
        %v362 = vrot.slane %v352, 7
        %v363 = vrot.slane %v353, 7
        %v364 = vrot.slane %v354, 7
        %v365 = vrot.slane %v355, 7
        %v366 = vrot.slane %v356, 7
        %367 = vrot.lane.b32.xlu0 %v362, 126
        %v368 = vpop.permute.xlu0 %367
        %369 = vrot.lane.b32.xlu0 %v363, 126
        %v370 = vpop.permute.xlu0 %369
        %371 = vrot.lane.b32.xlu0 %v364, 126
        %v372 = vpop.permute.xlu0 %371
        %373 = vrot.lane.b32.xlu0 %v365, 126
        %v374 = vpop.permute.xlu0 %373
        %375 = vrot.lane.b32.xlu0 %v366, 126
        %v376 = vpop.permute.xlu0 %375
        %vm377 = vcmask 1031168
        %v378 = vsel %vm377, %v368, %v370
        %v379 = vsel %vm377, %v370, %v372
        %v380 = vsel %vm377, %v372, %v374
        %v381 = vsel %vm377, %v374, %v376
        %vm386 = vcmask 1041409
        %vm387 = vsmask.f32 1280
        %vm388 = vmand %vm386, %vm387
        %v389 = vld [vmem:[#allocation2] sm:$0x2]
        %v390 = vsel %vm388, %v378, %v389
        %391 = vst [vmem:[#allocation2] sm:$0x2] %v390
        %v392 = vld [vmem:[#allocation2 + $0x8] sm:$0x2]
        %v393 = vsel %vm388, %v379, %v392
        %394 = vst [vmem:[#allocation2 + $0x8] sm:$0x2] %v393
        %v395 = vld [vmem:[#allocation2 + $0x10] sm:$0x2]
        %v396 = vsel %vm388, %v380, %v395
        %397 = vst [vmem:[#allocation2 + $0x10] sm:$0x2] %v396
        %v398 = vld [vmem:[#allocation2 + $0x18] sm:$0x2]
        %v399 = vsel %vm388, %v381, %v398
        %400 = vst [vmem:[#allocation2 + $0x18] sm:$0x2] %v399
        %v401 = vld [vmem:[%s164] sm:$0x1f]
        %v403 = vlaneseq
        %v404 = vshrl.u32 %v403, 7
        %v405 = vsub.s32 0, %v404
        %v406 = vrot.slane %v401, %v405
        %v407 = vlaneseq
        %v408 = vshrl.u32 %v407, 7
        %v409 = vsub.s32 1, %v408
        %v410 = vrot.slane %v401, %v409
        %v411 = vlaneseq
        %v412 = vshrl.u32 %v411, 7
        %v413 = vsub.s32 2, %v412
        %v414 = vrot.slane %v401, %v413
        %v415 = vlaneseq
        %v416 = vshrl.u32 %v415, 7
        %v417 = vsub.s32 3, %v416
        %v418 = vrot.slane %v401, %v417
        %v419 = vlaneseq
        %v420 = vshrl.u32 %v419, 7
        %v421 = vsub.s32 4, %v420
        %v422 = vrot.slane %v401, %v421
        %v428 = vpack.c.bf16 %v406, %v406
        %v429 = vpack.c.bf16 %v410, %v410
        %v430 = vpack.c.bf16 %v414, %v414
        %v431 = vpack.c.bf16 %v418, %v418
        %v432 = vpack.c.bf16 %v422, %v422
        %v434 = vshll.u32 %v428, 16
        %v436 = vrot.slane %v434, 7
        %v438 = vshll.u32 %v429, 16
        %v440 = vrot.slane %v438, 7
        %v442 = vshll.u32 %v430, 16
        %v444 = vrot.slane %v442, 7
        %v446 = vshll.u32 %v431, 16
        %v448 = vrot.slane %v446, 7
        %v450 = vshll.u32 %v432, 16
        %v452 = vrot.slane %v450, 7
        %453 = vrot.lane.b32.xlu0 %v436, 125
        %v454 = vpop.permute.xlu0 %453
        %455 = vrot.lane.b32.xlu0 %v440, 125
        %v456 = vpop.permute.xlu0 %455
        %457 = vrot.lane.b32.xlu0 %v444, 125
        %v458 = vpop.permute.xlu0 %457
        %459 = vrot.lane.b32.xlu0 %v448, 125
        %v460 = vpop.permute.xlu0 %459
        %461 = vrot.lane.b32.xlu0 %v452, 125
        %v462 = vpop.permute.xlu0 %461
        %vm463 = vcmask 1022976
        %v464 = vsel %vm463, %v454, %v456
        %v465 = vsel %vm463, %v456, %v458
        %v466 = vsel %vm463, %v458, %v460
        %v467 = vsel %vm463, %v460, %v462
        %vm472 = vsmask.f32 7942
        %vm473 = vmand %vm386, %vm472
        %v474 = vld [vmem:[#allocation2] sm:$0x2]
        %v475 = vsel %vm473, %v464, %v474
        %476 = vst [vmem:[#allocation2] sm:$0x2] %v475
        %v477 = vld [vmem:[#allocation2 + $0x8] sm:$0x2]
        %v478 = vsel %vm473, %v465, %v477
        %479 = vst [vmem:[#allocation2 + $0x8] sm:$0x2] %v478
        %v480 = vld [vmem:[#allocation2 + $0x10] sm:$0x2]
        %v481 = vsel %vm473, %v466, %v480
        %482 = vst [vmem:[#allocation2 + $0x10] sm:$0x2] %v481
        %v483 = vld [vmem:[#allocation2 + $0x18] sm:$0x2]
        %v484 = vsel %vm473, %v467, %v483
        %485 = vst [vmem:[#allocation2 + $0x18] sm:$0x2] %v484
        %v486 = vld [vmem:[%s164] sm:$0x1f]
        %v488 = vlaneseq
        %v489 = vshrl.u32 %v488, 7
        %v490 = vsub.s32 0, %v489
        %v491 = vrot.slane %v486, %v490
        %v492 = vlaneseq
        %v493 = vshrl.u32 %v492, 7
        %v494 = vsub.s32 1, %v493
        %v495 = vrot.slane %v486, %v494
        %v496 = vlaneseq
        %v497 = vshrl.u32 %v496, 7
        %v498 = vsub.s32 2, %v497
        %v499 = vrot.slane %v486, %v498
        %v500 = vlaneseq
        %v501 = vshrl.u32 %v500, 7
        %v502 = vsub.s32 3, %v501
        %v503 = vrot.slane %v486, %v502
        %v504 = vlaneseq
        %v505 = vshrl.u32 %v504, 7
        %v506 = vsub.s32 4, %v505
        %v507 = vrot.slane %v486, %v506
        %v513 = vpack.c.bf16 %v491, %v491
        %v514 = vpack.c.bf16 %v495, %v495
        %v515 = vpack.c.bf16 %v499, %v499
        %v516 = vpack.c.bf16 %v503, %v503
        %v517 = vpack.c.bf16 %v507, %v507
        %v523 = vrot.slane %v513, 6
        %v524 = vrot.slane %v514, 6
        %v525 = vrot.slane %v515, 6
        %v526 = vrot.slane %v516, 6
        %v527 = vrot.slane %v517, 6
        %528 = vrot.lane.b32.xlu0 %v523, 124
        %v529 = vpop.permute.xlu0 %528
        %530 = vrot.lane.b32.xlu0 %v524, 124
        %v531 = vpop.permute.xlu0 %530
        %532 = vrot.lane.b32.xlu0 %v525, 124
        %v533 = vpop.permute.xlu0 %532
        %534 = vrot.lane.b32.xlu0 %v526, 124
        %v535 = vpop.permute.xlu0 %534
        %536 = vrot.lane.b32.xlu0 %v527, 124
        %v537 = vpop.permute.xlu0 %536
        %vm538 = vcmask 1014784
        %v539 = vsel %vm538, %v529, %v531
        %v540 = vsel %vm538, %v531, %v533
        %v541 = vsel %vm538, %v533, %v535
        %v542 = vsel %vm538, %v535, %v537
        %vm547 = vcmask 1042434
        %vm548 = vsmask.f32 2304
        %vm549 = vmand %vm547, %vm548
        %v550 = vld [vmem:[#allocation2] sm:$0x4]
        %v551 = vsel %vm549, %v539, %v550
        %552 = vst [vmem:[#allocation2] sm:$0x4] %v551
        %v553 = vld [vmem:[#allocation2 + $0x8] sm:$0x4]
        %v554 = vsel %vm549, %v540, %v553
        %555 = vst [vmem:[#allocation2 + $0x8] sm:$0x4] %v554
        %v556 = vld [vmem:[#allocation2 + $0x10] sm:$0x4]
        %v557 = vsel %vm549, %v541, %v556
        %558 = vst [vmem:[#allocation2 + $0x10] sm:$0x4] %v557
        %v559 = vld [vmem:[#allocation2 + $0x18] sm:$0x4]
        %v560 = vsel %vm549, %v542, %v559
        %561 = vst [vmem:[#allocation2 + $0x18] sm:$0x4] %v560
        %v562 = vld [vmem:[%s164] sm:$0x1f]
        %v564 = vlaneseq
        %v565 = vshrl.u32 %v564, 7
        %v566 = vsub.s32 0, %v565
        %v567 = vrot.slane %v562, %v566
        %v568 = vlaneseq
        %v569 = vshrl.u32 %v568, 7
        %v570 = vsub.s32 1, %v569
        %v571 = vrot.slane %v562, %v570
        %v572 = vlaneseq
        %v573 = vshrl.u32 %v572, 7
        %v574 = vsub.s32 2, %v573
        %v575 = vrot.slane %v562, %v574
        %v576 = vlaneseq
        %v577 = vshrl.u32 %v576, 7
        %v578 = vsub.s32 3, %v577
        %v579 = vrot.slane %v562, %v578
        %v580 = vlaneseq
        %v581 = vshrl.u32 %v580, 7
        %v582 = vsub.s32 4, %v581
        %v583 = vrot.slane %v562, %v582
        %v589 = vpack.c.bf16 %v567, %v567
        %v590 = vpack.c.bf16 %v571, %v571
        %v591 = vpack.c.bf16 %v575, %v575
        %v592 = vpack.c.bf16 %v579, %v579
        %v593 = vpack.c.bf16 %v583, %v583
        %v595 = vshll.u32 %v589, 16
        %v597 = vrot.slane %v595, 6
        %v599 = vshll.u32 %v590, 16
        %v601 = vrot.slane %v599, 6
        %v603 = vshll.u32 %v591, 16
        %v605 = vrot.slane %v603, 6
        %v607 = vshll.u32 %v592, 16
        %v609 = vrot.slane %v607, 6
        %v611 = vshll.u32 %v593, 16
        %v613 = vrot.slane %v611, 6
        %614 = vrot.lane.b32.xlu0 %v597, 123
        %v615 = vpop.permute.xlu0 %614
        %616 = vrot.lane.b32.xlu0 %v601, 123
        %v617 = vpop.permute.xlu0 %616
        %618 = vrot.lane.b32.xlu0 %v605, 123
        %v619 = vpop.permute.xlu0 %618
        %620 = vrot.lane.b32.xlu0 %v609, 123
        %v621 = vpop.permute.xlu0 %620
        %622 = vrot.lane.b32.xlu0 %v613, 123
        %v623 = vpop.permute.xlu0 %622
        %vm624 = vcmask 1006592
        %v625 = vsel %vm624, %v615, %v617
        %v626 = vsel %vm624, %v617, %v619
        %v627 = vsel %vm624, %v619, %v621
        %v628 = vsel %vm624, %v621, %v623
        %vm633 = vsmask.f32 7946
        %vm634 = vmand %vm547, %vm633
        %v635 = vld [vmem:[#allocation2] sm:$0x4]
        %v636 = vsel %vm634, %v625, %v635
        %637 = vst [vmem:[#allocation2] sm:$0x4] %v636
        %v638 = vld [vmem:[#allocation2 + $0x8] sm:$0x4]
        %v639 = vsel %vm634, %v626, %v638
        %640 = vst [vmem:[#allocation2 + $0x8] sm:$0x4] %v639
        %v641 = vld [vmem:[#allocation2 + $0x10] sm:$0x4]
        %v642 = vsel %vm634, %v627, %v641
        %643 = vst [vmem:[#allocation2 + $0x10] sm:$0x4] %v642
        %v644 = vld [vmem:[#allocation2 + $0x18] sm:$0x4]
        %v645 = vsel %vm634, %v628, %v644
        %646 = vst [vmem:[#allocation2 + $0x18] sm:$0x4] %v645
        %v647 = vld [vmem:[%s164] sm:$0x1f]
        %v649 = vlaneseq
        %v650 = vshrl.u32 %v649, 7
        %v651 = vsub.s32 0, %v650
        %v652 = vrot.slane %v647, %v651
        %v653 = vlaneseq
        %v654 = vshrl.u32 %v653, 7
        %v655 = vsub.s32 1, %v654
        %v656 = vrot.slane %v647, %v655
        %v657 = vlaneseq
        %v658 = vshrl.u32 %v657, 7
        %v659 = vsub.s32 2, %v658
        %v660 = vrot.slane %v647, %v659
        %v661 = vlaneseq
        %v662 = vshrl.u32 %v661, 7
        %v663 = vsub.s32 3, %v662
        %v664 = vrot.slane %v647, %v663
        %v665 = vlaneseq
        %v666 = vshrl.u32 %v665, 7
        %v667 = vsub.s32 4, %v666
        %v668 = vrot.slane %v647, %v667
        %v674 = vpack.c.bf16 %v652, %v652
        %v675 = vpack.c.bf16 %v656, %v656
        %v676 = vpack.c.bf16 %v660, %v660
        %v677 = vpack.c.bf16 %v664, %v664
        %v678 = vpack.c.bf16 %v668, %v668
        %v684 = vrot.slane %v674, 5
        %v685 = vrot.slane %v675, 5
        %v686 = vrot.slane %v676, 5
        %v687 = vrot.slane %v677, 5
        %v688 = vrot.slane %v678, 5
        %689 = vrot.lane.b32.xlu0 %v684, 122
        %v690 = vpop.permute.xlu0 %689
        %691 = vrot.lane.b32.xlu0 %v685, 122
        %v692 = vpop.permute.xlu0 %691
        %693 = vrot.lane.b32.xlu0 %v686, 122
        %v694 = vpop.permute.xlu0 %693
        %695 = vrot.lane.b32.xlu0 %v687, 122
        %v696 = vpop.permute.xlu0 %695
        %697 = vrot.lane.b32.xlu0 %v688, 122
        %v698 = vpop.permute.xlu0 %697
        %vm699 = vcmask 998400
        %v700 = vsel %vm699, %v690, %v692
        %v701 = vsel %vm699, %v692, %v694
        %v702 = vsel %vm699, %v694, %v696
        %v703 = vsel %vm699, %v696, %v698
        %vm708 = vcmask 1043459
        %vm709 = vsmask.f32 3328
        %vm710 = vmand %vm708, %vm709
        %v711 = vld [vmem:[#allocation2] sm:$0x8]
        %v712 = vsel %vm710, %v700, %v711
        %713 = vst [vmem:[#allocation2] sm:$0x8] %v712
        %v714 = vld [vmem:[#allocation2 + $0x8] sm:$0x8]
        %v715 = vsel %vm710, %v701, %v714
        %716 = vst [vmem:[#allocation2 + $0x8] sm:$0x8] %v715
        %v717 = vld [vmem:[#allocation2 + $0x10] sm:$0x8]
        %v718 = vsel %vm710, %v702, %v717
        %719 = vst [vmem:[#allocation2 + $0x10] sm:$0x8] %v718
        %v720 = vld [vmem:[#allocation2 + $0x18] sm:$0x8]
        %v721 = vsel %vm710, %v703, %v720
        %722 = vst [vmem:[#allocation2 + $0x18] sm:$0x8] %v721
        %v723 = vld [vmem:[%s164] sm:$0x1f]
        %v725 = vlaneseq
        %v726 = vshrl.u32 %v725, 7
        %v727 = vsub.s32 0, %v726
        %v728 = vrot.slane %v723, %v727
        %v729 = vlaneseq
        %v730 = vshrl.u32 %v729, 7
        %v731 = vsub.s32 1, %v730
        %v732 = vrot.slane %v723, %v731
        %v733 = vlaneseq
        %v734 = vshrl.u32 %v733, 7
        %v735 = vsub.s32 2, %v734
        %v736 = vrot.slane %v723, %v735
        %v737 = vlaneseq
        %v738 = vshrl.u32 %v737, 7
        %v739 = vsub.s32 3, %v738
        %v740 = vrot.slane %v723, %v739
        %v741 = vlaneseq
        %v742 = vshrl.u32 %v741, 7
        %v743 = vsub.s32 4, %v742
        %v744 = vrot.slane %v723, %v743
        %v750 = vpack.c.bf16 %v728, %v728
        %v751 = vpack.c.bf16 %v732, %v732
        %v752 = vpack.c.bf16 %v736, %v736
        %v753 = vpack.c.bf16 %v740, %v740
        %v754 = vpack.c.bf16 %v744, %v744
        %v756 = vshll.u32 %v750, 16
        %v758 = vrot.slane %v756, 5
        %v760 = vshll.u32 %v751, 16
        %v762 = vrot.slane %v760, 5
        %v764 = vshll.u32 %v752, 16
        %v766 = vrot.slane %v764, 5
        %v768 = vshll.u32 %v753, 16
        %v770 = vrot.slane %v768, 5
        %v772 = vshll.u32 %v754, 16
        %v774 = vrot.slane %v772, 5
        %775 = vrot.lane.b32.xlu0 %v758, 106
        %v776 = vpop.permute.xlu0 %775
        %777 = vrot.lane.b32.xlu0 %v762, 106
        %v778 = vpop.permute.xlu0 %777
        %779 = vrot.lane.b32.xlu0 %v766, 106
        %v780 = vpop.permute.xlu0 %779
        %781 = vrot.lane.b32.xlu0 %v770, 106
        %v782 = vpop.permute.xlu0 %781
        %783 = vrot.lane.b32.xlu0 %v774, 106
        %v784 = vpop.permute.xlu0 %783
        %vm785 = vcmask 867328
        %v786 = vsel %vm785, %v776, %v778
        %v787 = vsel %vm785, %v778, %v780
        %v788 = vsel %vm785, %v780, %v782
        %v789 = vsel %vm785, %v782, %v784
        %vm794 = vsmask.f32 7950
        %vm795 = vmand %vm708, %vm794
        %v796 = vld [vmem:[#allocation2] sm:$0x8]
        %v797 = vsel %vm795, %v786, %v796
        %798 = vst [vmem:[#allocation2] sm:$0x8] %v797
        %v799 = vld [vmem:[#allocation2 + $0x8] sm:$0x8]
        %v800 = vsel %vm795, %v787, %v799
        %801 = vst [vmem:[#allocation2 + $0x8] sm:$0x8] %v800
        %v802 = vld [vmem:[#allocation2 + $0x10] sm:$0x8]
        %v803 = vsel %vm795, %v788, %v802
        %804 = vst [vmem:[#allocation2 + $0x10] sm:$0x8] %v803
        %v805 = vld [vmem:[#allocation2 + $0x18] sm:$0x8]
        %v806 = vsel %vm795, %v789, %v805
        %807 = vst [vmem:[#allocation2 + $0x18] sm:$0x8] %v806
        %v808 = vld [vmem:[%s164] sm:$0x1f]
        %v810 = vlaneseq
        %v811 = vshrl.u32 %v810, 7
        %v812 = vsub.s32 0, %v811
        %v813 = vrot.slane %v808, %v812
        %v814 = vlaneseq
        %v815 = vshrl.u32 %v814, 7
        %v816 = vsub.s32 1, %v815
        %v817 = vrot.slane %v808, %v816
        %v818 = vlaneseq
        %v819 = vshrl.u32 %v818, 7
        %v820 = vsub.s32 2, %v819
        %v821 = vrot.slane %v808, %v820
        %v822 = vlaneseq
        %v823 = vshrl.u32 %v822, 7
        %v824 = vsub.s32 3, %v823
        %v825 = vrot.slane %v808, %v824
        %v826 = vlaneseq
        %v827 = vshrl.u32 %v826, 7
        %v828 = vsub.s32 4, %v827
        %v829 = vrot.slane %v808, %v828
        %v835 = vpack.c.bf16 %v813, %v813
        %v836 = vpack.c.bf16 %v817, %v817
        %v837 = vpack.c.bf16 %v821, %v821
        %v838 = vpack.c.bf16 %v825, %v825
        %v839 = vpack.c.bf16 %v829, %v829
        %v845 = vrot.slane %v835, 4
        %v846 = vrot.slane %v836, 4
        %v847 = vrot.slane %v837, 4
        %v848 = vrot.slane %v838, 4
        %v849 = vrot.slane %v839, 4
        %850 = vrot.lane.b32.xlu0 %v845, 105
        %v851 = vpop.permute.xlu0 %850
        %852 = vrot.lane.b32.xlu0 %v846, 105
        %v853 = vpop.permute.xlu0 %852
        %854 = vrot.lane.b32.xlu0 %v847, 105
        %v855 = vpop.permute.xlu0 %854
        %856 = vrot.lane.b32.xlu0 %v848, 105
        %v857 = vpop.permute.xlu0 %856
        %858 = vrot.lane.b32.xlu0 %v849, 105
        %v859 = vpop.permute.xlu0 %858
        %vm860 = vcmask 859136
        %v861 = vsel %vm860, %v851, %v853
        %v862 = vsel %vm860, %v853, %v855
        %v863 = vsel %vm860, %v855, %v857
        %v864 = vsel %vm860, %v857, %v859
        %vm869 = vcmask 1044484
        %vm870 = vsmask.f32 4352
        %vm871 = vmand %vm869, %vm870
        %v872 = vld [vmem:[#allocation2] sm:$0x10]
        %v873 = vsel %vm871, %v861, %v872
        %874 = vst [vmem:[#allocation2] sm:$0x10] %v873
        %v875 = vld [vmem:[#allocation2 + $0x8] sm:$0x10]
        %v876 = vsel %vm871, %v862, %v875
        %877 = vst [vmem:[#allocation2 + $0x8] sm:$0x10] %v876
        %v878 = vld [vmem:[#allocation2 + $0x10] sm:$0x10]
        %v879 = vsel %vm871, %v863, %v878
        %880 = vst [vmem:[#allocation2 + $0x10] sm:$0x10] %v879
        %v881 = vld [vmem:[#allocation2 + $0x18] sm:$0x10]
        %v882 = vsel %vm871, %v864, %v881
        %883 = vst [vmem:[#allocation2 + $0x18] sm:$0x10] %v882
        %v884 = vld [vmem:[%s164] sm:$0x1f]
        %v886 = vlaneseq
        %v887 = vshrl.u32 %v886, 7
        %v888 = vsub.s32 0, %v887
        %v889 = vrot.slane %v884, %v888
        %v890 = vlaneseq
        %v891 = vshrl.u32 %v890, 7
        %v892 = vsub.s32 1, %v891
        %v893 = vrot.slane %v884, %v892
        %v894 = vlaneseq
        %v895 = vshrl.u32 %v894, 7
        %v896 = vsub.s32 2, %v895
        %v897 = vrot.slane %v884, %v896
        %v898 = vlaneseq
        %v899 = vshrl.u32 %v898, 7
        %v900 = vsub.s32 3, %v899
        %v901 = vrot.slane %v884, %v900
        %v902 = vlaneseq
        %v903 = vshrl.u32 %v902, 7
        %v904 = vsub.s32 4, %v903
        %v905 = vrot.slane %v884, %v904
        %v911 = vpack.c.bf16 %v889, %v889
        %v912 = vpack.c.bf16 %v893, %v893
        %v913 = vpack.c.bf16 %v897, %v897
        %v914 = vpack.c.bf16 %v901, %v901
        %v915 = vpack.c.bf16 %v905, %v905
        %v917 = vshll.u32 %v911, 16
        %v919 = vrot.slane %v917, 4
        %v921 = vshll.u32 %v912, 16
        %v923 = vrot.slane %v921, 4
        %v925 = vshll.u32 %v913, 16
        %v927 = vrot.slane %v925, 4
        %v929 = vshll.u32 %v914, 16
        %v931 = vrot.slane %v929, 4
        %v933 = vshll.u32 %v915, 16
        %v935 = vrot.slane %v933, 4
        %936 = vrot.lane.b32.xlu0 %v919, 104
        %v937 = vpop.permute.xlu0 %936
        %938 = vrot.lane.b32.xlu0 %v923, 104
        %v939 = vpop.permute.xlu0 %938
        %940 = vrot.lane.b32.xlu0 %v927, 104
        %v941 = vpop.permute.xlu0 %940
        %942 = vrot.lane.b32.xlu0 %v931, 104
        %v943 = vpop.permute.xlu0 %942
        %944 = vrot.lane.b32.xlu0 %v935, 104
        %v945 = vpop.permute.xlu0 %944
        %vm946 = vcmask 850944
        %v947 = vsel %vm946, %v937, %v939
        %v948 = vsel %vm946, %v939, %v941
        %v949 = vsel %vm946, %v941, %v943
        %v950 = vsel %vm946, %v943, %v945
        %vm955 = vsmask.f32 7954
        %vm956 = vmand %vm869, %vm955
        %v957 = vld [vmem:[#allocation2] sm:$0x10]
        %v958 = vsel %vm956, %v947, %v957
        %959 = vst [vmem:[#allocation2] sm:$0x10] %v958
        %v960 = vld [vmem:[#allocation2 + $0x8] sm:$0x10]
        %v961 = vsel %vm956, %v948, %v960
        %962 = vst [vmem:[#allocation2 + $0x8] sm:$0x10] %v961
        %v963 = vld [vmem:[#allocation2 + $0x10] sm:$0x10]
        %v964 = vsel %vm956, %v949, %v963
        %965 = vst [vmem:[#allocation2 + $0x10] sm:$0x10] %v964
        %v966 = vld [vmem:[#allocation2 + $0x18] sm:$0x10]
        %v967 = vsel %vm956, %v950, %v966
        %968 = vst [vmem:[#allocation2 + $0x18] sm:$0x10] %v967
        %v969 = vld [vmem:[%s164] sm:$0x1f]
        %v971 = vlaneseq
        %v972 = vshrl.u32 %v971, 7
        %v973 = vsub.s32 0, %v972
        %v974 = vrot.slane %v969, %v973
        %v975 = vlaneseq
        %v976 = vshrl.u32 %v975, 7
        %v977 = vsub.s32 1, %v976
        %v978 = vrot.slane %v969, %v977
        %v979 = vlaneseq
        %v980 = vshrl.u32 %v979, 7
        %v981 = vsub.s32 2, %v980
        %v982 = vrot.slane %v969, %v981
        %v983 = vlaneseq
        %v984 = vshrl.u32 %v983, 7
        %v985 = vsub.s32 3, %v984
        %v986 = vrot.slane %v969, %v985
        %v987 = vlaneseq
        %v988 = vshrl.u32 %v987, 7
        %v989 = vsub.s32 4, %v988
        %v990 = vrot.slane %v969, %v989
        %v996 = vpack.c.bf16 %v974, %v974
        %v997 = vpack.c.bf16 %v978, %v978
        %v998 = vpack.c.bf16 %v982, %v982
        %v999 = vpack.c.bf16 %v986, %v986
        %v1000 = vpack.c.bf16 %v990, %v990
        %v1006 = vrot.slane %v996, 3
        %v1007 = vrot.slane %v997, 3
        %v1008 = vrot.slane %v998, 3
        %v1009 = vrot.slane %v999, 3
        %v1010 = vrot.slane %v1000, 3
        %1011 = vrot.lane.b32.xlu0 %v1006, 103
        %v1012 = vpop.permute.xlu0 %1011
        %1013 = vrot.lane.b32.xlu0 %v1007, 103
        %v1014 = vpop.permute.xlu0 %1013
        %1015 = vrot.lane.b32.xlu0 %v1008, 103
        %v1016 = vpop.permute.xlu0 %1015
        %1017 = vrot.lane.b32.xlu0 %v1009, 103
        %v1018 = vpop.permute.xlu0 %1017
        %1019 = vrot.lane.b32.xlu0 %v1010, 103
        %v1020 = vpop.permute.xlu0 %1019
        %vm1021 = vcmask 842752
        %v1022 = vsel %vm1021, %v1012, %v1014
        %v1023 = vsel %vm1021, %v1014, %v1016
        %v1024 = vsel %vm1021, %v1016, %v1018
        %v1025 = vsel %vm1021, %v1018, %v1020
        %vm1030 = vcmask 1045509
        %vm1031 = vsmask.f32 5376
        %vm1032 = vmand %vm1030, %vm1031
        %v1033 = vld [vmem:[#allocation2] sm:$0x20]
        %v1034 = vsel %vm1032, %v1022, %v1033
        %1035 = vst [vmem:[#allocation2] sm:$0x20] %v1034
        %v1036 = vld [vmem:[#allocation2 + $0x8] sm:$0x20]
        %v1037 = vsel %vm1032, %v1023, %v1036
        %1038 = vst [vmem:[#allocation2 + $0x8] sm:$0x20] %v1037
        %v1039 = vld [vmem:[#allocation2 + $0x10] sm:$0x20]
        %v1040 = vsel %vm1032, %v1024, %v1039
        %1041 = vst [vmem:[#allocation2 + $0x10] sm:$0x20] %v1040
        %v1042 = vld [vmem:[#allocation2 + $0x18] sm:$0x20]
        %v1043 = vsel %vm1032, %v1025, %v1042
        %1044 = vst [vmem:[#allocation2 + $0x18] sm:$0x20] %v1043
        %v1045 = vld [vmem:[%s164] sm:$0x1f]
        %v1047 = vlaneseq
        %v1048 = vshrl.u32 %v1047, 7
        %v1049 = vsub.s32 0, %v1048
        %v1050 = vrot.slane %v1045, %v1049
        %v1051 = vlaneseq
        %v1052 = vshrl.u32 %v1051, 7
        %v1053 = vsub.s32 1, %v1052
        %v1054 = vrot.slane %v1045, %v1053
        %v1055 = vlaneseq
        %v1056 = vshrl.u32 %v1055, 7
        %v1057 = vsub.s32 2, %v1056
        %v1058 = vrot.slane %v1045, %v1057
        %v1059 = vlaneseq
        %v1060 = vshrl.u32 %v1059, 7
        %v1061 = vsub.s32 3, %v1060
        %v1062 = vrot.slane %v1045, %v1061
        %v1063 = vlaneseq
        %v1064 = vshrl.u32 %v1063, 7
        %v1065 = vsub.s32 4, %v1064
        %v1066 = vrot.slane %v1045, %v1065
        %v1072 = vpack.c.bf16 %v1050, %v1050
        %v1073 = vpack.c.bf16 %v1054, %v1054
        %v1074 = vpack.c.bf16 %v1058, %v1058
        %v1075 = vpack.c.bf16 %v1062, %v1062
        %v1076 = vpack.c.bf16 %v1066, %v1066
        %v1078 = vshll.u32 %v1072, 16
        %v1080 = vrot.slane %v1078, 3
        %v1082 = vshll.u32 %v1073, 16
        %v1084 = vrot.slane %v1082, 3
        %v1086 = vshll.u32 %v1074, 16
        %v1088 = vrot.slane %v1086, 3
        %v1090 = vshll.u32 %v1075, 16
        %v1092 = vrot.slane %v1090, 3
        %v1094 = vshll.u32 %v1076, 16
        %v1096 = vrot.slane %v1094, 3
        %1097 = vrot.lane.b32.xlu0 %v1080, 102
        %v1098 = vpop.permute.xlu0 %1097
        %1099 = vrot.lane.b32.xlu0 %v1084, 102
        %v1100 = vpop.permute.xlu0 %1099
        %1101 = vrot.lane.b32.xlu0 %v1088, 102
        %v1102 = vpop.permute.xlu0 %1101
        %1103 = vrot.lane.b32.xlu0 %v1092, 102
        %v1104 = vpop.permute.xlu0 %1103
        %1105 = vrot.lane.b32.xlu0 %v1096, 102
        %v1106 = vpop.permute.xlu0 %1105
        %vm1107 = vcmask 834560
        %v1108 = vsel %vm1107, %v1098, %v1100
        %v1109 = vsel %vm1107, %v1100, %v1102
        %v1110 = vsel %vm1107, %v1102, %v1104
        %v1111 = vsel %vm1107, %v1104, %v1106
        %vm1116 = vsmask.f32 7958
        %vm1117 = vmand %vm1030, %vm1116
        %v1118 = vld [vmem:[#allocation2] sm:$0x20]
        %v1119 = vsel %vm1117, %v1108, %v1118
        %1120 = vst [vmem:[#allocation2] sm:$0x20] %v1119
        %v1121 = vld [vmem:[#allocation2 + $0x8] sm:$0x20]
        %v1122 = vsel %vm1117, %v1109, %v1121
        %1123 = vst [vmem:[#allocation2 + $0x8] sm:$0x20] %v1122
        %v1124 = vld [vmem:[#allocation2 + $0x10] sm:$0x20]
        %v1125 = vsel %vm1117, %v1110, %v1124
        %1126 = vst [vmem:[#allocation2 + $0x10] sm:$0x20] %v1125
        %v1127 = vld [vmem:[#allocation2 + $0x18] sm:$0x20]
        %v1128 = vsel %vm1117, %v1111, %v1127
        %1129 = vst [vmem:[#allocation2 + $0x18] sm:$0x20] %v1128
        %v1130 = vld [vmem:[%s164] sm:$0x1f]
        %v1132 = vlaneseq
        %v1133 = vshrl.u32 %v1132, 7
        %v1134 = vsub.s32 0, %v1133
        %v1135 = vrot.slane %v1130, %v1134
        %v1136 = vlaneseq
        %v1137 = vshrl.u32 %v1136, 7
        %v1138 = vsub.s32 1, %v1137
        %v1139 = vrot.slane %v1130, %v1138
        %v1140 = vlaneseq
        %v1141 = vshrl.u32 %v1140, 7
        %v1142 = vsub.s32 2, %v1141
        %v1143 = vrot.slane %v1130, %v1142
        %v1144 = vlaneseq
        %v1145 = vshrl.u32 %v1144, 7
        %v1146 = vsub.s32 3, %v1145
        %v1147 = vrot.slane %v1130, %v1146
        %v1148 = vlaneseq
        %v1149 = vshrl.u32 %v1148, 7
        %v1150 = vsub.s32 4, %v1149
        %v1151 = vrot.slane %v1130, %v1150
        %v1157 = vpack.c.bf16 %v1135, %v1135
        %v1158 = vpack.c.bf16 %v1139, %v1139
        %v1159 = vpack.c.bf16 %v1143, %v1143
        %v1160 = vpack.c.bf16 %v1147, %v1147
        %v1161 = vpack.c.bf16 %v1151, %v1151
        %v1167 = vrot.slane %v1157, 2
        %v1168 = vrot.slane %v1158, 2
        %v1169 = vrot.slane %v1159, 2
        %v1170 = vrot.slane %v1160, 2
        %v1171 = vrot.slane %v1161, 2
        %1172 = vrot.lane.b32.xlu0 %v1167, 101
        %v1173 = vpop.permute.xlu0 %1172
        %1174 = vrot.lane.b32.xlu0 %v1168, 101
        %v1175 = vpop.permute.xlu0 %1174
        %1176 = vrot.lane.b32.xlu0 %v1169, 101
        %v1177 = vpop.permute.xlu0 %1176
        %1178 = vrot.lane.b32.xlu0 %v1170, 101
        %v1179 = vpop.permute.xlu0 %1178
        %1180 = vrot.lane.b32.xlu0 %v1171, 101
        %v1181 = vpop.permute.xlu0 %1180
        %vm1182 = vcmask 826368
        %v1183 = vsel %vm1182, %v1173, %v1175
        %v1184 = vsel %vm1182, %v1175, %v1177
        %v1185 = vsel %vm1182, %v1177, %v1179
        %v1186 = vsel %vm1182, %v1179, %v1181
        %vm1191 = vcmask 1046534
        %vm1192 = vsmask.f32 6400
        %vm1193 = vmand %vm1191, %vm1192
        %v1194 = vld [vmem:[#allocation2] sm:$0x40]
        %v1195 = vsel %vm1193, %v1183, %v1194
        %1196 = vst [vmem:[#allocation2] sm:$0x40] %v1195
        %v1197 = vld [vmem:[#allocation2 + $0x8] sm:$0x40]
        %v1198 = vsel %vm1193, %v1184, %v1197
        %1199 = vst [vmem:[#allocation2 + $0x8] sm:$0x40] %v1198
        %v1200 = vld [vmem:[#allocation2 + $0x10] sm:$0x40]
        %v1201 = vsel %vm1193, %v1185, %v1200
        %1202 = vst [vmem:[#allocation2 + $0x10] sm:$0x40] %v1201
        %v1203 = vld [vmem:[#allocation2 + $0x18] sm:$0x40]
        %v1204 = vsel %vm1193, %v1186, %v1203
        %1205 = vst [vmem:[#allocation2 + $0x18] sm:$0x40] %v1204
        %v1206 = vld [vmem:[%s164] sm:$0x1f]
        %v1208 = vlaneseq
        %v1209 = vshrl.u32 %v1208, 7
        %v1210 = vsub.s32 0, %v1209
        %v1211 = vrot.slane %v1206, %v1210
        %v1212 = vlaneseq
        %v1213 = vshrl.u32 %v1212, 7
        %v1214 = vsub.s32 1, %v1213
        %v1215 = vrot.slane %v1206, %v1214
        %v1216 = vlaneseq
        %v1217 = vshrl.u32 %v1216, 7
        %v1218 = vsub.s32 2, %v1217
        %v1219 = vrot.slane %v1206, %v1218
        %v1220 = vlaneseq
        %v1221 = vshrl.u32 %v1220, 7
        %v1222 = vsub.s32 3, %v1221
        %v1223 = vrot.slane %v1206, %v1222
        %v1224 = vlaneseq
        %v1225 = vshrl.u32 %v1224, 7
        %v1226 = vsub.s32 4, %v1225
        %v1227 = vrot.slane %v1206, %v1226
        %v1233 = vpack.c.bf16 %v1211, %v1211
        %v1234 = vpack.c.bf16 %v1215, %v1215
        %v1235 = vpack.c.bf16 %v1219, %v1219
        %v1236 = vpack.c.bf16 %v1223, %v1223
        %v1237 = vpack.c.bf16 %v1227, %v1227
        %v1239 = vshll.u32 %v1233, 16
        %v1241 = vrot.slane %v1239, 2
        %v1243 = vshll.u32 %v1234, 16
        %v1245 = vrot.slane %v1243, 2
        %v1247 = vshll.u32 %v1235, 16
        %v1249 = vrot.slane %v1247, 2
        %v1251 = vshll.u32 %v1236, 16
        %v1253 = vrot.slane %v1251, 2
        %v1255 = vshll.u32 %v1237, 16
        %v1257 = vrot.slane %v1255, 2
        %1258 = vrot.lane.b32.xlu0 %v1241, 100
        %v1259 = vpop.permute.xlu0 %1258
        %1260 = vrot.lane.b32.xlu0 %v1245, 100
        %v1261 = vpop.permute.xlu0 %1260
        %1262 = vrot.lane.b32.xlu0 %v1249, 100
        %v1263 = vpop.permute.xlu0 %1262
        %1264 = vrot.lane.b32.xlu0 %v1253, 100
        %v1265 = vpop.permute.xlu0 %1264
        %1266 = vrot.lane.b32.xlu0 %v1257, 100
        %v1267 = vpop.permute.xlu0 %1266
        %vm1268 = vcmask 818176
        %v1269 = vsel %vm1268, %v1259, %v1261
        %v1270 = vsel %vm1268, %v1261, %v1263
        %v1271 = vsel %vm1268, %v1263, %v1265
        %v1272 = vsel %vm1268, %v1265, %v1267
        %vm1277 = vsmask.f32 7962
        %vm1278 = vmand %vm1191, %vm1277
        %v1279 = vld [vmem:[#allocation2] sm:$0x40]
        %v1280 = vsel %vm1278, %v1269, %v1279
        %1281 = vst [vmem:[#allocation2] sm:$0x40] %v1280
        %v1282 = vld [vmem:[#allocation2 + $0x8] sm:$0x40]
        %v1283 = vsel %vm1278, %v1270, %v1282
        %1284 = vst [vmem:[#allocation2 + $0x8] sm:$0x40] %v1283
        %v1285 = vld [vmem:[#allocation2 + $0x10] sm:$0x40]
        %v1286 = vsel %vm1278, %v1271, %v1285
        %1287 = vst [vmem:[#allocation2 + $0x10] sm:$0x40] %v1286
        %v1288 = vld [vmem:[#allocation2 + $0x18] sm:$0x40]
        %v1289 = vsel %vm1278, %v1272, %v1288
        %1290 = vst [vmem:[#allocation2 + $0x18] sm:$0x40] %v1289
        %v1291 = vld [vmem:[%s164] sm:$0x1f]
        %v1293 = vlaneseq
        %v1294 = vshrl.u32 %v1293, 7
        %v1295 = vsub.s32 0, %v1294
        %v1296 = vrot.slane %v1291, %v1295
        %v1297 = vlaneseq
        %v1298 = vshrl.u32 %v1297, 7
        %v1299 = vsub.s32 1, %v1298
        %v1300 = vrot.slane %v1291, %v1299
        %v1301 = vlaneseq
        %v1302 = vshrl.u32 %v1301, 7
        %v1303 = vsub.s32 2, %v1302
        %v1304 = vrot.slane %v1291, %v1303
        %v1305 = vlaneseq
        %v1306 = vshrl.u32 %v1305, 7
        %v1307 = vsub.s32 3, %v1306
        %v1308 = vrot.slane %v1291, %v1307
        %v1309 = vlaneseq
        %v1310 = vshrl.u32 %v1309, 7
        %v1311 = vsub.s32 4, %v1310
        %v1312 = vrot.slane %v1291, %v1311
        %v1318 = vpack.c.bf16 %v1296, %v1296
        %v1319 = vpack.c.bf16 %v1300, %v1300
        %v1320 = vpack.c.bf16 %v1304, %v1304
        %v1321 = vpack.c.bf16 %v1308, %v1308
        %v1322 = vpack.c.bf16 %v1312, %v1312
        %v1328 = vrot.slane %v1318, 1
        %v1329 = vrot.slane %v1319, 1
        %v1330 = vrot.slane %v1320, 1
        %v1331 = vrot.slane %v1321, 1
        %v1332 = vrot.slane %v1322, 1
        %1333 = vrot.lane.b32.xlu0 %v1328, 84
        %v1334 = vpop.permute.xlu0 %1333
        %1335 = vrot.lane.b32.xlu0 %v1329, 84
        %v1336 = vpop.permute.xlu0 %1335
        %1337 = vrot.lane.b32.xlu0 %v1330, 84
        %v1338 = vpop.permute.xlu0 %1337
        %1339 = vrot.lane.b32.xlu0 %v1331, 84
        %v1340 = vpop.permute.xlu0 %1339
        %1341 = vrot.lane.b32.xlu0 %v1332, 84
        %v1342 = vpop.permute.xlu0 %1341
        %vm1343 = vcmask 687104
        %v1344 = vsel %vm1343, %v1334, %v1336
        %v1345 = vsel %vm1343, %v1336, %v1338
        %v1346 = vsel %vm1343, %v1338, %v1340
        %v1347 = vsel %vm1343, %v1340, %v1342
        %vm1352 = vcmask 1047559
        %vm1353 = vsmask.f32 7424
        %vm1354 = vmand %vm1352, %vm1353
        %v1355 = vld [vmem:[#allocation2] sm:$0x80]
        %v1356 = vsel %vm1354, %v1344, %v1355
        %1357 = vst [vmem:[#allocation2] sm:$0x80] %v1356
        %v1358 = vld [vmem:[#allocation2 + $0x8] sm:$0x80]
        %v1359 = vsel %vm1354, %v1345, %v1358
        %1360 = vst [vmem:[#allocation2 + $0x8] sm:$0x80] %v1359
        %v1361 = vld [vmem:[#allocation2 + $0x10] sm:$0x80]
        %v1362 = vsel %vm1354, %v1346, %v1361
        %1363 = vst [vmem:[#allocation2 + $0x10] sm:$0x80] %v1362
        %v1364 = vld [vmem:[#allocation2 + $0x18] sm:$0x80]
        %v1365 = vsel %vm1354, %v1347, %v1364
        %1366 = vst [vmem:[#allocation2 + $0x18] sm:$0x80] %v1365
        %v1367 = vld [vmem:[%s164] sm:$0x1f]
        %v1369 = vlaneseq
        %v1370 = vshrl.u32 %v1369, 7
        %v1371 = vsub.s32 0, %v1370
        %v1372 = vrot.slane %v1367, %v1371
        %v1373 = vlaneseq
        %v1374 = vshrl.u32 %v1373, 7
        %v1375 = vsub.s32 1, %v1374
        %v1376 = vrot.slane %v1367, %v1375
        %v1377 = vlaneseq
        %v1378 = vshrl.u32 %v1377, 7
        %v1379 = vsub.s32 2, %v1378
        %v1380 = vrot.slane %v1367, %v1379
        %v1381 = vlaneseq
        %v1382 = vshrl.u32 %v1381, 7
        %v1383 = vsub.s32 3, %v1382
        %v1384 = vrot.slane %v1367, %v1383
        %v1385 = vlaneseq
        %v1386 = vshrl.u32 %v1385, 7
        %v1387 = vsub.s32 4, %v1386
        %v1388 = vrot.slane %v1367, %v1387
        %v1394 = vpack.c.bf16 %v1372, %v1372
        %v1395 = vpack.c.bf16 %v1376, %v1376
        %v1396 = vpack.c.bf16 %v1380, %v1380
        %v1397 = vpack.c.bf16 %v1384, %v1384
        %v1398 = vpack.c.bf16 %v1388, %v1388
        %v1400 = vshll.u32 %v1394, 16
        %v1402 = vrot.slane %v1400, 1
        %v1404 = vshll.u32 %v1395, 16
        %v1406 = vrot.slane %v1404, 1
        %v1408 = vshll.u32 %v1396, 16
        %v1410 = vrot.slane %v1408, 1
        %v1412 = vshll.u32 %v1397, 16
        %v1414 = vrot.slane %v1412, 1
        %v1416 = vshll.u32 %v1398, 16
        %v1418 = vrot.slane %v1416, 1
        %1419 = vrot.lane.b32.xlu0 %v1402, 83
        %v1420 = vpop.permute.xlu0 %1419
        %1421 = vrot.lane.b32.xlu0 %v1406, 83
        %v1422 = vpop.permute.xlu0 %1421
        %1423 = vrot.lane.b32.xlu0 %v1410, 83
        %v1424 = vpop.permute.xlu0 %1423
        %1425 = vrot.lane.b32.xlu0 %v1414, 83
        %v1426 = vpop.permute.xlu0 %1425
        %1427 = vrot.lane.b32.xlu0 %v1418, 83
        %v1428 = vpop.permute.xlu0 %1427
        %vm1429 = vcmask 678912
        %v1430 = vsel %vm1429, %v1420, %v1422
        %v1431 = vsel %vm1429, %v1422, %v1424
        %v1432 = vsel %vm1429, %v1424, %v1426
        %v1433 = vsel %vm1429, %v1426, %v1428
        %vm1438 = vsmask.f32 7966
        %vm1439 = vmand %vm1352, %vm1438
        %v1440 = vld [vmem:[#allocation2] sm:$0x80]
        %v1441 = vsel %vm1439, %v1430, %v1440
        %1442 = vst [vmem:[#allocation2] sm:$0x80] %v1441
        %v1443 = vld [vmem:[#allocation2 + $0x8] sm:$0x80]
        %v1444 = vsel %vm1439, %v1431, %v1443
        %1445 = vst [vmem:[#allocation2 + $0x8] sm:$0x80] %v1444
        %v1446 = vld [vmem:[#allocation2 + $0x10] sm:$0x80]
        %v1447 = vsel %vm1439, %v1432, %v1446
        %1448 = vst [vmem:[#allocation2 + $0x10] sm:$0x80] %v1447
        %v1449 = vld [vmem:[#allocation2 + $0x18] sm:$0x80]
        %v1450 = vsel %vm1439, %v1433, %v1449
        %1451 = vst [vmem:[#allocation2 + $0x18] sm:$0x80] %v1450
        %v1452 = vld [vmem:[%s164] sm:$0x1f]
        %v1454 = vlaneseq
        %v1455 = vshrl.u32 %v1454, 7
        %v1456 = vsub.s32 0, %v1455
        %v1457 = vrot.slane %v1452, %v1456
        %v1458 = vlaneseq
        %v1459 = vshrl.u32 %v1458, 7
        %v1460 = vsub.s32 1, %v1459
        %v1461 = vrot.slane %v1452, %v1460
        %v1462 = vlaneseq
        %v1463 = vshrl.u32 %v1462, 7
        %v1464 = vsub.s32 2, %v1463
        %v1465 = vrot.slane %v1452, %v1464
        %v1466 = vlaneseq
        %v1467 = vshrl.u32 %v1466, 7
        %v1468 = vsub.s32 3, %v1467
        %v1469 = vrot.slane %v1452, %v1468
        %v1470 = vlaneseq
        %v1471 = vshrl.u32 %v1470, 7
        %v1472 = vsub.s32 4, %v1471
        %v1473 = vrot.slane %v1452, %v1472
        %v1479 = vpack.c.bf16 %v1457, %v1457
        %v1480 = vpack.c.bf16 %v1461, %v1461
        %v1481 = vpack.c.bf16 %v1465, %v1465
        %v1482 = vpack.c.bf16 %v1469, %v1469
        %v1483 = vpack.c.bf16 %v1473, %v1473
        %1489 = vrot.lane.b32.xlu0 %v1479, 82
        %v1490 = vpop.permute.xlu0 %1489
        %1491 = vrot.lane.b32.xlu0 %v1480, 82
        %v1492 = vpop.permute.xlu0 %1491
        %1493 = vrot.lane.b32.xlu0 %v1481, 82
        %v1494 = vpop.permute.xlu0 %1493
        %1495 = vrot.lane.b32.xlu0 %v1482, 82
        %v1496 = vpop.permute.xlu0 %1495
        %1497 = vrot.lane.b32.xlu0 %v1483, 82
        %v1498 = vpop.permute.xlu0 %1497
        %vm1499 = vcmask 670720
        %v1500 = vsel %vm1499, %v1490, %v1492
        %v1501 = vsel %vm1499, %v1492, %v1494
        %v1502 = vsel %vm1499, %v1494, %v1496
        %v1503 = vsel %vm1499, %v1496, %v1498
        %v1508 = vld [vmem:[#allocation2 + $0x20] sm:$0x1]
        %v1509 = vsel %vm232, %v1500, %v1508
        %1510 = vst [vmem:[#allocation2 + $0x20] sm:$0x1] %v1509
        %v1511 = vld [vmem:[#allocation2 + $0x28] sm:$0x1]
        %v1512 = vsel %vm232, %v1501, %v1511
        %1513 = vst [vmem:[#allocation2 + $0x28] sm:$0x1] %v1512
        %v1514 = vld [vmem:[#allocation2 + $0x30] sm:$0x1]
        %v1515 = vsel %vm232, %v1502, %v1514
        %1516 = vst [vmem:[#allocation2 + $0x30] sm:$0x1] %v1515
        %v1517 = vld [vmem:[#allocation2 + $0x38] sm:$0x1]
        %v1518 = vsel %vm232, %v1503, %v1517
        %1519 = vst [vmem:[#allocation2 + $0x38] sm:$0x1] %v1518
        %v1520 = vld [vmem:[%s164] sm:$0x1f]
        %v1522 = vlaneseq
        %v1523 = vshrl.u32 %v1522, 7
        %v1524 = vsub.s32 0, %v1523
        %v1525 = vrot.slane %v1520, %v1524
        %v1526 = vlaneseq
        %v1527 = vshrl.u32 %v1526, 7
        %v1528 = vsub.s32 1, %v1527
        %v1529 = vrot.slane %v1520, %v1528
        %v1530 = vlaneseq
        %v1531 = vshrl.u32 %v1530, 7
        %v1532 = vsub.s32 2, %v1531
        %v1533 = vrot.slane %v1520, %v1532
        %v1534 = vlaneseq
        %v1535 = vshrl.u32 %v1534, 7
        %v1536 = vsub.s32 3, %v1535
        %v1537 = vrot.slane %v1520, %v1536
        %v1538 = vlaneseq
        %v1539 = vshrl.u32 %v1538, 7
        %v1540 = vsub.s32 4, %v1539
        %v1541 = vrot.slane %v1520, %v1540
        %v1547 = vpack.c.bf16 %v1525, %v1525
        %v1548 = vpack.c.bf16 %v1529, %v1529
        %v1549 = vpack.c.bf16 %v1533, %v1533
        %v1550 = vpack.c.bf16 %v1537, %v1537
        %v1551 = vpack.c.bf16 %v1541, %v1541
        %v1553 = vshll.u32 %v1547, 16
        %v1556 = vshll.u32 %v1548, 16
        %v1559 = vshll.u32 %v1549, 16
        %v1562 = vshll.u32 %v1550, 16
        %v1565 = vshll.u32 %v1551, 16
        %1567 = vrot.lane.b32.xlu0 %v1553, 81
        %v1568 = vpop.permute.xlu0 %1567
        %1569 = vrot.lane.b32.xlu0 %v1556, 81
        %v1570 = vpop.permute.xlu0 %1569
        %1571 = vrot.lane.b32.xlu0 %v1559, 81
        %v1572 = vpop.permute.xlu0 %1571
        %1573 = vrot.lane.b32.xlu0 %v1562, 81
        %v1574 = vpop.permute.xlu0 %1573
        %1575 = vrot.lane.b32.xlu0 %v1565, 81
        %v1576 = vpop.permute.xlu0 %1575
        %vm1577 = vcmask 662528
        %v1578 = vsel %vm1577, %v1568, %v1570
        %v1579 = vsel %vm1577, %v1570, %v1572
        %v1580 = vsel %vm1577, %v1572, %v1574
        %v1581 = vsel %vm1577, %v1574, %v1576
        %v1586 = vld [vmem:[#allocation2 + $0x20] sm:$0x1]
        %v1587 = vsel %vm312, %v1578, %v1586
        %1588 = vst [vmem:[#allocation2 + $0x20] sm:$0x1] %v1587
        %v1589 = vld [vmem:[#allocation2 + $0x28] sm:$0x1]
        %v1590 = vsel %vm312, %v1579, %v1589
        %1591 = vst [vmem:[#allocation2 + $0x28] sm:$0x1] %v1590
        %v1592 = vld [vmem:[#allocation2 + $0x30] sm:$0x1]
        %v1593 = vsel %vm312, %v1580, %v1592
        %1594 = vst [vmem:[#allocation2 + $0x30] sm:$0x1] %v1593
        %v1595 = vld [vmem:[#allocation2 + $0x38] sm:$0x1]
        %v1596 = vsel %vm312, %v1581, %v1595
        %1597 = vst [vmem:[#allocation2 + $0x38] sm:$0x1] %v1596
        %v1598 = vld [vmem:[%s164] sm:$0x1f]
        %v1600 = vlaneseq
        %v1601 = vshrl.u32 %v1600, 7
        %v1602 = vsub.s32 0, %v1601
        %v1603 = vrot.slane %v1598, %v1602
        %v1604 = vlaneseq
        %v1605 = vshrl.u32 %v1604, 7
        %v1606 = vsub.s32 1, %v1605
        %v1607 = vrot.slane %v1598, %v1606
        %v1608 = vlaneseq
        %v1609 = vshrl.u32 %v1608, 7
        %v1610 = vsub.s32 2, %v1609
        %v1611 = vrot.slane %v1598, %v1610
        %v1612 = vlaneseq
        %v1613 = vshrl.u32 %v1612, 7
        %v1614 = vsub.s32 3, %v1613
        %v1615 = vrot.slane %v1598, %v1614
        %v1616 = vlaneseq
        %v1617 = vshrl.u32 %v1616, 7
        %v1618 = vsub.s32 4, %v1617
        %v1619 = vrot.slane %v1598, %v1618
        %v1625 = vpack.c.bf16 %v1603, %v1603
        %v1626 = vpack.c.bf16 %v1607, %v1607
        %v1627 = vpack.c.bf16 %v1611, %v1611
        %v1628 = vpack.c.bf16 %v1615, %v1615
        %v1629 = vpack.c.bf16 %v1619, %v1619
        %v1635 = vrot.slane %v1625, 7
        %v1636 = vrot.slane %v1626, 7
        %v1637 = vrot.slane %v1627, 7
        %v1638 = vrot.slane %v1628, 7
        %v1639 = vrot.slane %v1629, 7
        %1640 = vrot.lane.b32.xlu0 %v1635, 80
        %v1641 = vpop.permute.xlu0 %1640
        %1642 = vrot.lane.b32.xlu0 %v1636, 80
        %v1643 = vpop.permute.xlu0 %1642
        %1644 = vrot.lane.b32.xlu0 %v1637, 80
        %v1645 = vpop.permute.xlu0 %1644
        %1646 = vrot.lane.b32.xlu0 %v1638, 80
        %v1647 = vpop.permute.xlu0 %1646
        %1648 = vrot.lane.b32.xlu0 %v1639, 80
        %v1649 = vpop.permute.xlu0 %1648
        %vm1650 = vcmask 654336
        %v1651 = vsel %vm1650, %v1641, %v1643
        %v1652 = vsel %vm1650, %v1643, %v1645
        %v1653 = vsel %vm1650, %v1645, %v1647
        %v1654 = vsel %vm1650, %v1647, %v1649
        %v1659 = vld [vmem:[#allocation2 + $0x20] sm:$0x2]
        %v1660 = vsel %vm388, %v1651, %v1659
        %1661 = vst [vmem:[#allocation2 + $0x20] sm:$0x2] %v1660
        %v1662 = vld [vmem:[#allocation2 + $0x28] sm:$0x2]
        %v1663 = vsel %vm388, %v1652, %v1662
        %1664 = vst [vmem:[#allocation2 + $0x28] sm:$0x2] %v1663
        %v1665 = vld [vmem:[#allocation2 + $0x30] sm:$0x2]
        %v1666 = vsel %vm388, %v1653, %v1665
        %1667 = vst [vmem:[#allocation2 + $0x30] sm:$0x2] %v1666
        %v1668 = vld [vmem:[#allocation2 + $0x38] sm:$0x2]
        %v1669 = vsel %vm388, %v1654, %v1668
        %1670 = vst [vmem:[#allocation2 + $0x38] sm:$0x2] %v1669
        %v1671 = vld [vmem:[%s164] sm:$0x1f]
        %v1673 = vlaneseq
        %v1674 = vshrl.u32 %v1673, 7
        %v1675 = vsub.s32 0, %v1674
        %v1676 = vrot.slane %v1671, %v1675
        %v1677 = vlaneseq
        %v1678 = vshrl.u32 %v1677, 7
        %v1679 = vsub.s32 1, %v1678
        %v1680 = vrot.slane %v1671, %v1679
        %v1681 = vlaneseq
        %v1682 = vshrl.u32 %v1681, 7
        %v1683 = vsub.s32 2, %v1682
        %v1684 = vrot.slane %v1671, %v1683
        %v1685 = vlaneseq
        %v1686 = vshrl.u32 %v1685, 7
        %v1687 = vsub.s32 3, %v1686
        %v1688 = vrot.slane %v1671, %v1687
        %v1689 = vlaneseq
        %v1690 = vshrl.u32 %v1689, 7
        %v1691 = vsub.s32 4, %v1690
        %v1692 = vrot.slane %v1671, %v1691
        %v1698 = vpack.c.bf16 %v1676, %v1676
        %v1699 = vpack.c.bf16 %v1680, %v1680
        %v1700 = vpack.c.bf16 %v1684, %v1684
        %v1701 = vpack.c.bf16 %v1688, %v1688
        %v1702 = vpack.c.bf16 %v1692, %v1692
        %v1704 = vshll.u32 %v1698, 16
        %v1706 = vrot.slane %v1704, 7
        %v1708 = vshll.u32 %v1699, 16
        %v1710 = vrot.slane %v1708, 7
        %v1712 = vshll.u32 %v1700, 16
        %v1714 = vrot.slane %v1712, 7
        %v1716 = vshll.u32 %v1701, 16
        %v1718 = vrot.slane %v1716, 7
        %v1720 = vshll.u32 %v1702, 16
        %v1722 = vrot.slane %v1720, 7
        %1723 = vrot.lane.b32.xlu0 %v1706, 79
        %v1724 = vpop.permute.xlu0 %1723
        %1725 = vrot.lane.b32.xlu0 %v1710, 79
        %v1726 = vpop.permute.xlu0 %1725
        %1727 = vrot.lane.b32.xlu0 %v1714, 79
        %v1728 = vpop.permute.xlu0 %1727
        %1729 = vrot.lane.b32.xlu0 %v1718, 79
        %v1730 = vpop.permute.xlu0 %1729
        %1731 = vrot.lane.b32.xlu0 %v1722, 79
        %v1732 = vpop.permute.xlu0 %1731
        %vm1733 = vcmask 646144
        %v1734 = vsel %vm1733, %v1724, %v1726
        %v1735 = vsel %vm1733, %v1726, %v1728
        %v1736 = vsel %vm1733, %v1728, %v1730
        %v1737 = vsel %vm1733, %v1730, %v1732
        %v1742 = vld [vmem:[#allocation2 + $0x20] sm:$0x2]
        %v1743 = vsel %vm473, %v1734, %v1742
        %1744 = vst [vmem:[#allocation2 + $0x20] sm:$0x2] %v1743
        %v1745 = vld [vmem:[#allocation2 + $0x28] sm:$0x2]
        %v1746 = vsel %vm473, %v1735, %v1745
        %1747 = vst [vmem:[#allocation2 + $0x28] sm:$0x2] %v1746
        %v1748 = vld [vmem:[#allocation2 + $0x30] sm:$0x2]
        %v1749 = vsel %vm473, %v1736, %v1748
        %1750 = vst [vmem:[#allocation2 + $0x30] sm:$0x2] %v1749
        %v1751 = vld [vmem:[#allocation2 + $0x38] sm:$0x2]
        %v1752 = vsel %vm473, %v1737, %v1751
        %1753 = vst [vmem:[#allocation2 + $0x38] sm:$0x2] %v1752
        %v1754 = vld [vmem:[%s164] sm:$0x1f]
        %v1756 = vlaneseq
        %v1757 = vshrl.u32 %v1756, 7
        %v1758 = vsub.s32 0, %v1757
        %v1759 = vrot.slane %v1754, %v1758
        %v1760 = vlaneseq
        %v1761 = vshrl.u32 %v1760, 7
        %v1762 = vsub.s32 1, %v1761
        %v1763 = vrot.slane %v1754, %v1762
        %v1764 = vlaneseq
        %v1765 = vshrl.u32 %v1764, 7
        %v1766 = vsub.s32 2, %v1765
        %v1767 = vrot.slane %v1754, %v1766
        %v1768 = vlaneseq
        %v1769 = vshrl.u32 %v1768, 7
        %v1770 = vsub.s32 3, %v1769
        %v1771 = vrot.slane %v1754, %v1770
        %v1772 = vlaneseq
        %v1773 = vshrl.u32 %v1772, 7
        %v1774 = vsub.s32 4, %v1773
        %v1775 = vrot.slane %v1754, %v1774
        %v1781 = vpack.c.bf16 %v1759, %v1759
        %v1782 = vpack.c.bf16 %v1763, %v1763
        %v1783 = vpack.c.bf16 %v1767, %v1767
        %v1784 = vpack.c.bf16 %v1771, %v1771
        %v1785 = vpack.c.bf16 %v1775, %v1775
        %v1791 = vrot.slane %v1781, 6
        %v1792 = vrot.slane %v1782, 6
        %v1793 = vrot.slane %v1783, 6
        %v1794 = vrot.slane %v1784, 6
        %v1795 = vrot.slane %v1785, 6
        %1796 = vrot.lane.b32.xlu0 %v1791, 78
        %v1797 = vpop.permute.xlu0 %1796
        %1798 = vrot.lane.b32.xlu0 %v1792, 78
        %v1799 = vpop.permute.xlu0 %1798
        %1800 = vrot.lane.b32.xlu0 %v1793, 78
        %v1801 = vpop.permute.xlu0 %1800
        %1802 = vrot.lane.b32.xlu0 %v1794, 78
        %v1803 = vpop.permute.xlu0 %1802
        %1804 = vrot.lane.b32.xlu0 %v1795, 78
        %v1805 = vpop.permute.xlu0 %1804
        %vm1806 = vcmask 637952
        %v1807 = vsel %vm1806, %v1797, %v1799
        %v1808 = vsel %vm1806, %v1799, %v1801
        %v1809 = vsel %vm1806, %v1801, %v1803
        %v1810 = vsel %vm1806, %v1803, %v1805
        %v1815 = vld [vmem:[#allocation2 + $0x20] sm:$0x4]
        %v1816 = vsel %vm549, %v1807, %v1815
        %1817 = vst [vmem:[#allocation2 + $0x20] sm:$0x4] %v1816
        %v1818 = vld [vmem:[#allocation2 + $0x28] sm:$0x4]
        %v1819 = vsel %vm549, %v1808, %v1818
        %1820 = vst [vmem:[#allocation2 + $0x28] sm:$0x4] %v1819
        %v1821 = vld [vmem:[#allocation2 + $0x30] sm:$0x4]
        %v1822 = vsel %vm549, %v1809, %v1821
        %1823 = vst [vmem:[#allocation2 + $0x30] sm:$0x4] %v1822
        %v1824 = vld [vmem:[#allocation2 + $0x38] sm:$0x4]
        %v1825 = vsel %vm549, %v1810, %v1824
        %1826 = vst [vmem:[#allocation2 + $0x38] sm:$0x4] %v1825
        %v1827 = vld [vmem:[%s164] sm:$0x1f]
        %v1829 = vlaneseq
        %v1830 = vshrl.u32 %v1829, 7
        %v1831 = vsub.s32 0, %v1830
        %v1832 = vrot.slane %v1827, %v1831
        %v1833 = vlaneseq
        %v1834 = vshrl.u32 %v1833, 7
        %v1835 = vsub.s32 1, %v1834
        %v1836 = vrot.slane %v1827, %v1835
        %v1837 = vlaneseq
        %v1838 = vshrl.u32 %v1837, 7
        %v1839 = vsub.s32 2, %v1838
        %v1840 = vrot.slane %v1827, %v1839
        %v1841 = vlaneseq
        %v1842 = vshrl.u32 %v1841, 7
        %v1843 = vsub.s32 3, %v1842
        %v1844 = vrot.slane %v1827, %v1843
        %v1845 = vlaneseq
        %v1846 = vshrl.u32 %v1845, 7
        %v1847 = vsub.s32 4, %v1846
        %v1848 = vrot.slane %v1827, %v1847
        %v1854 = vpack.c.bf16 %v1832, %v1832
        %v1855 = vpack.c.bf16 %v1836, %v1836
        %v1856 = vpack.c.bf16 %v1840, %v1840
        %v1857 = vpack.c.bf16 %v1844, %v1844
        %v1858 = vpack.c.bf16 %v1848, %v1848
        %v1860 = vshll.u32 %v1854, 16
        %v1862 = vrot.slane %v1860, 6
        %v1864 = vshll.u32 %v1855, 16
        %v1866 = vrot.slane %v1864, 6
        %v1868 = vshll.u32 %v1856, 16
        %v1870 = vrot.slane %v1868, 6
        %v1872 = vshll.u32 %v1857, 16
        %v1874 = vrot.slane %v1872, 6
        %v1876 = vshll.u32 %v1858, 16
        %v1878 = vrot.slane %v1876, 6
        %1879 = vrot.lane.b32.xlu0 %v1862, 62
        %v1880 = vpop.permute.xlu0 %1879
        %1881 = vrot.lane.b32.xlu0 %v1866, 62
        %v1882 = vpop.permute.xlu0 %1881
        %1883 = vrot.lane.b32.xlu0 %v1870, 62
        %v1884 = vpop.permute.xlu0 %1883
        %1885 = vrot.lane.b32.xlu0 %v1874, 62
        %v1886 = vpop.permute.xlu0 %1885
        %1887 = vrot.lane.b32.xlu0 %v1878, 62
        %v1888 = vpop.permute.xlu0 %1887
        %vm1889 = vcmask 506880
        %v1890 = vsel %vm1889, %v1880, %v1882
        %v1891 = vsel %vm1889, %v1882, %v1884
        %v1892 = vsel %vm1889, %v1884, %v1886
        %v1893 = vsel %vm1889, %v1886, %v1888
        %v1898 = vld [vmem:[#allocation2 + $0x20] sm:$0x4]
        %v1899 = vsel %vm634, %v1890, %v1898
        %1900 = vst [vmem:[#allocation2 + $0x20] sm:$0x4] %v1899
        %v1901 = vld [vmem:[#allocation2 + $0x28] sm:$0x4]
        %v1902 = vsel %vm634, %v1891, %v1901
        %1903 = vst [vmem:[#allocation2 + $0x28] sm:$0x4] %v1902
        %v1904 = vld [vmem:[#allocation2 + $0x30] sm:$0x4]
        %v1905 = vsel %vm634, %v1892, %v1904
        %1906 = vst [vmem:[#allocation2 + $0x30] sm:$0x4] %v1905
        %v1907 = vld [vmem:[#allocation2 + $0x38] sm:$0x4]
        %v1908 = vsel %vm634, %v1893, %v1907
        %1909 = vst [vmem:[#allocation2 + $0x38] sm:$0x4] %v1908
        %v1910 = vld [vmem:[%s164] sm:$0x1f]
        %v1912 = vlaneseq
        %v1913 = vshrl.u32 %v1912, 7
        %v1914 = vsub.s32 0, %v1913
        %v1915 = vrot.slane %v1910, %v1914
        %v1916 = vlaneseq
        %v1917 = vshrl.u32 %v1916, 7
        %v1918 = vsub.s32 1, %v1917
        %v1919 = vrot.slane %v1910, %v1918
        %v1920 = vlaneseq
        %v1921 = vshrl.u32 %v1920, 7
        %v1922 = vsub.s32 2, %v1921
        %v1923 = vrot.slane %v1910, %v1922
        %v1924 = vlaneseq
        %v1925 = vshrl.u32 %v1924, 7
        %v1926 = vsub.s32 3, %v1925
        %v1927 = vrot.slane %v1910, %v1926
        %v1928 = vlaneseq
        %v1929 = vshrl.u32 %v1928, 7
        %v1930 = vsub.s32 4, %v1929
        %v1931 = vrot.slane %v1910, %v1930
        %v1937 = vpack.c.bf16 %v1915, %v1915
        %v1938 = vpack.c.bf16 %v1919, %v1919
        %v1939 = vpack.c.bf16 %v1923, %v1923
        %v1940 = vpack.c.bf16 %v1927, %v1927
        %v1941 = vpack.c.bf16 %v1931, %v1931
        %v1947 = vrot.slane %v1937, 5
        %v1948 = vrot.slane %v1938, 5
        %v1949 = vrot.slane %v1939, 5
        %v1950 = vrot.slane %v1940, 5
        %v1951 = vrot.slane %v1941, 5
        %1952 = vrot.lane.b32.xlu0 %v1947, 61
        %v1953 = vpop.permute.xlu0 %1952
        %1954 = vrot.lane.b32.xlu0 %v1948, 61
        %v1955 = vpop.permute.xlu0 %1954
        %1956 = vrot.lane.b32.xlu0 %v1949, 61
        %v1957 = vpop.permute.xlu0 %1956
        %1958 = vrot.lane.b32.xlu0 %v1950, 61
        %v1959 = vpop.permute.xlu0 %1958
        %1960 = vrot.lane.b32.xlu0 %v1951, 61
        %v1961 = vpop.permute.xlu0 %1960
        %vm1962 = vcmask 498688
        %v1963 = vsel %vm1962, %v1953, %v1955
        %v1964 = vsel %vm1962, %v1955, %v1957
        %v1965 = vsel %vm1962, %v1957, %v1959
        %v1966 = vsel %vm1962, %v1959, %v1961
        %v1971 = vld [vmem:[#allocation2 + $0x20] sm:$0x8]
        %v1972 = vsel %vm710, %v1963, %v1971
        %1973 = vst [vmem:[#allocation2 + $0x20] sm:$0x8] %v1972
        %v1974 = vld [vmem:[#allocation2 + $0x28] sm:$0x8]
        %v1975 = vsel %vm710, %v1964, %v1974
        %1976 = vst [vmem:[#allocation2 + $0x28] sm:$0x8] %v1975
        %v1977 = vld [vmem:[#allocation2 + $0x30] sm:$0x8]
        %v1978 = vsel %vm710, %v1965, %v1977
        %1979 = vst [vmem:[#allocation2 + $0x30] sm:$0x8] %v1978
        %v1980 = vld [vmem:[#allocation2 + $0x38] sm:$0x8]
        %v1981 = vsel %vm710, %v1966, %v1980
        %1982 = vst [vmem:[#allocation2 + $0x38] sm:$0x8] %v1981
        %v1983 = vld [vmem:[%s164] sm:$0x1f]
        %v1985 = vlaneseq
        %v1986 = vshrl.u32 %v1985, 7
        %v1987 = vsub.s32 0, %v1986
        %v1988 = vrot.slane %v1983, %v1987
        %v1989 = vlaneseq
        %v1990 = vshrl.u32 %v1989, 7
        %v1991 = vsub.s32 1, %v1990
        %v1992 = vrot.slane %v1983, %v1991
        %v1993 = vlaneseq
        %v1994 = vshrl.u32 %v1993, 7
        %v1995 = vsub.s32 2, %v1994
        %v1996 = vrot.slane %v1983, %v1995
        %v1997 = vlaneseq
        %v1998 = vshrl.u32 %v1997, 7
        %v1999 = vsub.s32 3, %v1998
        %v2000 = vrot.slane %v1983, %v1999
        %v2001 = vlaneseq
        %v2002 = vshrl.u32 %v2001, 7
        %v2003 = vsub.s32 4, %v2002
        %v2004 = vrot.slane %v1983, %v2003
        %v2010 = vpack.c.bf16 %v1988, %v1988
        %v2011 = vpack.c.bf16 %v1992, %v1992
        %v2012 = vpack.c.bf16 %v1996, %v1996
        %v2013 = vpack.c.bf16 %v2000, %v2000
        %v2014 = vpack.c.bf16 %v2004, %v2004
        %v2016 = vshll.u32 %v2010, 16
        %v2018 = vrot.slane %v2016, 5
        %v2020 = vshll.u32 %v2011, 16
        %v2022 = vrot.slane %v2020, 5
        %v2024 = vshll.u32 %v2012, 16
        %v2026 = vrot.slane %v2024, 5
        %v2028 = vshll.u32 %v2013, 16
        %v2030 = vrot.slane %v2028, 5
        %v2032 = vshll.u32 %v2014, 16
        %v2034 = vrot.slane %v2032, 5
        %2035 = vrot.lane.b32.xlu0 %v2018, 60
        %v2036 = vpop.permute.xlu0 %2035
        %2037 = vrot.lane.b32.xlu0 %v2022, 60
        %v2038 = vpop.permute.xlu0 %2037
        %2039 = vrot.lane.b32.xlu0 %v2026, 60
        %v2040 = vpop.permute.xlu0 %2039
        %2041 = vrot.lane.b32.xlu0 %v2030, 60
        %v2042 = vpop.permute.xlu0 %2041
        %2043 = vrot.lane.b32.xlu0 %v2034, 60
        %v2044 = vpop.permute.xlu0 %2043
        %vm2045 = vcmask 490496
        %v2046 = vsel %vm2045, %v2036, %v2038
        %v2047 = vsel %vm2045, %v2038, %v2040
        %v2048 = vsel %vm2045, %v2040, %v2042
        %v2049 = vsel %vm2045, %v2042, %v2044
        %v2054 = vld [vmem:[#allocation2 + $0x20] sm:$0x8]
        %v2055 = vsel %vm795, %v2046, %v2054
        %2056 = vst [vmem:[#allocation2 + $0x20] sm:$0x8] %v2055
        %v2057 = vld [vmem:[#allocation2 + $0x28] sm:$0x8]
        %v2058 = vsel %vm795, %v2047, %v2057
        %2059 = vst [vmem:[#allocation2 + $0x28] sm:$0x8] %v2058
        %v2060 = vld [vmem:[#allocation2 + $0x30] sm:$0x8]
        %v2061 = vsel %vm795, %v2048, %v2060
        %2062 = vst [vmem:[#allocation2 + $0x30] sm:$0x8] %v2061
        %v2063 = vld [vmem:[#allocation2 + $0x38] sm:$0x8]
        %v2064 = vsel %vm795, %v2049, %v2063
        %2065 = vst [vmem:[#allocation2 + $0x38] sm:$0x8] %v2064
        %v2066 = vld [vmem:[%s164] sm:$0x1f]
        %v2068 = vlaneseq
        %v2069 = vshrl.u32 %v2068, 7
        %v2070 = vsub.s32 0, %v2069
        %v2071 = vrot.slane %v2066, %v2070
        %v2072 = vlaneseq
        %v2073 = vshrl.u32 %v2072, 7
        %v2074 = vsub.s32 1, %v2073
        %v2075 = vrot.slane %v2066, %v2074
        %v2076 = vlaneseq
        %v2077 = vshrl.u32 %v2076, 7
        %v2078 = vsub.s32 2, %v2077
        %v2079 = vrot.slane %v2066, %v2078
        %v2080 = vlaneseq
        %v2081 = vshrl.u32 %v2080, 7
        %v2082 = vsub.s32 3, %v2081
        %v2083 = vrot.slane %v2066, %v2082
        %v2084 = vlaneseq
        %v2085 = vshrl.u32 %v2084, 7
        %v2086 = vsub.s32 4, %v2085
        %v2087 = vrot.slane %v2066, %v2086
        %v2093 = vpack.c.bf16 %v2071, %v2071
        %v2094 = vpack.c.bf16 %v2075, %v2075
        %v2095 = vpack.c.bf16 %v2079, %v2079
        %v2096 = vpack.c.bf16 %v2083, %v2083
        %v2097 = vpack.c.bf16 %v2087, %v2087
        %v2103 = vrot.slane %v2093, 4
        %v2104 = vrot.slane %v2094, 4
        %v2105 = vrot.slane %v2095, 4
        %v2106 = vrot.slane %v2096, 4
        %v2107 = vrot.slane %v2097, 4
        %2108 = vrot.lane.b32.xlu0 %v2103, 59
        %v2109 = vpop.permute.xlu0 %2108
        %2110 = vrot.lane.b32.xlu0 %v2104, 59
        %v2111 = vpop.permute.xlu0 %2110
        %2112 = vrot.lane.b32.xlu0 %v2105, 59
        %v2113 = vpop.permute.xlu0 %2112
        %2114 = vrot.lane.b32.xlu0 %v2106, 59
        %v2115 = vpop.permute.xlu0 %2114
        %2116 = vrot.lane.b32.xlu0 %v2107, 59
        %v2117 = vpop.permute.xlu0 %2116
        %vm2118 = vcmask 482304
        %v2119 = vsel %vm2118, %v2109, %v2111
        %v2120 = vsel %vm2118, %v2111, %v2113
        %v2121 = vsel %vm2118, %v2113, %v2115
        %v2122 = vsel %vm2118, %v2115, %v2117
        %v2127 = vld [vmem:[#allocation2 + $0x20] sm:$0x10]
        %v2128 = vsel %vm871, %v2119, %v2127
        %2129 = vst [vmem:[#allocation2 + $0x20] sm:$0x10] %v2128
        %v2130 = vld [vmem:[#allocation2 + $0x28] sm:$0x10]
        %v2131 = vsel %vm871, %v2120, %v2130
        %2132 = vst [vmem:[#allocation2 + $0x28] sm:$0x10] %v2131
        %v2133 = vld [vmem:[#allocation2 + $0x30] sm:$0x10]
        %v2134 = vsel %vm871, %v2121, %v2133
        %2135 = vst [vmem:[#allocation2 + $0x30] sm:$0x10] %v2134
        %v2136 = vld [vmem:[#allocation2 + $0x38] sm:$0x10]
        %v2137 = vsel %vm871, %v2122, %v2136
        %2138 = vst [vmem:[#allocation2 + $0x38] sm:$0x10] %v2137
        %v2139 = vld [vmem:[%s164] sm:$0x1f]
        %v2141 = vlaneseq
        %v2142 = vshrl.u32 %v2141, 7
        %v2143 = vsub.s32 0, %v2142
        %v2144 = vrot.slane %v2139, %v2143
        %v2145 = vlaneseq
        %v2146 = vshrl.u32 %v2145, 7
        %v2147 = vsub.s32 1, %v2146
        %v2148 = vrot.slane %v2139, %v2147
        %v2149 = vlaneseq
        %v2150 = vshrl.u32 %v2149, 7
        %v2151 = vsub.s32 2, %v2150
        %v2152 = vrot.slane %v2139, %v2151
        %v2153 = vlaneseq
        %v2154 = vshrl.u32 %v2153, 7
        %v2155 = vsub.s32 3, %v2154
        %v2156 = vrot.slane %v2139, %v2155
        %v2157 = vlaneseq
        %v2158 = vshrl.u32 %v2157, 7
        %v2159 = vsub.s32 4, %v2158
        %v2160 = vrot.slane %v2139, %v2159
        %v2166 = vpack.c.bf16 %v2144, %v2144
        %v2167 = vpack.c.bf16 %v2148, %v2148
        %v2168 = vpack.c.bf16 %v2152, %v2152
        %v2169 = vpack.c.bf16 %v2156, %v2156
        %v2170 = vpack.c.bf16 %v2160, %v2160
        %v2172 = vshll.u32 %v2166, 16
        %v2174 = vrot.slane %v2172, 4
        %v2176 = vshll.u32 %v2167, 16
        %v2178 = vrot.slane %v2176, 4
        %v2180 = vshll.u32 %v2168, 16
        %v2182 = vrot.slane %v2180, 4
        %v2184 = vshll.u32 %v2169, 16
        %v2186 = vrot.slane %v2184, 4
        %v2188 = vshll.u32 %v2170, 16
        %v2190 = vrot.slane %v2188, 4
        %2191 = vrot.lane.b32.xlu0 %v2174, 58
        %v2192 = vpop.permute.xlu0 %2191
        %2193 = vrot.lane.b32.xlu0 %v2178, 58
        %v2194 = vpop.permute.xlu0 %2193
        %2195 = vrot.lane.b32.xlu0 %v2182, 58
        %v2196 = vpop.permute.xlu0 %2195
        %2197 = vrot.lane.b32.xlu0 %v2186, 58
        %v2198 = vpop.permute.xlu0 %2197
        %2199 = vrot.lane.b32.xlu0 %v2190, 58
        %v2200 = vpop.permute.xlu0 %2199
        %vm2201 = vcmask 474112
        %v2202 = vsel %vm2201, %v2192, %v2194
        %v2203 = vsel %vm2201, %v2194, %v2196
        %v2204 = vsel %vm2201, %v2196, %v2198
        %v2205 = vsel %vm2201, %v2198, %v2200
        %v2210 = vld [vmem:[#allocation2 + $0x20] sm:$0x10]
        %v2211 = vsel %vm956, %v2202, %v2210
        %2212 = vst [vmem:[#allocation2 + $0x20] sm:$0x10] %v2211
        %v2213 = vld [vmem:[#allocation2 + $0x28] sm:$0x10]
        %v2214 = vsel %vm956, %v2203, %v2213
        %2215 = vst [vmem:[#allocation2 + $0x28] sm:$0x10] %v2214
        %v2216 = vld [vmem:[#allocation2 + $0x30] sm:$0x10]
        %v2217 = vsel %vm956, %v2204, %v2216
        %2218 = vst [vmem:[#allocation2 + $0x30] sm:$0x10] %v2217
        %v2219 = vld [vmem:[#allocation2 + $0x38] sm:$0x10]
        %v2220 = vsel %vm956, %v2205, %v2219
        %2221 = vst [vmem:[#allocation2 + $0x38] sm:$0x10] %v2220
        %v2222 = vld [vmem:[%s164] sm:$0x1f]
        %v2224 = vlaneseq
        %v2225 = vshrl.u32 %v2224, 7
        %v2226 = vsub.s32 0, %v2225
        %v2227 = vrot.slane %v2222, %v2226
        %v2228 = vlaneseq
        %v2229 = vshrl.u32 %v2228, 7
        %v2230 = vsub.s32 1, %v2229
        %v2231 = vrot.slane %v2222, %v2230
        %v2232 = vlaneseq
        %v2233 = vshrl.u32 %v2232, 7
        %v2234 = vsub.s32 2, %v2233
        %v2235 = vrot.slane %v2222, %v2234
        %v2236 = vlaneseq
        %v2237 = vshrl.u32 %v2236, 7
        %v2238 = vsub.s32 3, %v2237
        %v2239 = vrot.slane %v2222, %v2238
        %v2240 = vlaneseq
        %v2241 = vshrl.u32 %v2240, 7
        %v2242 = vsub.s32 4, %v2241
        %v2243 = vrot.slane %v2222, %v2242
        %v2249 = vpack.c.bf16 %v2227, %v2227
        %v2250 = vpack.c.bf16 %v2231, %v2231
        %v2251 = vpack.c.bf16 %v2235, %v2235
        %v2252 = vpack.c.bf16 %v2239, %v2239
        %v2253 = vpack.c.bf16 %v2243, %v2243
        %v2259 = vrot.slane %v2249, 3
        %v2260 = vrot.slane %v2250, 3
        %v2261 = vrot.slane %v2251, 3
        %v2262 = vrot.slane %v2252, 3
        %v2263 = vrot.slane %v2253, 3
        %2264 = vrot.lane.b32.xlu0 %v2259, 57
        %v2265 = vpop.permute.xlu0 %2264
        %2266 = vrot.lane.b32.xlu0 %v2260, 57
        %v2267 = vpop.permute.xlu0 %2266
        %2268 = vrot.lane.b32.xlu0 %v2261, 57
        %v2269 = vpop.permute.xlu0 %2268
        %2270 = vrot.lane.b32.xlu0 %v2262, 57
        %v2271 = vpop.permute.xlu0 %2270
        %2272 = vrot.lane.b32.xlu0 %v2263, 57
        %v2273 = vpop.permute.xlu0 %2272
        %vm2274 = vcmask 465920
        %v2275 = vsel %vm2274, %v2265, %v2267
        %v2276 = vsel %vm2274, %v2267, %v2269
        %v2277 = vsel %vm2274, %v2269, %v2271
        %v2278 = vsel %vm2274, %v2271, %v2273
        %v2283 = vld [vmem:[#allocation2 + $0x20] sm:$0x20]
        %v2284 = vsel %vm1032, %v2275, %v2283
        %2285 = vst [vmem:[#allocation2 + $0x20] sm:$0x20] %v2284
        %v2286 = vld [vmem:[#allocation2 + $0x28] sm:$0x20]
        %v2287 = vsel %vm1032, %v2276, %v2286
        %2288 = vst [vmem:[#allocation2 + $0x28] sm:$0x20] %v2287
        %v2289 = vld [vmem:[#allocation2 + $0x30] sm:$0x20]
        %v2290 = vsel %vm1032, %v2277, %v2289
        %2291 = vst [vmem:[#allocation2 + $0x30] sm:$0x20] %v2290
        %v2292 = vld [vmem:[#allocation2 + $0x38] sm:$0x20]
        %v2293 = vsel %vm1032, %v2278, %v2292
        %2294 = vst [vmem:[#allocation2 + $0x38] sm:$0x20] %v2293
        %v2295 = vld [vmem:[%s164] sm:$0x1f]
        %v2297 = vlaneseq
        %v2298 = vshrl.u32 %v2297, 7
        %v2299 = vsub.s32 0, %v2298
        %v2300 = vrot.slane %v2295, %v2299
        %v2301 = vlaneseq
        %v2302 = vshrl.u32 %v2301, 7
        %v2303 = vsub.s32 1, %v2302
        %v2304 = vrot.slane %v2295, %v2303
        %v2305 = vlaneseq
        %v2306 = vshrl.u32 %v2305, 7
        %v2307 = vsub.s32 2, %v2306
        %v2308 = vrot.slane %v2295, %v2307
        %v2309 = vlaneseq
        %v2310 = vshrl.u32 %v2309, 7
        %v2311 = vsub.s32 3, %v2310
        %v2312 = vrot.slane %v2295, %v2311
        %v2313 = vlaneseq
        %v2314 = vshrl.u32 %v2313, 7
        %v2315 = vsub.s32 4, %v2314
        %v2316 = vrot.slane %v2295, %v2315
        %v2322 = vpack.c.bf16 %v2300, %v2300
        %v2323 = vpack.c.bf16 %v2304, %v2304
        %v2324 = vpack.c.bf16 %v2308, %v2308
        %v2325 = vpack.c.bf16 %v2312, %v2312
        %v2326 = vpack.c.bf16 %v2316, %v2316
        %v2328 = vshll.u32 %v2322, 16
        %v2330 = vrot.slane %v2328, 3
        %v2332 = vshll.u32 %v2323, 16
        %v2334 = vrot.slane %v2332, 3
        %v2336 = vshll.u32 %v2324, 16
        %v2338 = vrot.slane %v2336, 3
        %v2340 = vshll.u32 %v2325, 16
        %v2342 = vrot.slane %v2340, 3
        %v2344 = vshll.u32 %v2326, 16
        %v2346 = vrot.slane %v2344, 3
        %2347 = vrot.lane.b32.xlu0 %v2330, 56
        %v2348 = vpop.permute.xlu0 %2347
        %2349 = vrot.lane.b32.xlu0 %v2334, 56
        %v2350 = vpop.permute.xlu0 %2349
        %2351 = vrot.lane.b32.xlu0 %v2338, 56
        %v2352 = vpop.permute.xlu0 %2351
        %2353 = vrot.lane.b32.xlu0 %v2342, 56
        %v2354 = vpop.permute.xlu0 %2353
        %2355 = vrot.lane.b32.xlu0 %v2346, 56
        %v2356 = vpop.permute.xlu0 %2355
        %vm2357 = vcmask 457728
        %v2358 = vsel %vm2357, %v2348, %v2350
        %v2359 = vsel %vm2357, %v2350, %v2352
        %v2360 = vsel %vm2357, %v2352, %v2354
        %v2361 = vsel %vm2357, %v2354, %v2356
        %v2366 = vld [vmem:[#allocation2 + $0x20] sm:$0x20]
        %v2367 = vsel %vm1117, %v2358, %v2366
        %2368 = vst [vmem:[#allocation2 + $0x20] sm:$0x20] %v2367
        %v2369 = vld [vmem:[#allocation2 + $0x28] sm:$0x20]
        %v2370 = vsel %vm1117, %v2359, %v2369
        %2371 = vst [vmem:[#allocation2 + $0x28] sm:$0x20] %v2370
        %v2372 = vld [vmem:[#allocation2 + $0x30] sm:$0x20]
        %v2373 = vsel %vm1117, %v2360, %v2372
        %2374 = vst [vmem:[#allocation2 + $0x30] sm:$0x20] %v2373
        %v2375 = vld [vmem:[#allocation2 + $0x38] sm:$0x20]
        %v2376 = vsel %vm1117, %v2361, %v2375
        %2377 = vst [vmem:[#allocation2 + $0x38] sm:$0x20] %v2376
        %v2378 = vld [vmem:[%s164] sm:$0x1f]
        %v2380 = vlaneseq
        %v2381 = vshrl.u32 %v2380, 7
        %v2382 = vsub.s32 0, %v2381
        %v2383 = vrot.slane %v2378, %v2382
        %v2384 = vlaneseq
        %v2385 = vshrl.u32 %v2384, 7
        %v2386 = vsub.s32 1, %v2385
        %v2387 = vrot.slane %v2378, %v2386
        %v2388 = vlaneseq
        %v2389 = vshrl.u32 %v2388, 7
        %v2390 = vsub.s32 2, %v2389
        %v2391 = vrot.slane %v2378, %v2390
        %v2392 = vlaneseq
        %v2393 = vshrl.u32 %v2392, 7
        %v2394 = vsub.s32 3, %v2393
        %v2395 = vrot.slane %v2378, %v2394
        %v2396 = vlaneseq
        %v2397 = vshrl.u32 %v2396, 7
        %v2398 = vsub.s32 4, %v2397
        %v2399 = vrot.slane %v2378, %v2398
        %v2405 = vpack.c.bf16 %v2383, %v2383
        %v2406 = vpack.c.bf16 %v2387, %v2387
        %v2407 = vpack.c.bf16 %v2391, %v2391
        %v2408 = vpack.c.bf16 %v2395, %v2395
        %v2409 = vpack.c.bf16 %v2399, %v2399
        %v2415 = vrot.slane %v2405, 2
        %v2416 = vrot.slane %v2406, 2
        %v2417 = vrot.slane %v2407, 2
        %v2418 = vrot.slane %v2408, 2
        %v2419 = vrot.slane %v2409, 2
        %2420 = vrot.lane.b32.xlu0 %v2415, 40
        %v2421 = vpop.permute.xlu0 %2420
        %2422 = vrot.lane.b32.xlu0 %v2416, 40
        %v2423 = vpop.permute.xlu0 %2422
        %2424 = vrot.lane.b32.xlu0 %v2417, 40
        %v2425 = vpop.permute.xlu0 %2424
        %2426 = vrot.lane.b32.xlu0 %v2418, 40
        %v2427 = vpop.permute.xlu0 %2426
        %2428 = vrot.lane.b32.xlu0 %v2419, 40
        %v2429 = vpop.permute.xlu0 %2428
        %vm2430 = vcmask 326656
        %v2431 = vsel %vm2430, %v2421, %v2423
        %v2432 = vsel %vm2430, %v2423, %v2425
        %v2433 = vsel %vm2430, %v2425, %v2427
        %v2434 = vsel %vm2430, %v2427, %v2429
        %v2439 = vld [vmem:[#allocation2 + $0x20] sm:$0x40]
        %v2440 = vsel %vm1193, %v2431, %v2439
        %2441 = vst [vmem:[#allocation2 + $0x20] sm:$0x40] %v2440
        %v2442 = vld [vmem:[#allocation2 + $0x28] sm:$0x40]
        %v2443 = vsel %vm1193, %v2432, %v2442
        %2444 = vst [vmem:[#allocation2 + $0x28] sm:$0x40] %v2443
        %v2445 = vld [vmem:[#allocation2 + $0x30] sm:$0x40]
        %v2446 = vsel %vm1193, %v2433, %v2445
        %2447 = vst [vmem:[#allocation2 + $0x30] sm:$0x40] %v2446
        %v2448 = vld [vmem:[#allocation2 + $0x38] sm:$0x40]
        %v2449 = vsel %vm1193, %v2434, %v2448
        %2450 = vst [vmem:[#allocation2 + $0x38] sm:$0x40] %v2449
        %v2451 = vld [vmem:[%s164] sm:$0x1f]
        %v2453 = vlaneseq
        %v2454 = vshrl.u32 %v2453, 7
        %v2455 = vsub.s32 0, %v2454
        %v2456 = vrot.slane %v2451, %v2455
        %v2457 = vlaneseq
        %v2458 = vshrl.u32 %v2457, 7
        %v2459 = vsub.s32 1, %v2458
        %v2460 = vrot.slane %v2451, %v2459
        %v2461 = vlaneseq
        %v2462 = vshrl.u32 %v2461, 7
        %v2463 = vsub.s32 2, %v2462
        %v2464 = vrot.slane %v2451, %v2463
        %v2465 = vlaneseq
        %v2466 = vshrl.u32 %v2465, 7
        %v2467 = vsub.s32 3, %v2466
        %v2468 = vrot.slane %v2451, %v2467
        %v2469 = vlaneseq
        %v2470 = vshrl.u32 %v2469, 7
        %v2471 = vsub.s32 4, %v2470
        %v2472 = vrot.slane %v2451, %v2471
        %v2478 = vpack.c.bf16 %v2456, %v2456
        %v2479 = vpack.c.bf16 %v2460, %v2460
        %v2480 = vpack.c.bf16 %v2464, %v2464
        %v2481 = vpack.c.bf16 %v2468, %v2468
        %v2482 = vpack.c.bf16 %v2472, %v2472
        %v2484 = vshll.u32 %v2478, 16
        %v2486 = vrot.slane %v2484, 2
        %v2488 = vshll.u32 %v2479, 16
        %v2490 = vrot.slane %v2488, 2
        %v2492 = vshll.u32 %v2480, 16
        %v2494 = vrot.slane %v2492, 2
        %v2496 = vshll.u32 %v2481, 16
        %v2498 = vrot.slane %v2496, 2
        %v2500 = vshll.u32 %v2482, 16
        %v2502 = vrot.slane %v2500, 2
        %2503 = vrot.lane.b32.xlu0 %v2486, 39
        %v2504 = vpop.permute.xlu0 %2503
        %2505 = vrot.lane.b32.xlu0 %v2490, 39
        %v2506 = vpop.permute.xlu0 %2505
        %2507 = vrot.lane.b32.xlu0 %v2494, 39
        %v2508 = vpop.permute.xlu0 %2507
        %2509 = vrot.lane.b32.xlu0 %v2498, 39
        %v2510 = vpop.permute.xlu0 %2509
        %2511 = vrot.lane.b32.xlu0 %v2502, 39
        %v2512 = vpop.permute.xlu0 %2511
        %vm2513 = vcmask 318464
        %v2514 = vsel %vm2513, %v2504, %v2506
        %v2515 = vsel %vm2513, %v2506, %v2508
        %v2516 = vsel %vm2513, %v2508, %v2510
        %v2517 = vsel %vm2513, %v2510, %v2512
        %v2522 = vld [vmem:[#allocation2 + $0x20] sm:$0x40]
        %v2523 = vsel %vm1278, %v2514, %v2522
        %2524 = vst [vmem:[#allocation2 + $0x20] sm:$0x40] %v2523
        %v2525 = vld [vmem:[#allocation2 + $0x28] sm:$0x40]
        %v2526 = vsel %vm1278, %v2515, %v2525
        %2527 = vst [vmem:[#allocation2 + $0x28] sm:$0x40] %v2526
        %v2528 = vld [vmem:[#allocation2 + $0x30] sm:$0x40]
        %v2529 = vsel %vm1278, %v2516, %v2528
        %2530 = vst [vmem:[#allocation2 + $0x30] sm:$0x40] %v2529
        %v2531 = vld [vmem:[#allocation2 + $0x38] sm:$0x40]
        %v2532 = vsel %vm1278, %v2517, %v2531
        %2533 = vst [vmem:[#allocation2 + $0x38] sm:$0x40] %v2532
        %v2534 = vld [vmem:[%s164] sm:$0x1f]
        %v2536 = vlaneseq
        %v2537 = vshrl.u32 %v2536, 7
        %v2538 = vsub.s32 0, %v2537
        %v2539 = vrot.slane %v2534, %v2538
        %v2540 = vlaneseq
        %v2541 = vshrl.u32 %v2540, 7
        %v2542 = vsub.s32 1, %v2541
        %v2543 = vrot.slane %v2534, %v2542
        %v2544 = vlaneseq
        %v2545 = vshrl.u32 %v2544, 7
        %v2546 = vsub.s32 2, %v2545
        %v2547 = vrot.slane %v2534, %v2546
        %v2548 = vlaneseq
        %v2549 = vshrl.u32 %v2548, 7
        %v2550 = vsub.s32 3, %v2549
        %v2551 = vrot.slane %v2534, %v2550
        %v2552 = vlaneseq
        %v2553 = vshrl.u32 %v2552, 7
        %v2554 = vsub.s32 4, %v2553
        %v2555 = vrot.slane %v2534, %v2554
        %v2561 = vpack.c.bf16 %v2539, %v2539
        %v2562 = vpack.c.bf16 %v2543, %v2543
        %v2563 = vpack.c.bf16 %v2547, %v2547
        %v2564 = vpack.c.bf16 %v2551, %v2551
        %v2565 = vpack.c.bf16 %v2555, %v2555
        %v2571 = vrot.slane %v2561, 1
        %v2572 = vrot.slane %v2562, 1
        %v2573 = vrot.slane %v2563, 1
        %v2574 = vrot.slane %v2564, 1
        %v2575 = vrot.slane %v2565, 1
        %2576 = vrot.lane.b32.xlu0 %v2571, 38
        %v2577 = vpop.permute.xlu0 %2576
        %2578 = vrot.lane.b32.xlu0 %v2572, 38
        %v2579 = vpop.permute.xlu0 %2578
        %2580 = vrot.lane.b32.xlu0 %v2573, 38
        %v2581 = vpop.permute.xlu0 %2580
        %2582 = vrot.lane.b32.xlu0 %v2574, 38
        %v2583 = vpop.permute.xlu0 %2582
        %2584 = vrot.lane.b32.xlu0 %v2575, 38
        %v2585 = vpop.permute.xlu0 %2584
        %vm2586 = vcmask 310272
        %v2587 = vsel %vm2586, %v2577, %v2579
        %v2588 = vsel %vm2586, %v2579, %v2581
        %v2589 = vsel %vm2586, %v2581, %v2583
        %v2590 = vsel %vm2586, %v2583, %v2585
        %v2595 = vld [vmem:[#allocation2 + $0x20] sm:$0x80]
        %v2596 = vsel %vm1354, %v2587, %v2595
        %2597 = vst [vmem:[#allocation2 + $0x20] sm:$0x80] %v2596
        %v2598 = vld [vmem:[#allocation2 + $0x28] sm:$0x80]
        %v2599 = vsel %vm1354, %v2588, %v2598
        %2600 = vst [vmem:[#allocation2 + $0x28] sm:$0x80] %v2599
        %v2601 = vld [vmem:[#allocation2 + $0x30] sm:$0x80]
        %v2602 = vsel %vm1354, %v2589, %v2601
        %2603 = vst [vmem:[#allocation2 + $0x30] sm:$0x80] %v2602
        %v2604 = vld [vmem:[#allocation2 + $0x38] sm:$0x80]
        %v2605 = vsel %vm1354, %v2590, %v2604
        %2606 = vst [vmem:[#allocation2 + $0x38] sm:$0x80] %v2605
        %v2607 = vld [vmem:[%s164] sm:$0x1f]
        %v2609 = vlaneseq
        %v2610 = vshrl.u32 %v2609, 7
        %v2611 = vsub.s32 0, %v2610
        %v2612 = vrot.slane %v2607, %v2611
        %v2613 = vlaneseq
        %v2614 = vshrl.u32 %v2613, 7
        %v2615 = vsub.s32 1, %v2614
        %v2616 = vrot.slane %v2607, %v2615
        %v2617 = vlaneseq
        %v2618 = vshrl.u32 %v2617, 7
        %v2619 = vsub.s32 2, %v2618
        %v2620 = vrot.slane %v2607, %v2619
        %v2621 = vlaneseq
        %v2622 = vshrl.u32 %v2621, 7
        %v2623 = vsub.s32 3, %v2622
        %v2624 = vrot.slane %v2607, %v2623
        %v2625 = vlaneseq
        %v2626 = vshrl.u32 %v2625, 7
        %v2627 = vsub.s32 4, %v2626
        %v2628 = vrot.slane %v2607, %v2627
        %v2634 = vpack.c.bf16 %v2612, %v2612
        %v2635 = vpack.c.bf16 %v2616, %v2616
        %v2636 = vpack.c.bf16 %v2620, %v2620
        %v2637 = vpack.c.bf16 %v2624, %v2624
        %v2638 = vpack.c.bf16 %v2628, %v2628
        %v2640 = vshll.u32 %v2634, 16
        %v2642 = vrot.slane %v2640, 1
        %v2644 = vshll.u32 %v2635, 16
        %v2646 = vrot.slane %v2644, 1
        %v2648 = vshll.u32 %v2636, 16
        %v2650 = vrot.slane %v2648, 1
        %v2652 = vshll.u32 %v2637, 16
        %v2654 = vrot.slane %v2652, 1
        %v2656 = vshll.u32 %v2638, 16
        %v2658 = vrot.slane %v2656, 1
        %2659 = vrot.lane.b32.xlu0 %v2642, 37
        %v2660 = vpop.permute.xlu0 %2659
        %2661 = vrot.lane.b32.xlu0 %v2646, 37
        %v2662 = vpop.permute.xlu0 %2661
        %2663 = vrot.lane.b32.xlu0 %v2650, 37
        %v2664 = vpop.permute.xlu0 %2663
        %2665 = vrot.lane.b32.xlu0 %v2654, 37
        %v2666 = vpop.permute.xlu0 %2665
        %2667 = vrot.lane.b32.xlu0 %v2658, 37
        %v2668 = vpop.permute.xlu0 %2667
        %vm2669 = vcmask 302080
        %v2670 = vsel %vm2669, %v2660, %v2662
        %v2671 = vsel %vm2669, %v2662, %v2664
        %v2672 = vsel %vm2669, %v2664, %v2666
        %v2673 = vsel %vm2669, %v2666, %v2668
        %v2678 = vld [vmem:[#allocation2 + $0x20] sm:$0x80]
        %v2679 = vsel %vm1439, %v2670, %v2678
        %2680 = vst [vmem:[#allocation2 + $0x20] sm:$0x80] %v2679
        %v2681 = vld [vmem:[#allocation2 + $0x28] sm:$0x80]
        %v2682 = vsel %vm1439, %v2671, %v2681
        %2683 = vst [vmem:[#allocation2 + $0x28] sm:$0x80] %v2682
        %v2684 = vld [vmem:[#allocation2 + $0x30] sm:$0x80]
        %v2685 = vsel %vm1439, %v2672, %v2684
        %2686 = vst [vmem:[#allocation2 + $0x30] sm:$0x80] %v2685
        %v2687 = vld [vmem:[#allocation2 + $0x38] sm:$0x80]
        %v2688 = vsel %vm1439, %v2673, %v2687
        %2689 = vst [vmem:[#allocation2 + $0x38] sm:$0x80] %v2688
        %v2690 = vld [vmem:[%s164] sm:$0x1f]
        %v2692 = vlaneseq
        %v2693 = vshrl.u32 %v2692, 7
        %v2694 = vsub.s32 0, %v2693
        %v2695 = vrot.slane %v2690, %v2694
        %v2696 = vlaneseq
        %v2697 = vshrl.u32 %v2696, 7
        %v2698 = vsub.s32 1, %v2697
        %v2699 = vrot.slane %v2690, %v2698
        %v2700 = vlaneseq
        %v2701 = vshrl.u32 %v2700, 7
        %v2702 = vsub.s32 2, %v2701
        %v2703 = vrot.slane %v2690, %v2702
        %v2704 = vlaneseq
        %v2705 = vshrl.u32 %v2704, 7
        %v2706 = vsub.s32 3, %v2705
        %v2707 = vrot.slane %v2690, %v2706
        %v2708 = vlaneseq
        %v2709 = vshrl.u32 %v2708, 7
        %v2710 = vsub.s32 4, %v2709
        %v2711 = vrot.slane %v2690, %v2710
        %v2717 = vpack.c.bf16 %v2695, %v2695
        %v2718 = vpack.c.bf16 %v2699, %v2699
        %v2719 = vpack.c.bf16 %v2703, %v2703
        %v2720 = vpack.c.bf16 %v2707, %v2707
        %v2721 = vpack.c.bf16 %v2711, %v2711
        %2727 = vrot.lane.b32.xlu0 %v2717, 36
        %v2728 = vpop.permute.xlu0 %2727
        %2729 = vrot.lane.b32.xlu0 %v2718, 36
        %v2730 = vpop.permute.xlu0 %2729
        %2731 = vrot.lane.b32.xlu0 %v2719, 36
        %v2732 = vpop.permute.xlu0 %2731
        %2733 = vrot.lane.b32.xlu0 %v2720, 36
        %v2734 = vpop.permute.xlu0 %2733
        %2735 = vrot.lane.b32.xlu0 %v2721, 36
        %v2736 = vpop.permute.xlu0 %2735
        %vm2737 = vcmask 293888
        %v2738 = vsel %vm2737, %v2728, %v2730
        %v2739 = vsel %vm2737, %v2730, %v2732
        %v2740 = vsel %vm2737, %v2732, %v2734
        %v2741 = vsel %vm2737, %v2734, %v2736
        %v2746 = vld [vmem:[#allocation2 + $0x40] sm:$0x1]
        %v2747 = vsel %vm232, %v2738, %v2746
        %2748 = vst [vmem:[#allocation2 + $0x40] sm:$0x1] %v2747
        %v2749 = vld [vmem:[#allocation2 + $0x48] sm:$0x1]
        %v2750 = vsel %vm232, %v2739, %v2749
        %2751 = vst [vmem:[#allocation2 + $0x48] sm:$0x1] %v2750
        %v2752 = vld [vmem:[#allocation2 + $0x50] sm:$0x1]
        %v2753 = vsel %vm232, %v2740, %v2752
        %2754 = vst [vmem:[#allocation2 + $0x50] sm:$0x1] %v2753
        %v2755 = vld [vmem:[#allocation2 + $0x58] sm:$0x1]
        %v2756 = vsel %vm232, %v2741, %v2755
        %2757 = vst [vmem:[#allocation2 + $0x58] sm:$0x1] %v2756
        %v2758 = vld [vmem:[%s164] sm:$0x1f]
        %v2760 = vlaneseq
        %v2761 = vshrl.u32 %v2760, 7
        %v2762 = vsub.s32 0, %v2761
        %v2763 = vrot.slane %v2758, %v2762
        %v2764 = vlaneseq
        %v2765 = vshrl.u32 %v2764, 7
        %v2766 = vsub.s32 1, %v2765
        %v2767 = vrot.slane %v2758, %v2766
        %v2768 = vlaneseq
        %v2769 = vshrl.u32 %v2768, 7
        %v2770 = vsub.s32 2, %v2769
        %v2771 = vrot.slane %v2758, %v2770
        %v2772 = vlaneseq
        %v2773 = vshrl.u32 %v2772, 7
        %v2774 = vsub.s32 3, %v2773
        %v2775 = vrot.slane %v2758, %v2774
        %v2776 = vlaneseq
        %v2777 = vshrl.u32 %v2776, 7
        %v2778 = vsub.s32 4, %v2777
        %v2779 = vrot.slane %v2758, %v2778
        %v2785 = vpack.c.bf16 %v2763, %v2763
        %v2786 = vpack.c.bf16 %v2767, %v2767
        %v2787 = vpack.c.bf16 %v2771, %v2771
        %v2788 = vpack.c.bf16 %v2775, %v2775
        %v2789 = vpack.c.bf16 %v2779, %v2779
        %v2791 = vshll.u32 %v2785, 16
        %v2794 = vshll.u32 %v2786, 16
        %v2797 = vshll.u32 %v2787, 16
        %v2800 = vshll.u32 %v2788, 16
        %v2803 = vshll.u32 %v2789, 16
        %2805 = vrot.lane.b32.xlu0 %v2791, 35
        %v2806 = vpop.permute.xlu0 %2805
        %2807 = vrot.lane.b32.xlu0 %v2794, 35
        %v2808 = vpop.permute.xlu0 %2807
        %2809 = vrot.lane.b32.xlu0 %v2797, 35
        %v2810 = vpop.permute.xlu0 %2809
        %2811 = vrot.lane.b32.xlu0 %v2800, 35
        %v2812 = vpop.permute.xlu0 %2811
        %2813 = vrot.lane.b32.xlu0 %v2803, 35
        %v2814 = vpop.permute.xlu0 %2813
        %vm2815 = vcmask 285696
        %v2816 = vsel %vm2815, %v2806, %v2808
        %v2817 = vsel %vm2815, %v2808, %v2810
        %v2818 = vsel %vm2815, %v2810, %v2812
        %v2819 = vsel %vm2815, %v2812, %v2814
        %v2824 = vld [vmem:[#allocation2 + $0x40] sm:$0x1]
        %v2825 = vsel %vm312, %v2816, %v2824
        %2826 = vst [vmem:[#allocation2 + $0x40] sm:$0x1] %v2825
        %v2827 = vld [vmem:[#allocation2 + $0x48] sm:$0x1]
        %v2828 = vsel %vm312, %v2817, %v2827
        %2829 = vst [vmem:[#allocation2 + $0x48] sm:$0x1] %v2828
        %v2830 = vld [vmem:[#allocation2 + $0x50] sm:$0x1]
        %v2831 = vsel %vm312, %v2818, %v2830
        %2832 = vst [vmem:[#allocation2 + $0x50] sm:$0x1] %v2831
        %v2833 = vld [vmem:[#allocation2 + $0x58] sm:$0x1]
        %v2834 = vsel %vm312, %v2819, %v2833
        %2835 = vst [vmem:[#allocation2 + $0x58] sm:$0x1] %v2834
        %v2836 = vld [vmem:[%s164] sm:$0x1f]
        %v2838 = vlaneseq
        %v2839 = vshrl.u32 %v2838, 7
        %v2840 = vsub.s32 0, %v2839
        %v2841 = vrot.slane %v2836, %v2840
        %v2842 = vlaneseq
        %v2843 = vshrl.u32 %v2842, 7
        %v2844 = vsub.s32 1, %v2843
        %v2845 = vrot.slane %v2836, %v2844
        %v2846 = vlaneseq
        %v2847 = vshrl.u32 %v2846, 7
        %v2848 = vsub.s32 2, %v2847
        %v2849 = vrot.slane %v2836, %v2848
        %v2850 = vlaneseq
        %v2851 = vshrl.u32 %v2850, 7
        %v2852 = vsub.s32 3, %v2851
        %v2853 = vrot.slane %v2836, %v2852
        %v2854 = vlaneseq
        %v2855 = vshrl.u32 %v2854, 7
        %v2856 = vsub.s32 4, %v2855
        %v2857 = vrot.slane %v2836, %v2856
        %v2863 = vpack.c.bf16 %v2841, %v2841
        %v2864 = vpack.c.bf16 %v2845, %v2845
        %v2865 = vpack.c.bf16 %v2849, %v2849
        %v2866 = vpack.c.bf16 %v2853, %v2853
        %v2867 = vpack.c.bf16 %v2857, %v2857
        %v2873 = vrot.slane %v2863, 7
        %v2874 = vrot.slane %v2864, 7
        %v2875 = vrot.slane %v2865, 7
        %v2876 = vrot.slane %v2866, 7
        %v2877 = vrot.slane %v2867, 7
        %2878 = vrot.lane.b32.xlu0 %v2873, 34
        %v2879 = vpop.permute.xlu0 %2878
        %2880 = vrot.lane.b32.xlu0 %v2874, 34
        %v2881 = vpop.permute.xlu0 %2880
        %2882 = vrot.lane.b32.xlu0 %v2875, 34
        %v2883 = vpop.permute.xlu0 %2882
        %2884 = vrot.lane.b32.xlu0 %v2876, 34
        %v2885 = vpop.permute.xlu0 %2884
        %2886 = vrot.lane.b32.xlu0 %v2877, 34
        %v2887 = vpop.permute.xlu0 %2886
        %vm2888 = vcmask 277504
        %v2889 = vsel %vm2888, %v2879, %v2881
        %v2890 = vsel %vm2888, %v2881, %v2883
        %v2891 = vsel %vm2888, %v2883, %v2885
        %v2892 = vsel %vm2888, %v2885, %v2887
        %v2897 = vld [vmem:[#allocation2 + $0x40] sm:$0x2]
        %v2898 = vsel %vm388, %v2889, %v2897
        %2899 = vst [vmem:[#allocation2 + $0x40] sm:$0x2] %v2898
        %v2900 = vld [vmem:[#allocation2 + $0x48] sm:$0x2]
        %v2901 = vsel %vm388, %v2890, %v2900
        %2902 = vst [vmem:[#allocation2 + $0x48] sm:$0x2] %v2901
        %v2903 = vld [vmem:[#allocation2 + $0x50] sm:$0x2]
        %v2904 = vsel %vm388, %v2891, %v2903
        %2905 = vst [vmem:[#allocation2 + $0x50] sm:$0x2] %v2904
        %v2906 = vld [vmem:[#allocation2 + $0x58] sm:$0x2]
        %v2907 = vsel %vm388, %v2892, %v2906
        %2908 = vst [vmem:[#allocation2 + $0x58] sm:$0x2] %v2907
        %v2909 = vld [vmem:[%s164] sm:$0x1f]
        %v2911 = vlaneseq
        %v2912 = vshrl.u32 %v2911, 7
        %v2913 = vsub.s32 0, %v2912
        %v2914 = vrot.slane %v2909, %v2913
        %v2915 = vlaneseq
        %v2916 = vshrl.u32 %v2915, 7
        %v2917 = vsub.s32 1, %v2916
        %v2918 = vrot.slane %v2909, %v2917
        %v2919 = vlaneseq
        %v2920 = vshrl.u32 %v2919, 7
        %v2921 = vsub.s32 2, %v2920
        %v2922 = vrot.slane %v2909, %v2921
        %v2923 = vlaneseq
        %v2924 = vshrl.u32 %v2923, 7
        %v2925 = vsub.s32 3, %v2924
        %v2926 = vrot.slane %v2909, %v2925
        %v2927 = vlaneseq
        %v2928 = vshrl.u32 %v2927, 7
        %v2929 = vsub.s32 4, %v2928
        %v2930 = vrot.slane %v2909, %v2929
        %v2936 = vpack.c.bf16 %v2914, %v2914
        %v2937 = vpack.c.bf16 %v2918, %v2918
        %v2938 = vpack.c.bf16 %v2922, %v2922
        %v2939 = vpack.c.bf16 %v2926, %v2926
        %v2940 = vpack.c.bf16 %v2930, %v2930
        %v2942 = vshll.u32 %v2936, 16
        %v2944 = vrot.slane %v2942, 7
        %v2946 = vshll.u32 %v2937, 16
        %v2948 = vrot.slane %v2946, 7
        %v2950 = vshll.u32 %v2938, 16
        %v2952 = vrot.slane %v2950, 7
        %v2954 = vshll.u32 %v2939, 16
        %v2956 = vrot.slane %v2954, 7
        %v2958 = vshll.u32 %v2940, 16
        %v2960 = vrot.slane %v2958, 7
        %2961 = vrot.lane.b32.xlu0 %v2944, 18
        %v2962 = vpop.permute.xlu0 %2961
        %2963 = vrot.lane.b32.xlu0 %v2948, 18
        %v2964 = vpop.permute.xlu0 %2963
        %2965 = vrot.lane.b32.xlu0 %v2952, 18
        %v2966 = vpop.permute.xlu0 %2965
        %2967 = vrot.lane.b32.xlu0 %v2956, 18
        %v2968 = vpop.permute.xlu0 %2967
        %2969 = vrot.lane.b32.xlu0 %v2960, 18
        %v2970 = vpop.permute.xlu0 %2969
        %vm2971 = vcmask 146432
        %v2972 = vsel %vm2971, %v2962, %v2964
        %v2973 = vsel %vm2971, %v2964, %v2966
        %v2974 = vsel %vm2971, %v2966, %v2968
        %v2975 = vsel %vm2971, %v2968, %v2970
        %v2980 = vld [vmem:[#allocation2 + $0x40] sm:$0x2]
        %v2981 = vsel %vm473, %v2972, %v2980
        %2982 = vst [vmem:[#allocation2 + $0x40] sm:$0x2] %v2981
        %v2983 = vld [vmem:[#allocation2 + $0x48] sm:$0x2]
        %v2984 = vsel %vm473, %v2973, %v2983
        %2985 = vst [vmem:[#allocation2 + $0x48] sm:$0x2] %v2984
        %v2986 = vld [vmem:[#allocation2 + $0x50] sm:$0x2]
        %v2987 = vsel %vm473, %v2974, %v2986
        %2988 = vst [vmem:[#allocation2 + $0x50] sm:$0x2] %v2987
        %v2989 = vld [vmem:[#allocation2 + $0x58] sm:$0x2]
        %v2990 = vsel %vm473, %v2975, %v2989
        %2991 = vst [vmem:[#allocation2 + $0x58] sm:$0x2] %v2990
        %v2992 = vld [vmem:[%s164] sm:$0x1f]
        %v2994 = vlaneseq
        %v2995 = vshrl.u32 %v2994, 7
        %v2996 = vsub.s32 0, %v2995
        %v2997 = vrot.slane %v2992, %v2996
        %v2998 = vlaneseq
        %v2999 = vshrl.u32 %v2998, 7
        %v3000 = vsub.s32 1, %v2999
        %v3001 = vrot.slane %v2992, %v3000
        %v3002 = vlaneseq
        %v3003 = vshrl.u32 %v3002, 7
        %v3004 = vsub.s32 2, %v3003
        %v3005 = vrot.slane %v2992, %v3004
        %v3006 = vlaneseq
        %v3007 = vshrl.u32 %v3006, 7
        %v3008 = vsub.s32 3, %v3007
        %v3009 = vrot.slane %v2992, %v3008
        %v3010 = vlaneseq
        %v3011 = vshrl.u32 %v3010, 7
        %v3012 = vsub.s32 4, %v3011
        %v3013 = vrot.slane %v2992, %v3012
        %v3019 = vpack.c.bf16 %v2997, %v2997
        %v3020 = vpack.c.bf16 %v3001, %v3001
        %v3021 = vpack.c.bf16 %v3005, %v3005
        %v3022 = vpack.c.bf16 %v3009, %v3009
        %v3023 = vpack.c.bf16 %v3013, %v3013
        %v3029 = vrot.slane %v3019, 6
        %v3030 = vrot.slane %v3020, 6
        %v3031 = vrot.slane %v3021, 6
        %v3032 = vrot.slane %v3022, 6
        %v3033 = vrot.slane %v3023, 6
        %3034 = vrot.lane.b32.xlu0 %v3029, 17
        %v3035 = vpop.permute.xlu0 %3034
        %3036 = vrot.lane.b32.xlu0 %v3030, 17
        %v3037 = vpop.permute.xlu0 %3036
        %3038 = vrot.lane.b32.xlu0 %v3031, 17
        %v3039 = vpop.permute.xlu0 %3038
        %3040 = vrot.lane.b32.xlu0 %v3032, 17
        %v3041 = vpop.permute.xlu0 %3040
        %3042 = vrot.lane.b32.xlu0 %v3033, 17
        %v3043 = vpop.permute.xlu0 %3042
        %vm3044 = vcmask 138240
        %v3045 = vsel %vm3044, %v3035, %v3037
        %v3046 = vsel %vm3044, %v3037, %v3039
        %v3047 = vsel %vm3044, %v3039, %v3041
        %v3048 = vsel %vm3044, %v3041, %v3043
        %v3053 = vld [vmem:[#allocation2 + $0x40] sm:$0x4]
        %v3054 = vsel %vm549, %v3045, %v3053
        %3055 = vst [vmem:[#allocation2 + $0x40] sm:$0x4] %v3054
        %v3056 = vld [vmem:[#allocation2 + $0x48] sm:$0x4]
        %v3057 = vsel %vm549, %v3046, %v3056
        %3058 = vst [vmem:[#allocation2 + $0x48] sm:$0x4] %v3057
        %v3059 = vld [vmem:[#allocation2 + $0x50] sm:$0x4]
        %v3060 = vsel %vm549, %v3047, %v3059
        %3061 = vst [vmem:[#allocation2 + $0x50] sm:$0x4] %v3060
        %v3062 = vld [vmem:[#allocation2 + $0x58] sm:$0x4]
        %v3063 = vsel %vm549, %v3048, %v3062
        %3064 = vst [vmem:[#allocation2 + $0x58] sm:$0x4] %v3063
        %v3065 = vld [vmem:[%s164] sm:$0x1f]
        %v3067 = vlaneseq
        %v3068 = vshrl.u32 %v3067, 7
        %v3069 = vsub.s32 0, %v3068
        %v3070 = vrot.slane %v3065, %v3069
        %v3071 = vlaneseq
        %v3072 = vshrl.u32 %v3071, 7
        %v3073 = vsub.s32 1, %v3072
        %v3074 = vrot.slane %v3065, %v3073
        %v3075 = vlaneseq
        %v3076 = vshrl.u32 %v3075, 7
        %v3077 = vsub.s32 2, %v3076
        %v3078 = vrot.slane %v3065, %v3077
        %v3079 = vlaneseq
        %v3080 = vshrl.u32 %v3079, 7
        %v3081 = vsub.s32 3, %v3080
        %v3082 = vrot.slane %v3065, %v3081
        %v3083 = vlaneseq
        %v3084 = vshrl.u32 %v3083, 7
        %v3085 = vsub.s32 4, %v3084
        %v3086 = vrot.slane %v3065, %v3085
        %v3092 = vpack.c.bf16 %v3070, %v3070
        %v3093 = vpack.c.bf16 %v3074, %v3074
        %v3094 = vpack.c.bf16 %v3078, %v3078
        %v3095 = vpack.c.bf16 %v3082, %v3082
        %v3096 = vpack.c.bf16 %v3086, %v3086
        %v3098 = vshll.u32 %v3092, 16
        %v3100 = vrot.slane %v3098, 6
        %v3102 = vshll.u32 %v3093, 16
        %v3104 = vrot.slane %v3102, 6
        %v3106 = vshll.u32 %v3094, 16
        %v3108 = vrot.slane %v3106, 6
        %v3110 = vshll.u32 %v3095, 16
        %v3112 = vrot.slane %v3110, 6
        %v3114 = vshll.u32 %v3096, 16
        %v3116 = vrot.slane %v3114, 6
        %3117 = vrot.lane.b32.xlu0 %v3100, 16
        %v3118 = vpop.permute.xlu0 %3117
        %3119 = vrot.lane.b32.xlu0 %v3104, 16
        %v3120 = vpop.permute.xlu0 %3119
        %3121 = vrot.lane.b32.xlu0 %v3108, 16
        %v3122 = vpop.permute.xlu0 %3121
        %3123 = vrot.lane.b32.xlu0 %v3112, 16
        %v3124 = vpop.permute.xlu0 %3123
        %3125 = vrot.lane.b32.xlu0 %v3116, 16
        %v3126 = vpop.permute.xlu0 %3125
        %vm3127 = vcmask 130048
        %v3128 = vsel %vm3127, %v3118, %v3120
        %v3129 = vsel %vm3127, %v3120, %v3122
        %v3130 = vsel %vm3127, %v3122, %v3124
        %v3131 = vsel %vm3127, %v3124, %v3126
        %v3136 = vld [vmem:[#allocation2 + $0x40] sm:$0x4]
        %v3137 = vsel %vm634, %v3128, %v3136
        %3138 = vst [vmem:[#allocation2 + $0x40] sm:$0x4] %v3137
        %v3139 = vld [vmem:[#allocation2 + $0x48] sm:$0x4]
        %v3140 = vsel %vm634, %v3129, %v3139
        %3141 = vst [vmem:[#allocation2 + $0x48] sm:$0x4] %v3140
        %v3142 = vld [vmem:[#allocation2 + $0x50] sm:$0x4]
        %v3143 = vsel %vm634, %v3130, %v3142
        %3144 = vst [vmem:[#allocation2 + $0x50] sm:$0x4] %v3143
        %v3145 = vld [vmem:[#allocation2 + $0x58] sm:$0x4]
        %v3146 = vsel %vm634, %v3131, %v3145
        %3147 = vst [vmem:[#allocation2 + $0x58] sm:$0x4] %v3146
        %v3148 = vld [vmem:[%s164] sm:$0x1f]
        %v3150 = vlaneseq
        %v3151 = vshrl.u32 %v3150, 7
        %v3152 = vsub.s32 0, %v3151
        %v3153 = vrot.slane %v3148, %v3152
        %v3154 = vlaneseq
        %v3155 = vshrl.u32 %v3154, 7
        %v3156 = vsub.s32 1, %v3155
        %v3157 = vrot.slane %v3148, %v3156
        %v3158 = vlaneseq
        %v3159 = vshrl.u32 %v3158, 7
        %v3160 = vsub.s32 2, %v3159
        %v3161 = vrot.slane %v3148, %v3160
        %v3162 = vlaneseq
        %v3163 = vshrl.u32 %v3162, 7
        %v3164 = vsub.s32 3, %v3163
        %v3165 = vrot.slane %v3148, %v3164
        %v3166 = vlaneseq
        %v3167 = vshrl.u32 %v3166, 7
        %v3168 = vsub.s32 4, %v3167
        %v3169 = vrot.slane %v3148, %v3168
        %v3175 = vpack.c.bf16 %v3153, %v3153
        %v3176 = vpack.c.bf16 %v3157, %v3157
        %v3177 = vpack.c.bf16 %v3161, %v3161
        %v3178 = vpack.c.bf16 %v3165, %v3165
        %v3179 = vpack.c.bf16 %v3169, %v3169
        %v3185 = vrot.slane %v3175, 5
        %v3186 = vrot.slane %v3176, 5
        %v3187 = vrot.slane %v3177, 5
        %v3188 = vrot.slane %v3178, 5
        %v3189 = vrot.slane %v3179, 5
        %3190 = vrot.lane.b32.xlu0 %v3185, 15
        %v3191 = vpop.permute.xlu0 %3190
        %3192 = vrot.lane.b32.xlu0 %v3186, 15
        %v3193 = vpop.permute.xlu0 %3192
        %3194 = vrot.lane.b32.xlu0 %v3187, 15
        %v3195 = vpop.permute.xlu0 %3194
        %3196 = vrot.lane.b32.xlu0 %v3188, 15
        %v3197 = vpop.permute.xlu0 %3196
        %3198 = vrot.lane.b32.xlu0 %v3189, 15
        %v3199 = vpop.permute.xlu0 %3198
        %vm3200 = vcmask 121856
        %v3201 = vsel %vm3200, %v3191, %v3193
        %v3202 = vsel %vm3200, %v3193, %v3195
        %v3203 = vsel %vm3200, %v3195, %v3197
        %v3204 = vsel %vm3200, %v3197, %v3199
        %v3209 = vld [vmem:[#allocation2 + $0x40] sm:$0x8]
        %v3210 = vsel %vm710, %v3201, %v3209
        %3211 = vst [vmem:[#allocation2 + $0x40] sm:$0x8] %v3210
        %v3212 = vld [vmem:[#allocation2 + $0x48] sm:$0x8]
        %v3213 = vsel %vm710, %v3202, %v3212
        %3214 = vst [vmem:[#allocation2 + $0x48] sm:$0x8] %v3213
        %v3215 = vld [vmem:[#allocation2 + $0x50] sm:$0x8]
        %v3216 = vsel %vm710, %v3203, %v3215
        %3217 = vst [vmem:[#allocation2 + $0x50] sm:$0x8] %v3216
        %v3218 = vld [vmem:[#allocation2 + $0x58] sm:$0x8]
        %v3219 = vsel %vm710, %v3204, %v3218
        %3220 = vst [vmem:[#allocation2 + $0x58] sm:$0x8] %v3219
        %v3221 = vld [vmem:[%s164] sm:$0x1f]
        %v3223 = vlaneseq
        %v3224 = vshrl.u32 %v3223, 7
        %v3225 = vsub.s32 0, %v3224
        %v3226 = vrot.slane %v3221, %v3225
        %v3227 = vlaneseq
        %v3228 = vshrl.u32 %v3227, 7
        %v3229 = vsub.s32 1, %v3228
        %v3230 = vrot.slane %v3221, %v3229
        %v3231 = vlaneseq
        %v3232 = vshrl.u32 %v3231, 7
        %v3233 = vsub.s32 2, %v3232
        %v3234 = vrot.slane %v3221, %v3233
        %v3235 = vlaneseq
        %v3236 = vshrl.u32 %v3235, 7
        %v3237 = vsub.s32 3, %v3236
        %v3238 = vrot.slane %v3221, %v3237
        %v3239 = vlaneseq
        %v3240 = vshrl.u32 %v3239, 7
        %v3241 = vsub.s32 4, %v3240
        %v3242 = vrot.slane %v3221, %v3241
        %v3248 = vpack.c.bf16 %v3226, %v3226
        %v3249 = vpack.c.bf16 %v3230, %v3230
        %v3250 = vpack.c.bf16 %v3234, %v3234
        %v3251 = vpack.c.bf16 %v3238, %v3238
        %v3252 = vpack.c.bf16 %v3242, %v3242
        %v3254 = vshll.u32 %v3248, 16
        %v3256 = vrot.slane %v3254, 5
        %v3258 = vshll.u32 %v3249, 16
        %v3260 = vrot.slane %v3258, 5
        %v3262 = vshll.u32 %v3250, 16
        %v3264 = vrot.slane %v3262, 5
        %v3266 = vshll.u32 %v3251, 16
        %v3268 = vrot.slane %v3266, 5
        %v3270 = vshll.u32 %v3252, 16
        %v3272 = vrot.slane %v3270, 5
        %3273 = vrot.lane.b32.xlu0 %v3256, 14
        %v3274 = vpop.permute.xlu0 %3273
        %3275 = vrot.lane.b32.xlu0 %v3260, 14
        %v3276 = vpop.permute.xlu0 %3275
        %3277 = vrot.lane.b32.xlu0 %v3264, 14
        %v3278 = vpop.permute.xlu0 %3277
        %3279 = vrot.lane.b32.xlu0 %v3268, 14
        %v3280 = vpop.permute.xlu0 %3279
        %3281 = vrot.lane.b32.xlu0 %v3272, 14
        %v3282 = vpop.permute.xlu0 %3281
        %vm3283 = vcmask 113664
        %v3284 = vsel %vm3283, %v3274, %v3276
        %v3285 = vsel %vm3283, %v3276, %v3278
        %v3286 = vsel %vm3283, %v3278, %v3280
        %v3287 = vsel %vm3283, %v3280, %v3282
        %v3292 = vld [vmem:[#allocation2 + $0x40] sm:$0x8]
        %v3293 = vsel %vm795, %v3284, %v3292
        %3294 = vst [vmem:[#allocation2 + $0x40] sm:$0x8] %v3293
        %v3295 = vld [vmem:[#allocation2 + $0x48] sm:$0x8]
        %v3296 = vsel %vm795, %v3285, %v3295
        %3297 = vst [vmem:[#allocation2 + $0x48] sm:$0x8] %v3296
        %v3298 = vld [vmem:[#allocation2 + $0x50] sm:$0x8]
        %v3299 = vsel %vm795, %v3286, %v3298
        %3300 = vst [vmem:[#allocation2 + $0x50] sm:$0x8] %v3299
        %v3301 = vld [vmem:[#allocation2 + $0x58] sm:$0x8]
        %v3302 = vsel %vm795, %v3287, %v3301
        %3303 = vst [vmem:[#allocation2 + $0x58] sm:$0x8] %v3302
        %v3304 = vld [vmem:[%s164] sm:$0x1f]
        %v3306 = vlaneseq
        %v3307 = vshrl.u32 %v3306, 7
        %v3308 = vsub.s32 0, %v3307
        %v3309 = vrot.slane %v3304, %v3308
        %v3310 = vlaneseq
        %v3311 = vshrl.u32 %v3310, 7
        %v3312 = vsub.s32 1, %v3311
        %v3313 = vrot.slane %v3304, %v3312
        %v3314 = vlaneseq
        %v3315 = vshrl.u32 %v3314, 7
        %v3316 = vsub.s32 2, %v3315
        %v3317 = vrot.slane %v3304, %v3316
        %v3318 = vlaneseq
        %v3319 = vshrl.u32 %v3318, 7
        %v3320 = vsub.s32 3, %v3319
        %v3321 = vrot.slane %v3304, %v3320
        %v3322 = vlaneseq
        %v3323 = vshrl.u32 %v3322, 7
        %v3324 = vsub.s32 4, %v3323
        %v3325 = vrot.slane %v3304, %v3324
        %v3331 = vpack.c.bf16 %v3309, %v3309
        %v3332 = vpack.c.bf16 %v3313, %v3313
        %v3333 = vpack.c.bf16 %v3317, %v3317
        %v3334 = vpack.c.bf16 %v3321, %v3321
        %v3335 = vpack.c.bf16 %v3325, %v3325
        %v3341 = vrot.slane %v3331, 4
        %v3342 = vrot.slane %v3332, 4
        %v3343 = vrot.slane %v3333, 4
        %v3344 = vrot.slane %v3334, 4
        %v3345 = vrot.slane %v3335, 4
        %3346 = vrot.lane.b32.xlu0 %v3341, 13
        %v3347 = vpop.permute.xlu0 %3346
        %3348 = vrot.lane.b32.xlu0 %v3342, 13
        %v3349 = vpop.permute.xlu0 %3348
        %3350 = vrot.lane.b32.xlu0 %v3343, 13
        %v3351 = vpop.permute.xlu0 %3350
        %3352 = vrot.lane.b32.xlu0 %v3344, 13
        %v3353 = vpop.permute.xlu0 %3352
        %3354 = vrot.lane.b32.xlu0 %v3345, 13
        %v3355 = vpop.permute.xlu0 %3354
        %vm3356 = vcmask 105472
        %v3357 = vsel %vm3356, %v3347, %v3349
        %v3358 = vsel %vm3356, %v3349, %v3351
        %v3359 = vsel %vm3356, %v3351, %v3353
        %v3360 = vsel %vm3356, %v3353, %v3355
        %v3365 = vld [vmem:[#allocation2 + $0x40] sm:$0x10]
        %v3366 = vsel %vm871, %v3357, %v3365
        %3367 = vst [vmem:[#allocation2 + $0x40] sm:$0x10] %v3366
        %v3368 = vld [vmem:[#allocation2 + $0x48] sm:$0x10]
        %v3369 = vsel %vm871, %v3358, %v3368
        %3370 = vst [vmem:[#allocation2 + $0x48] sm:$0x10] %v3369
        %v3371 = vld [vmem:[#allocation2 + $0x50] sm:$0x10]
        %v3372 = vsel %vm871, %v3359, %v3371
        %3373 = vst [vmem:[#allocation2 + $0x50] sm:$0x10] %v3372
        %v3374 = vld [vmem:[#allocation2 + $0x58] sm:$0x10]
        %v3375 = vsel %vm871, %v3360, %v3374
        %3376 = vst [vmem:[#allocation2 + $0x58] sm:$0x10] %v3375
        %v3377 = vld [vmem:[%s164] sm:$0x1f]
        %v3379 = vlaneseq
        %v3380 = vshrl.u32 %v3379, 7
        %v3381 = vsub.s32 0, %v3380
        %v3382 = vrot.slane %v3377, %v3381
        %v3383 = vlaneseq
        %v3384 = vshrl.u32 %v3383, 7
        %v3385 = vsub.s32 1, %v3384
        %v3386 = vrot.slane %v3377, %v3385
        %v3387 = vlaneseq
        %v3388 = vshrl.u32 %v3387, 7
        %v3389 = vsub.s32 2, %v3388
        %v3390 = vrot.slane %v3377, %v3389
        %v3391 = vlaneseq
        %v3392 = vshrl.u32 %v3391, 7
        %v3393 = vsub.s32 3, %v3392
        %v3394 = vrot.slane %v3377, %v3393
        %v3395 = vlaneseq
        %v3396 = vshrl.u32 %v3395, 7
        %v3397 = vsub.s32 4, %v3396
        %v3398 = vrot.slane %v3377, %v3397
        %v3404 = vpack.c.bf16 %v3382, %v3382
        %v3405 = vpack.c.bf16 %v3386, %v3386
        %v3406 = vpack.c.bf16 %v3390, %v3390
        %v3407 = vpack.c.bf16 %v3394, %v3394
        %v3408 = vpack.c.bf16 %v3398, %v3398
        %v3410 = vshll.u32 %v3404, 16
        %v3412 = vrot.slane %v3410, 4
        %v3414 = vshll.u32 %v3405, 16
        %v3416 = vrot.slane %v3414, 4
        %v3418 = vshll.u32 %v3406, 16
        %v3420 = vrot.slane %v3418, 4
        %v3422 = vshll.u32 %v3407, 16
        %v3424 = vrot.slane %v3422, 4
        %v3426 = vshll.u32 %v3408, 16
        %v3428 = vrot.slane %v3426, 4
        %3429 = vrot.lane.b32.xlu0 %v3412, 12
        %v3430 = vpop.permute.xlu0 %3429
        %3431 = vrot.lane.b32.xlu0 %v3416, 12
        %v3432 = vpop.permute.xlu0 %3431
        %3433 = vrot.lane.b32.xlu0 %v3420, 12
        %v3434 = vpop.permute.xlu0 %3433
        %3435 = vrot.lane.b32.xlu0 %v3424, 12
        %v3436 = vpop.permute.xlu0 %3435
        %3437 = vrot.lane.b32.xlu0 %v3428, 12
        %v3438 = vpop.permute.xlu0 %3437
        %vm3439 = vcmask 97280
        %v3440 = vsel %vm3439, %v3430, %v3432
        %v3441 = vsel %vm3439, %v3432, %v3434
        %v3442 = vsel %vm3439, %v3434, %v3436
        %v3443 = vsel %vm3439, %v3436, %v3438
        %v3448 = vld [vmem:[#allocation2 + $0x40] sm:$0x10]
        %v3449 = vsel %vm956, %v3440, %v3448
        %3450 = vst [vmem:[#allocation2 + $0x40] sm:$0x10] %v3449
        %v3451 = vld [vmem:[#allocation2 + $0x48] sm:$0x10]
        %v3452 = vsel %vm956, %v3441, %v3451
        %3453 = vst [vmem:[#allocation2 + $0x48] sm:$0x10] %v3452
        %v3454 = vld [vmem:[#allocation2 + $0x50] sm:$0x10]
        %v3455 = vsel %vm956, %v3442, %v3454
        %3456 = vst [vmem:[#allocation2 + $0x50] sm:$0x10] %v3455
        %v3457 = vld [vmem:[#allocation2 + $0x58] sm:$0x10]
        %v3458 = vsel %vm956, %v3443, %v3457
        %3459 = vst [vmem:[#allocation2 + $0x58] sm:$0x10] %v3458
        %v3460 = vld [vmem:[%s164 + $0x1] sm:$0x1f]
        %v3462 = vlaneseq
        %v3463 = vshrl.u32 %v3462, 7
        %v3464 = vsub.s32 0, %v3463
        %v3465 = vrot.slane %v3460, %v3464
        %v3466 = vlaneseq
        %v3467 = vshrl.u32 %v3466, 7
        %v3468 = vsub.s32 1, %v3467
        %v3469 = vrot.slane %v3460, %v3468
        %v3470 = vlaneseq
        %v3471 = vshrl.u32 %v3470, 7
        %v3472 = vsub.s32 2, %v3471
        %v3473 = vrot.slane %v3460, %v3472
        %v3474 = vlaneseq
        %v3475 = vshrl.u32 %v3474, 7
        %v3476 = vsub.s32 3, %v3475
        %v3477 = vrot.slane %v3460, %v3476
        %v3478 = vlaneseq
        %v3479 = vshrl.u32 %v3478, 7
        %v3480 = vsub.s32 4, %v3479
        %v3481 = vrot.slane %v3460, %v3480
        %v3487 = vpack.c.bf16 %v3465, %v3465
        %v3488 = vpack.c.bf16 %v3469, %v3469
        %v3489 = vpack.c.bf16 %v3473, %v3473
        %v3490 = vpack.c.bf16 %v3477, %v3477
        %v3491 = vpack.c.bf16 %v3481, %v3481
        %v3497 = vrot.slane %v3487, 3
        %v3498 = vrot.slane %v3488, 3
        %v3499 = vrot.slane %v3489, 3
        %v3500 = vrot.slane %v3490, 3
        %v3501 = vrot.slane %v3491, 3
        %3502 = vrot.lane.b32.xlu0 %v3497, 124
        %v3503 = vpop.permute.xlu0 %3502
        %3504 = vrot.lane.b32.xlu0 %v3498, 124
        %v3505 = vpop.permute.xlu0 %3504
        %3506 = vrot.lane.b32.xlu0 %v3499, 124
        %v3507 = vpop.permute.xlu0 %3506
        %3508 = vrot.lane.b32.xlu0 %v3500, 124
        %v3509 = vpop.permute.xlu0 %3508
        %3510 = vrot.lane.b32.xlu0 %v3501, 124
        %v3511 = vpop.permute.xlu0 %3510
        %v3512 = vsel %vm538, %v3503, %v3505
        %v3513 = vsel %vm538, %v3505, %v3507
        %v3514 = vsel %vm538, %v3507, %v3509
        %v3515 = vsel %vm538, %v3509, %v3511
        %v3520 = vld [vmem:[#allocation2 + $0x40] sm:$0x20]
        %v3521 = vsel %vm1032, %v3512, %v3520
        %3522 = vst [vmem:[#allocation2 + $0x40] sm:$0x20] %v3521
        %v3523 = vld [vmem:[#allocation2 + $0x48] sm:$0x20]
        %v3524 = vsel %vm1032, %v3513, %v3523
        %3525 = vst [vmem:[#allocation2 + $0x48] sm:$0x20] %v3524
        %v3526 = vld [vmem:[#allocation2 + $0x50] sm:$0x20]
        %v3527 = vsel %vm1032, %v3514, %v3526
        %3528 = vst [vmem:[#allocation2 + $0x50] sm:$0x20] %v3527
        %v3529 = vld [vmem:[#allocation2 + $0x58] sm:$0x20]
        %v3530 = vsel %vm1032, %v3515, %v3529
        %3531 = vst [vmem:[#allocation2 + $0x58] sm:$0x20] %v3530
        %v3532 = vld [vmem:[%s164 + $0x1] sm:$0x1f]
        %v3534 = vlaneseq
        %v3535 = vshrl.u32 %v3534, 7
        %v3536 = vsub.s32 0, %v3535
        %v3537 = vrot.slane %v3532, %v3536
        %v3538 = vlaneseq
        %v3539 = vshrl.u32 %v3538, 7
        %v3540 = vsub.s32 1, %v3539
        %v3541 = vrot.slane %v3532, %v3540
        %v3542 = vlaneseq
        %v3543 = vshrl.u32 %v3542, 7
        %v3544 = vsub.s32 2, %v3543
        %v3545 = vrot.slane %v3532, %v3544
        %v3546 = vlaneseq
        %v3547 = vshrl.u32 %v3546, 7
        %v3548 = vsub.s32 3, %v3547
        %v3549 = vrot.slane %v3532, %v3548
        %v3550 = vlaneseq
        %v3551 = vshrl.u32 %v3550, 7
        %v3552 = vsub.s32 4, %v3551
        %v3553 = vrot.slane %v3532, %v3552
        %v3559 = vpack.c.bf16 %v3537, %v3537
        %v3560 = vpack.c.bf16 %v3541, %v3541
        %v3561 = vpack.c.bf16 %v3545, %v3545
        %v3562 = vpack.c.bf16 %v3549, %v3549
        %v3563 = vpack.c.bf16 %v3553, %v3553
        %v3565 = vshll.u32 %v3559, 16
        %v3567 = vrot.slane %v3565, 3
        %v3569 = vshll.u32 %v3560, 16
        %v3571 = vrot.slane %v3569, 3
        %v3573 = vshll.u32 %v3561, 16
        %v3575 = vrot.slane %v3573, 3
        %v3577 = vshll.u32 %v3562, 16
        %v3579 = vrot.slane %v3577, 3
        %v3581 = vshll.u32 %v3563, 16
        %v3583 = vrot.slane %v3581, 3
        %3584 = vrot.lane.b32.xlu0 %v3567, 123
        %v3585 = vpop.permute.xlu0 %3584
        %3586 = vrot.lane.b32.xlu0 %v3571, 123
        %v3587 = vpop.permute.xlu0 %3586
        %3588 = vrot.lane.b32.xlu0 %v3575, 123
        %v3589 = vpop.permute.xlu0 %3588
        %3590 = vrot.lane.b32.xlu0 %v3579, 123
        %v3591 = vpop.permute.xlu0 %3590
        %3592 = vrot.lane.b32.xlu0 %v3583, 123
        %v3593 = vpop.permute.xlu0 %3592
        %v3594 = vsel %vm624, %v3585, %v3587
        %v3595 = vsel %vm624, %v3587, %v3589
        %v3596 = vsel %vm624, %v3589, %v3591
        %v3597 = vsel %vm624, %v3591, %v3593
        %v3602 = vld [vmem:[#allocation2 + $0x40] sm:$0x20]
        %v3603 = vsel %vm1117, %v3594, %v3602
        %3604 = vst [vmem:[#allocation2 + $0x40] sm:$0x20] %v3603
        %v3605 = vld [vmem:[#allocation2 + $0x48] sm:$0x20]
        %v3606 = vsel %vm1117, %v3595, %v3605
        %3607 = vst [vmem:[#allocation2 + $0x48] sm:$0x20] %v3606
        %v3608 = vld [vmem:[#allocation2 + $0x50] sm:$0x20]
        %v3609 = vsel %vm1117, %v3596, %v3608
        %3610 = vst [vmem:[#allocation2 + $0x50] sm:$0x20] %v3609
        %v3611 = vld [vmem:[#allocation2 + $0x58] sm:$0x20]
        %v3612 = vsel %vm1117, %v3597, %v3611
        %3613 = vst [vmem:[#allocation2 + $0x58] sm:$0x20] %v3612
        %v3614 = vld [vmem:[%s164 + $0x1] sm:$0x1f]
        %v3616 = vlaneseq
        %v3617 = vshrl.u32 %v3616, 7
        %v3618 = vsub.s32 0, %v3617
        %v3619 = vrot.slane %v3614, %v3618
        %v3620 = vlaneseq
        %v3621 = vshrl.u32 %v3620, 7
        %v3622 = vsub.s32 1, %v3621
        %v3623 = vrot.slane %v3614, %v3622
        %v3624 = vlaneseq
        %v3625 = vshrl.u32 %v3624, 7
        %v3626 = vsub.s32 2, %v3625
        %v3627 = vrot.slane %v3614, %v3626
        %v3628 = vlaneseq
        %v3629 = vshrl.u32 %v3628, 7
        %v3630 = vsub.s32 3, %v3629
        %v3631 = vrot.slane %v3614, %v3630
        %v3632 = vlaneseq
        %v3633 = vshrl.u32 %v3632, 7
        %v3634 = vsub.s32 4, %v3633
        %v3635 = vrot.slane %v3614, %v3634
        %v3641 = vpack.c.bf16 %v3619, %v3619
        %v3642 = vpack.c.bf16 %v3623, %v3623
        %v3643 = vpack.c.bf16 %v3627, %v3627
        %v3644 = vpack.c.bf16 %v3631, %v3631
        %v3645 = vpack.c.bf16 %v3635, %v3635
        %v3651 = vrot.slane %v3641, 2
        %v3652 = vrot.slane %v3642, 2
        %v3653 = vrot.slane %v3643, 2
        %v3654 = vrot.slane %v3644, 2
        %v3655 = vrot.slane %v3645, 2
        %3656 = vrot.lane.b32.xlu0 %v3651, 122
        %v3657 = vpop.permute.xlu0 %3656
        %3658 = vrot.lane.b32.xlu0 %v3652, 122
        %v3659 = vpop.permute.xlu0 %3658
        %3660 = vrot.lane.b32.xlu0 %v3653, 122
        %v3661 = vpop.permute.xlu0 %3660
        %3662 = vrot.lane.b32.xlu0 %v3654, 122
        %v3663 = vpop.permute.xlu0 %3662
        %3664 = vrot.lane.b32.xlu0 %v3655, 122
        %v3665 = vpop.permute.xlu0 %3664
        %v3666 = vsel %vm699, %v3657, %v3659
        %v3667 = vsel %vm699, %v3659, %v3661
        %v3668 = vsel %vm699, %v3661, %v3663
        %v3669 = vsel %vm699, %v3663, %v3665
        %v3674 = vld [vmem:[#allocation2 + $0x40] sm:$0x40]
        %v3675 = vsel %vm1193, %v3666, %v3674
        %3676 = vst [vmem:[#allocation2 + $0x40] sm:$0x40] %v3675
        %v3677 = vld [vmem:[#allocation2 + $0x48] sm:$0x40]
        %v3678 = vsel %vm1193, %v3667, %v3677
        %3679 = vst [vmem:[#allocation2 + $0x48] sm:$0x40] %v3678
        %v3680 = vld [vmem:[#allocation2 + $0x50] sm:$0x40]
        %v3681 = vsel %vm1193, %v3668, %v3680
        %3682 = vst [vmem:[#allocation2 + $0x50] sm:$0x40] %v3681
        %v3683 = vld [vmem:[#allocation2 + $0x58] sm:$0x40]
        %v3684 = vsel %vm1193, %v3669, %v3683
        %3685 = vst [vmem:[#allocation2 + $0x58] sm:$0x40] %v3684
        %v3686 = vld [vmem:[%s164 + $0x1] sm:$0x1f]
        %v3688 = vlaneseq
        %v3689 = vshrl.u32 %v3688, 7
        %v3690 = vsub.s32 0, %v3689
        %v3691 = vrot.slane %v3686, %v3690
        %v3692 = vlaneseq
        %v3693 = vshrl.u32 %v3692, 7
        %v3694 = vsub.s32 1, %v3693
        %v3695 = vrot.slane %v3686, %v3694
        %v3696 = vlaneseq
        %v3697 = vshrl.u32 %v3696, 7
        %v3698 = vsub.s32 2, %v3697
        %v3699 = vrot.slane %v3686, %v3698
        %v3700 = vlaneseq
        %v3701 = vshrl.u32 %v3700, 7
        %v3702 = vsub.s32 3, %v3701
        %v3703 = vrot.slane %v3686, %v3702
        %v3704 = vlaneseq
        %v3705 = vshrl.u32 %v3704, 7
        %v3706 = vsub.s32 4, %v3705
        %v3707 = vrot.slane %v3686, %v3706
        %v3713 = vpack.c.bf16 %v3691, %v3691
        %v3714 = vpack.c.bf16 %v3695, %v3695
        %v3715 = vpack.c.bf16 %v3699, %v3699
        %v3716 = vpack.c.bf16 %v3703, %v3703
        %v3717 = vpack.c.bf16 %v3707, %v3707
        %v3719 = vshll.u32 %v3713, 16
        %v3721 = vrot.slane %v3719, 2
        %v3723 = vshll.u32 %v3714, 16
        %v3725 = vrot.slane %v3723, 2
        %v3727 = vshll.u32 %v3715, 16
        %v3729 = vrot.slane %v3727, 2
        %v3731 = vshll.u32 %v3716, 16
        %v3733 = vrot.slane %v3731, 2
        %v3735 = vshll.u32 %v3717, 16
        %v3737 = vrot.slane %v3735, 2
        %3738 = vrot.lane.b32.xlu0 %v3721, 121
        %v3739 = vpop.permute.xlu0 %3738
        %3740 = vrot.lane.b32.xlu0 %v3725, 121
        %v3741 = vpop.permute.xlu0 %3740
        %3742 = vrot.lane.b32.xlu0 %v3729, 121
        %v3743 = vpop.permute.xlu0 %3742
        %3744 = vrot.lane.b32.xlu0 %v3733, 121
        %v3745 = vpop.permute.xlu0 %3744
        %3746 = vrot.lane.b32.xlu0 %v3737, 121
        %v3747 = vpop.permute.xlu0 %3746
        %vm3748 = vcmask 990208
        %v3749 = vsel %vm3748, %v3739, %v3741
        %v3750 = vsel %vm3748, %v3741, %v3743
        %v3751 = vsel %vm3748, %v3743, %v3745
        %v3752 = vsel %vm3748, %v3745, %v3747
        %v3757 = vld [vmem:[#allocation2 + $0x40] sm:$0x40]
        %v3758 = vsel %vm1278, %v3749, %v3757
        %3759 = vst [vmem:[#allocation2 + $0x40] sm:$0x40] %v3758
        %v3760 = vld [vmem:[#allocation2 + $0x48] sm:$0x40]
        %v3761 = vsel %vm1278, %v3750, %v3760
        %3762 = vst [vmem:[#allocation2 + $0x48] sm:$0x40] %v3761
        %v3763 = vld [vmem:[#allocation2 + $0x50] sm:$0x40]
        %v3764 = vsel %vm1278, %v3751, %v3763
        %3765 = vst [vmem:[#allocation2 + $0x50] sm:$0x40] %v3764
        %v3766 = vld [vmem:[#allocation2 + $0x58] sm:$0x40]
        %v3767 = vsel %vm1278, %v3752, %v3766
        %3768 = vst [vmem:[#allocation2 + $0x58] sm:$0x40] %v3767
        %v3769 = vld [vmem:[%s164 + $0x1] sm:$0x1f]
        %v3771 = vlaneseq
        %v3772 = vshrl.u32 %v3771, 7
        %v3773 = vsub.s32 0, %v3772
        %v3774 = vrot.slane %v3769, %v3773
        %v3775 = vlaneseq
        %v3776 = vshrl.u32 %v3775, 7
        %v3777 = vsub.s32 1, %v3776
        %v3778 = vrot.slane %v3769, %v3777
        %v3779 = vlaneseq
        %v3780 = vshrl.u32 %v3779, 7
        %v3781 = vsub.s32 2, %v3780
        %v3782 = vrot.slane %v3769, %v3781
        %v3783 = vlaneseq
        %v3784 = vshrl.u32 %v3783, 7
        %v3785 = vsub.s32 3, %v3784
        %v3786 = vrot.slane %v3769, %v3785
        %v3787 = vlaneseq
        %v3788 = vshrl.u32 %v3787, 7
        %v3789 = vsub.s32 4, %v3788
        %v3790 = vrot.slane %v3769, %v3789
        %v3796 = vpack.c.bf16 %v3774, %v3774
        %v3797 = vpack.c.bf16 %v3778, %v3778
        %v3798 = vpack.c.bf16 %v3782, %v3782
        %v3799 = vpack.c.bf16 %v3786, %v3786
        %v3800 = vpack.c.bf16 %v3790, %v3790
        %v3806 = vrot.slane %v3796, 1
        %v3807 = vrot.slane %v3797, 1
        %v3808 = vrot.slane %v3798, 1
        %v3809 = vrot.slane %v3799, 1
        %v3810 = vrot.slane %v3800, 1
        %3811 = vrot.lane.b32.xlu0 %v3806, 120
        %v3812 = vpop.permute.xlu0 %3811
        %3813 = vrot.lane.b32.xlu0 %v3807, 120
        %v3814 = vpop.permute.xlu0 %3813
        %3815 = vrot.lane.b32.xlu0 %v3808, 120
        %v3816 = vpop.permute.xlu0 %3815
        %3817 = vrot.lane.b32.xlu0 %v3809, 120
        %v3818 = vpop.permute.xlu0 %3817
        %3819 = vrot.lane.b32.xlu0 %v3810, 120
        %v3820 = vpop.permute.xlu0 %3819
        %vm3821 = vcmask 982016
        %v3822 = vsel %vm3821, %v3812, %v3814
        %v3823 = vsel %vm3821, %v3814, %v3816
        %v3824 = vsel %vm3821, %v3816, %v3818
        %v3825 = vsel %vm3821, %v3818, %v3820
        %v3830 = vld [vmem:[#allocation2 + $0x40] sm:$0x80]
        %v3831 = vsel %vm1354, %v3822, %v3830
        %3832 = vst [vmem:[#allocation2 + $0x40] sm:$0x80] %v3831
        %v3833 = vld [vmem:[#allocation2 + $0x48] sm:$0x80]
        %v3834 = vsel %vm1354, %v3823, %v3833
        %3835 = vst [vmem:[#allocation2 + $0x48] sm:$0x80] %v3834
        %v3836 = vld [vmem:[#allocation2 + $0x50] sm:$0x80]
        %v3837 = vsel %vm1354, %v3824, %v3836
        %3838 = vst [vmem:[#allocation2 + $0x50] sm:$0x80] %v3837
        %v3839 = vld [vmem:[#allocation2 + $0x58] sm:$0x80]
        %v3840 = vsel %vm1354, %v3825, %v3839
        %3841 = vst [vmem:[#allocation2 + $0x58] sm:$0x80] %v3840
        %v3842 = vld [vmem:[%s164 + $0x1] sm:$0x1f]
        %v3844 = vlaneseq
        %v3845 = vshrl.u32 %v3844, 7
        %v3846 = vsub.s32 0, %v3845
        %v3847 = vrot.slane %v3842, %v3846
        %v3848 = vlaneseq
        %v3849 = vshrl.u32 %v3848, 7
        %v3850 = vsub.s32 1, %v3849
        %v3851 = vrot.slane %v3842, %v3850
        %v3852 = vlaneseq
        %v3853 = vshrl.u32 %v3852, 7
        %v3854 = vsub.s32 2, %v3853
        %v3855 = vrot.slane %v3842, %v3854
        %v3856 = vlaneseq
        %v3857 = vshrl.u32 %v3856, 7
        %v3858 = vsub.s32 3, %v3857
        %v3859 = vrot.slane %v3842, %v3858
        %v3860 = vlaneseq
        %v3861 = vshrl.u32 %v3860, 7
        %v3862 = vsub.s32 4, %v3861
        %v3863 = vrot.slane %v3842, %v3862
        %v3869 = vpack.c.bf16 %v3847, %v3847
        %v3870 = vpack.c.bf16 %v3851, %v3851
        %v3871 = vpack.c.bf16 %v3855, %v3855
        %v3872 = vpack.c.bf16 %v3859, %v3859
        %v3873 = vpack.c.bf16 %v3863, %v3863
        %v3875 = vshll.u32 %v3869, 16
        %v3877 = vrot.slane %v3875, 1
        %v3879 = vshll.u32 %v3870, 16
        %v3881 = vrot.slane %v3879, 1
        %v3883 = vshll.u32 %v3871, 16
        %v3885 = vrot.slane %v3883, 1
        %v3887 = vshll.u32 %v3872, 16
        %v3889 = vrot.slane %v3887, 1
        %v3891 = vshll.u32 %v3873, 16
        %v3893 = vrot.slane %v3891, 1
        %3894 = vrot.lane.b32.xlu0 %v3877, 119
        %v3895 = vpop.permute.xlu0 %3894
        %3896 = vrot.lane.b32.xlu0 %v3881, 119
        %v3897 = vpop.permute.xlu0 %3896
        %3898 = vrot.lane.b32.xlu0 %v3885, 119
        %v3899 = vpop.permute.xlu0 %3898
        %3900 = vrot.lane.b32.xlu0 %v3889, 119
        %v3901 = vpop.permute.xlu0 %3900
        %3902 = vrot.lane.b32.xlu0 %v3893, 119
        %v3903 = vpop.permute.xlu0 %3902
        %vm3904 = vcmask 973824
        %v3905 = vsel %vm3904, %v3895, %v3897
        %v3906 = vsel %vm3904, %v3897, %v3899
        %v3907 = vsel %vm3904, %v3899, %v3901
        %v3908 = vsel %vm3904, %v3901, %v3903
        %v3913 = vld [vmem:[#allocation2 + $0x40] sm:$0x80]
        %v3914 = vsel %vm1439, %v3905, %v3913
        %3915 = vst [vmem:[#allocation2 + $0x40] sm:$0x80] %v3914
        %v3916 = vld [vmem:[#allocation2 + $0x48] sm:$0x80]
        %v3917 = vsel %vm1439, %v3906, %v3916
        %3918 = vst [vmem:[#allocation2 + $0x48] sm:$0x80] %v3917
        %v3919 = vld [vmem:[#allocation2 + $0x50] sm:$0x80]
        %v3920 = vsel %vm1439, %v3907, %v3919
        %3921 = vst [vmem:[#allocation2 + $0x50] sm:$0x80] %v3920
        %v3922 = vld [vmem:[#allocation2 + $0x58] sm:$0x80]
        %v3923 = vsel %vm1439, %v3908, %v3922
        %3924 = vst [vmem:[#allocation2 + $0x58] sm:$0x80] %v3923
        %v3925 = vld [vmem:[%s164 + $0x1] sm:$0x1f]
        %v3927 = vlaneseq
        %v3928 = vshrl.u32 %v3927, 7
        %v3929 = vsub.s32 0, %v3928
        %v3930 = vrot.slane %v3925, %v3929
        %v3931 = vlaneseq
        %v3932 = vshrl.u32 %v3931, 7
        %v3933 = vsub.s32 1, %v3932
        %v3934 = vrot.slane %v3925, %v3933
        %v3935 = vlaneseq
        %v3936 = vshrl.u32 %v3935, 7
        %v3937 = vsub.s32 2, %v3936
        %v3938 = vrot.slane %v3925, %v3937
        %v3939 = vlaneseq
        %v3940 = vshrl.u32 %v3939, 7
        %v3941 = vsub.s32 3, %v3940
        %v3942 = vrot.slane %v3925, %v3941
        %v3943 = vlaneseq
        %v3944 = vshrl.u32 %v3943, 7
        %v3945 = vsub.s32 4, %v3944
        %v3946 = vrot.slane %v3925, %v3945
        %v3952 = vpack.c.bf16 %v3930, %v3930
        %v3953 = vpack.c.bf16 %v3934, %v3934
        %v3954 = vpack.c.bf16 %v3938, %v3938
        %v3955 = vpack.c.bf16 %v3942, %v3942
        %v3956 = vpack.c.bf16 %v3946, %v3946
        %3962 = vrot.lane.b32.xlu0 %v3952, 118
        %v3963 = vpop.permute.xlu0 %3962
        %3964 = vrot.lane.b32.xlu0 %v3953, 118
        %v3965 = vpop.permute.xlu0 %3964
        %3966 = vrot.lane.b32.xlu0 %v3954, 118
        %v3967 = vpop.permute.xlu0 %3966
        %3968 = vrot.lane.b32.xlu0 %v3955, 118
        %v3969 = vpop.permute.xlu0 %3968
        %3970 = vrot.lane.b32.xlu0 %v3956, 118
        %v3971 = vpop.permute.xlu0 %3970
        %vm3972 = vcmask 965632
        %v3973 = vsel %vm3972, %v3963, %v3965
        %v3974 = vsel %vm3972, %v3965, %v3967
        %v3975 = vsel %vm3972, %v3967, %v3969
        %v3976 = vsel %vm3972, %v3969, %v3971
        %v3981 = vld [vmem:[#allocation2 + $0x60] sm:$0x1]
        %v3982 = vsel %vm232, %v3973, %v3981
        %3983 = vst [vmem:[#allocation2 + $0x60] sm:$0x1] %v3982
        %v3984 = vld [vmem:[#allocation2 + $0x68] sm:$0x1]
        %v3985 = vsel %vm232, %v3974, %v3984
        %3986 = vst [vmem:[#allocation2 + $0x68] sm:$0x1] %v3985
        %v3987 = vld [vmem:[#allocation2 + $0x70] sm:$0x1]
        %v3988 = vsel %vm232, %v3975, %v3987
        %3989 = vst [vmem:[#allocation2 + $0x70] sm:$0x1] %v3988
        %v3990 = vld [vmem:[#allocation2 + $0x78] sm:$0x1]
        %v3991 = vsel %vm232, %v3976, %v3990
        %3992 = vst [vmem:[#allocation2 + $0x78] sm:$0x1] %v3991
        %v3993 = vld [vmem:[%s1] sm:$0xf]
        %v3994 = vld [vmem:[%s1 + $0x4] sm:$0xf]
        %v3995 = vld [vmem:[#allocation2] sm:$0xff]
        %v3996 = vld [vmem:[#allocation2 + $0x8] sm:$0xff]
        %v3997 = vld [vmem:[#allocation2 + $0x10] sm:$0xff]
        %v3998 = vld [vmem:[#allocation2 + $0x18] sm:$0xff]
        %v3999 = vld [vmem:[#allocation2 + $0x20] sm:$0xff]
        %v4000 = vld [vmem:[#allocation2 + $0x28] sm:$0xff]
        %v4001 = vld [vmem:[#allocation2 + $0x30] sm:$0xff]
        %v4002 = vld [vmem:[#allocation2 + $0x38] sm:$0xff]
        %v4003 = vld [vmem:[#allocation2 + $0x40] sm:$0xff]
        %v4004 = vld [vmem:[#allocation2 + $0x48] sm:$0xff]
        %v4005 = vld [vmem:[#allocation2 + $0x50] sm:$0xff]
        %v4006 = vld [vmem:[#allocation2 + $0x58] sm:$0xff]
        %v4007 = vld [vmem:[#allocation2 + $0x60] sm:$0xff]
        %v4008 = vld [vmem:[#allocation2 + $0x68] sm:$0xff]
        %v4009 = vld [vmem:[#allocation2 + $0x70] sm:$0xff]
        %v4010 = vld [vmem:[#allocation2 + $0x78] sm:$0xff]
        %v4011 = vld [vmem:[%s2] sm:$0xff]
        %v4012 = vld [vmem:[%s2 + $0x8] sm:$0xff]
        %4014 = vset.pattern.permute.xlu0 0
        %4015 = vperm.xlu0 %4014, %v4011
        %v4016 = vpop.permute.xlu0 %4015
        %4019 = vset.pattern.permute.xlu0 0
        %4020 = vperm.xlu0 %4019, %v4012
        %v4021 = vpop.permute.xlu0 %4020
        %v4025 = vunpack.c.l.b16 %v3993
        %v4026 = vunpack.c.l.b16 %v3994
        %v4027 = vpack.c.b16 %v4026, %v4025
        %vm4028 = vcmask 523264
        %v4030 = vsel %vm4028, %v4027, 0
        %4032 = vmatprep.subr.bf16.mxu0 %v3996
        %4033 = vmatpush1.bf16.msra.mxu0 %v3995
        %4034 = vmatprep.subr.bf16.mxu0 %v4000
        %4035 = vmatpush1.bf16.msra.mxu0 %v3999
        %4036 = vmatprep.subr.bf16.mxu0 %v4004
        %4037 = vmatpush1.bf16.msra.mxu0 %v4003
        %4038 = vmatprep.subr.bf16.mxu0 %v4008
        %4039 = vmatpush1.bf16.msra.mxu0 %v4007
        %4040 = vmatprep.subr.bf16.mxu0 0
        %4041 = vmatpush1.bf16.msra.mxu0 0
        %4042 = vmatprep.subr.bf16.mxu0 0
        %4043 = vmatpush1.bf16.msra.mxu0 0
        %4044 = vmatprep.subr.bf16.mxu0 0
        %4045 = vmatpush1.bf16.msra.mxu0 0
        %4046 = vmatprep.subr.bf16.mxu0 0
        %4047 = vmatpush1.bf16.msra.mxu0 0
        %4048 = vmatprep.subr.bf16.mxu0 0
        %4049 = vmatpush1.bf16.msra.mxu0 0
        %4050 = vmatprep.subr.bf16.mxu0 0
        %4051 = vmatpush1.bf16.msra.mxu0 0
        %4052 = vmatprep.subr.bf16.mxu0 0
        %4053 = vmatpush1.bf16.msra.mxu0 0
        %4054 = vmatprep.subr.bf16.mxu0 0
        %4055 = vmatpush1.bf16.msra.mxu0 0
        %4056 = vmatprep.subr.bf16.mxu0 0
        %4057 = vmatpush1.bf16.msra.mxu0 0
        %4058 = vmatprep.subr.bf16.mxu0 0
        %4059 = vmatpush1.bf16.msra.mxu0 0
        %4060 = vmatprep.subr.bf16.mxu0 0
        %4061 = vmatpush1.bf16.msra.mxu0 0
        %4062 = vmatprep.subr.bf16.mxu0 0
        %4063 = vmatpush1.bf16.msra.mxu0 0
        %4064 = vmatprep.mubr.bf16.mxu0 0
        %4065 = vmatmul.mubr.bf16.gmra.mrb[0].mxu0 %v4030
        %v4066 = vpop.f32.mrb[0].mxu0
        %v4067 = vadd.f32 %v4016, %v4066
        %v4068 = vpop.f32.mrb[0].mxu0
        %v4069 = vadd.f32 %v4016, %v4068
        %v4070 = vpop.f32.mrb[0].mxu0
        %v4071 = vadd.f32 %v4021, %v4070
        %v4072 = vpop.f32.mrb[0].mxu0
        %v4073 = vadd.f32 %v4021, %v4072
        %4074 = vdwg.mxu0
        %4075 = vmatprep.subr.bf16.mxu0 %v3998
        %4076 = vmatpush1.bf16.msra.mxu0 %v3997
        %4077 = vmatprep.subr.bf16.mxu0 %v4002
        %4078 = vmatpush1.bf16.msra.mxu0 %v4001
        %4079 = vmatprep.subr.bf16.mxu0 %v4006
        %4080 = vmatpush1.bf16.msra.mxu0 %v4005
        %4081 = vmatprep.subr.bf16.mxu0 %v4010
        %4082 = vmatpush1.bf16.msra.mxu0 %v4009
        %4083 = vmatprep.subr.bf16.mxu0 0
        %4084 = vmatpush1.bf16.msra.mxu0 0
        %4085 = vmatprep.subr.bf16.mxu0 0
        %4086 = vmatpush1.bf16.msra.mxu0 0
        %4087 = vmatprep.subr.bf16.mxu0 0
        %4088 = vmatpush1.bf16.msra.mxu0 0
        %4089 = vmatprep.subr.bf16.mxu0 0
        %4090 = vmatpush1.bf16.msra.mxu0 0
        %4091 = vmatprep.subr.bf16.mxu0 0
        %4092 = vmatpush1.bf16.msra.mxu0 0
        %4093 = vmatprep.subr.bf16.mxu0 0
        %4094 = vmatpush1.bf16.msra.mxu0 0
        %4095 = vmatprep.subr.bf16.mxu0 0
        %4096 = vmatpush1.bf16.msra.mxu0 0
        %4097 = vmatprep.subr.bf16.mxu0 0
        %4098 = vmatpush1.bf16.msra.mxu0 0
        %4099 = vmatprep.subr.bf16.mxu0 0
        %4100 = vmatpush1.bf16.msra.mxu0 0
        %4101 = vmatprep.subr.bf16.mxu0 0
        %4102 = vmatpush1.bf16.msra.mxu0 0
        %4103 = vmatprep.subr.bf16.mxu0 0
        %4104 = vmatpush1.bf16.msra.mxu0 0
        %4105 = vmatprep.subr.bf16.mxu0 0
        %4106 = vmatpush1.bf16.msra.mxu0 0
        %4107 = vmatprep.mubr.bf16.mxu0 0
        %4108 = vmatmul.mubr.bf16.gmra.mrb[0].mxu0 %v4030
        %v4109 = vpop.f32.mrb[0].mxu0
        %v4110 = vadd.f32 %v4016, %v4109
        %v4111 = vpop.f32.mrb[0].mxu0
        %v4112 = vadd.f32 %v4016, %v4111
        %v4113 = vpop.f32.mrb[0].mxu0
        %v4114 = vadd.f32 %v4021, %v4113
        %v4115 = vpop.f32.mrb[0].mxu0
        %v4116 = vadd.f32 %v4021, %v4115
        %4117 = vdwg.mxu0
        %v4118 = vmul.f32 %v4067, 0.01
        %v4119 = vmul.f32 %v4069, 0.01
        %v4120 = vmul.f32 %v4110, 0.01
        %v4121 = vmul.f32 %v4112, 0.01
        %v4122 = vmul.f32 %v4071, 0.01
        %v4123 = vmul.f32 %v4073, 0.01
        %v4124 = vmul.f32 %v4114, 0.01
        %v4125 = vmul.f32 %v4116, 0.01
        %v4126 = vmax.f32 %v4067, %v4118
        %v4127 = vmax.f32 %v4069, %v4119
        %v4128 = vmax.f32 %v4110, %v4120
        %v4129 = vmax.f32 %v4112, %v4121
        %v4130 = vmax.f32 %v4071, %v4122
        %v4131 = vmax.f32 %v4073, %v4123
        %v4132 = vmax.f32 %v4114, %v4124
        %v4133 = vmax.f32 %v4116, %v4125
        %4134 = vst [vmem:[%s186] sm:$0xff] %v4126
        %4135 = vst [vmem:[%s186 + $0x8] sm:$0xff] %v4127
        %4136 = vst [vmem:[%s186 + $0x10] sm:$0xff] %v4128
        %4137 = vst [vmem:[%s186 + $0x18] sm:$0xff] %v4129
        %4138 = vst [vmem:[%s186 + $0x20] sm:$0xff] %v4130
        %4139 = vst [vmem:[%s186 + $0x28] sm:$0xff] %v4131
        %4140 = vst [vmem:[%s186 + $0x30] sm:$0xff] %v4132
        %4141 = vst [vmem:[%s186 + $0x38] sm:$0xff] %v4133
        %s4142 = sand.u32 %s96, 1
        %s4143 = scalar_lea.sflag [#allocation5], %s4142
        %s4144 = sand.u32 %s96, 1
        %s4145 = smul.addr %s4144, 64
        %s4146 = scalar_lea.vmem [#allocation6], %s4145
        // Predicated region
        $region37: #{tpu_custom_call.1} parent=31 // pred_check
          %p4147 = pneg %p106
        $region38: #{tpu_custom_call.1} parent=31 // pred_check_branch
          %4149 = sbr.rel (%p4147) target = $region40
        $region39: #{tpu_custom_call.1} parent=31 // pred_region
          %s4151 = ssub.s32 1024, 1024
          %4152 = vsyncadd %s4143, %s4151
          %s4153 = smul.addr %s20, 8
          %s4154 = smul.addr %s4153, 128
          %s4155 = scalar_lea.hbm %s3, %s4154
          %s4156 = sshll.u32 %s4146, 4
          %s4157 = int_to_ptr.vmem [resolvable:$true] %s4156
          %4162 = dma.vmem_to_hbm [thread:$0]  %s4157, 1024, %s4155, %s4143, 512, 512, 32
        $region40: #{tpu_custom_call.1} parent=31 // pred_fallthru
          _
      $region32: #{tpu_custom_call.1} parent=5 // pred_fallthru
        _
      %p4163 = scmp.le.s32.totalorder 2, %s15
      // Predicated region
      $region41: #{tpu_custom_call.1} parent=5 // pred_check
        %p4164 = pneg %p4163
      $region42: #{tpu_custom_call.1} parent=5 // pred_check_branch
        %4166 = sbr.rel (%p4164) target = $region44
      $region43: #{tpu_custom_call.1} parent=5 // pred_region
        %s4167 = ssub.s32 %s15, 2
        // Predicated region
        $region45: #{tpu_custom_call.1} parent=43 // pred_check
          %p4168 = pneg %p112
        $region46: #{tpu_custom_call.1} parent=43 // pred_check_branch
          %4170 = sbr.rel (%p4168) target = $region48
        $region47: #{tpu_custom_call.1} parent=43 // pred_region
          %s4171 = sand.u32 %s97, 1
          %s4172 = scalar_lea.sflag [#allocation5], %s4171
          %s4173 = sand.u32 %s97, 1
          %s4174 = smul.addr %s4173, 64
          %s4175 = scalar_lea.vmem [#allocation6], %s4174
          %4176 = dma.done %s4172, 1024
        $region48: #{tpu_custom_call.1} parent=43 // pred_fallthru
          _
      $region44: #{tpu_custom_call.1} parent=5 // pred_fallthru
        _
    $region6: #{tpu_custom_call.1} parent=1 // loop_footer
      %s19 = sadd.s32 1, %s15
    $region7: #{tpu_custom_call.1} parent=1 // loop_footer_branch
      %14 = sbr.rel target = $region3
    $region8: #{tpu_custom_call.1} parent=1 // loop_exit
      _
    %4177 = vsyncpa [#allocation4], 1
    %s4178 = scalar_lea.sflag [#allocation4], 1
    %4179 = vsyncpa %s4178, 1
    %4180 = vsyncpa [#allocation5], 1
    %s4181 = scalar_lea.sflag [#allocation5], 1
    %4182 = vsyncpa %s4181, 1

</llo_original>
